<compile_context>
chip_gen: v5e
topology: v5e:2x2
jax: 0.10.0
libtpu: 0.0.40
codegen_flags: <defaults>
</compile_context>

<pallas_src>
import functools

import jax
import jax.numpy as jnp
from jax import lax
from jax.experimental import pallas as pl
from jax.experimental.pallas import tpu as pltpu


# ----------------------------------------------------------------------------
# Pallas kernel: conv1 -> ReLU -> conv2 (+biases) and per-image BN partials.
# ----------------------------------------------------------------------------
def _conv_stats_kernel(x_ref, w1_ref, b1_ref, w2_ref, b2_ref,
                       y_ref, stats_ref, acc_ref, *, pack_lanes, conv_dtype):
    # x_ref    : (1, H, W, Cin)    one image (NHWC), conv_dtype
    # w1_ref   : (3, 3*Cin,  Cout) per-ky folded weights, conv_dtype
    # w2_ref   : (3, 3*Cout, Cout)
    # b*_ref   : (1, Cout) f32
    # y_ref    : (1, H, W*Cout) [pack_lanes] or (1, H, W, Cout), conv_dtype
    # stats_ref: (1, 2, Cout) f32  row0 = per-image sum, row1 = per-image M2
    # acc_ref  : (H, W, Cout) f32 scratch accumulator (reused by both convs)
    H, W = x_ref.shape[1], x_ref.shape[2]
    Cin = x_ref.shape[3]
    Cout = w2_ref.shape[2]

    # (ky, src_lo, src_hi, out_lo, out_hi); ky=1 listed first so its full-height
    # contribution initializes acc_ref (no zero fill, no extra RMW load).
    taps = ((1, 0, H, 0, H), (0, 0, H - 1, 1, H), (2, 1, H, 0, H - 1))

    def conv3x3(src, c, w_ref):
        """3x3 'same' conv of src (H, W, c) -> acc_ref (H, W, Cout) f32, no bias."""
        left_f = pltpu.roll(src, 1, axis=1)       # column x-1 (wraps at x=0)
        right_f = pltpu.roll(src, W - 1, axis=1)  # column x+1 (wraps at x=W-1)
        for idx, (ky, s0, s1, o0, o1) in enumerate(taps):
            r = s1 - s0
            if r <= 0:                            # degenerate H == 1
                continue
            wk = w_ref[ky]                        # (3*c, Cout)
            patch = jnp.concatenate(
                [left_f[s0:s1], src[s0:s1], right_f[s0:s1]], axis=2
            ).reshape(r * W, 3 * c)
            contrib = jnp.dot(
                patch, wk, preferred_element_type=jnp.float32
            ).reshape(r, W, Cout)
            if idx == 0:
                acc_ref[o0:o1, :, :] = contrib
            else:
                acc_ref[o0:o1, :, :] += contrib
            # Post-matmul boundary fixup (replaces 6 full-slab jnp.where selects
            # per conv): the rolls wrap, so output column 0 wrongly saw source
            # column W-1 through the kx=0 weights, and output column W-1 wrongly
            # saw source column 0 through the kx=2 weights.
            fix_l = jnp.dot(src[s0:s1, W - 1:W, :].reshape(r, c), wk[:c, :],
                            preferred_element_type=jnp.float32)
            fix_r = jnp.dot(src[s0:s1, 0:1, :].reshape(r, c), wk[2 * c:, :],
                            preferred_element_type=jnp.float32)
            acc_ref[o0:o1, 0:1, :] -= fix_l.reshape(r, 1, Cout)
            acc_ref[o0:o1, W - 1:W, :] -= fix_r.reshape(r, 1, Cout)

    # conv1 + bias + ReLU  (conv_dtype operands, f32 accumulate / elementwise)
    x = x_ref[0].astype(conv_dtype)                               # (H, W, Cin)
    conv3x3(x, Cin, w1_ref)
    y1 = jnp.maximum(acc_ref[...] + b1_ref[...].reshape(1, 1, Cout), 0.0)
    y1 = y1.astype(conv_dtype)                                    # (H, W, Cout)

    # conv2 + bias
    conv3x3(y1, Cout, w2_ref)
    y2 = acc_ref[...] + b2_ref[...].reshape(1, 1, Cout)           # (H, W, Cout) f32
    y2f = y2.reshape(H * W, Cout)

    # per-image BatchNorm partials: sum and centered sum of squares (M2)
    s = jnp.sum(y2f, axis=0, keepdims=True)                       # (1, Cout)
    mean_i = s * (1.0 / (H * W))
    d = y2f - mean_i
    m2 = jnp.sum(d * d, axis=0, keepdims=True)                    # (1, Cout)
    stats_ref[0, :, :] = jnp.concatenate([s, m2], axis=0)

    # pre-BN intermediate writeback in conv_dtype; lane-dense pack only when
    # Cout is lane-sparse (< 128).
    if pack_lanes:
        y_ref[0, :, :] = y2f.reshape(H, W * Cout).astype(y_ref.dtype)
    else:
        y_ref[0, :, :, :] = y2.astype(y_ref.dtype)


def _vmem_cap_bytes():
    """~72% of per-core physical VMEM; v7x-safe fallback if unqueryable."""
    try:
        phys = int(pltpu.get_tpu_info().vmem_capacity_bytes)
    except Exception:
        phys = 64 * 1024 * 1024
    return (phys * 72) // 100


def conv_block_forward(x_nchw, w1, b1, w2, b2, gamma, beta, *,
                       conv_dtype=jnp.bfloat16):
    """ConvBlock forward. x_nchw: (N, Cin, H, W) f32. Weights HWIO.

    conv_dtype is the MXU-operand and intermediate-storage dtype (accumulation
    is always f32). bfloat16 (default) gives 2x MXU throughput and halves the
    pre-BN intermediate's HBM traffic; use jnp.float32 for bit-tight agreement
    with an f32 reference.
    """
    N, Cin, H, W = x_nchw.shape
    Cout = w1.shape[-1]
    eps = 1e-5
    pack_lanes = Cout < 128
    WC = W * Cout
    cb = jnp.dtype(conv_dtype).itemsize
    f32b = 4

    # ---- layout glue: channels onto the lane axis, operands in conv_dtype ----
    x_nhwc = jnp.transpose(x_nchw, (0, 2, 3, 1)).astype(conv_dtype)
    w1f = w1.reshape(3, 3 * Cin, Cout).astype(conv_dtype)     # per-ky folded
    w2f = w2.reshape(3, 3 * Cout, Cout).astype(conv_dtype)
    b1r = b1.reshape(1, Cout).astype(jnp.float32)
    b2r = b2.reshape(1, Cout).astype(jnp.float32)

    # per-grid-step VMEM estimate (double-buffered blocks + scratch + temps)
    est1 = (2 * H * W * Cin * cb
            + 2 * H * WC * cb + 2 * 2 * Cout * f32b
            + 2 * 9 * (Cin + Cout) * Cout * cb + 2 * 2 * Cout * f32b
            + H * W * Cout * f32b                              # acc scratch
            + 4 * H * W * (Cin + Cout) * cb                    # x/y1 + roll/patch
            + 3 * H * W * Cout * f32b)                         # contrib/y2/stats
    vmem1 = int(min(max(2 * est1, 32 * 1024 * 1024), _vmem_cap_bytes()))
    flops1 = 2 * N * H * W * 9 * Cout * (Cin + Cout)
    bytes1 = (N * H * W * (Cin + Cout) * cb + N * 2 * Cout * f32b
              + 9 * (Cin + Cout) * Cout * cb + 2 * Cout * f32b)

    if pack_lanes:
        y_shape = (N, H, WC)
        y_spec = pl.BlockSpec((1, H, WC), lambda n: (n, 0, 0))
    else:
        y_shape = (N, H, W, Cout)
        y_spec = pl.BlockSpec((1, H, W, Cout), lambda n: (n, 0, 0, 0))

    y_out, stats = pl.pallas_call(
        functools.partial(_conv_stats_kernel, pack_lanes=pack_lanes,
                          conv_dtype=conv_dtype),
        grid=(N,),
        in_specs=[
            pl.BlockSpec((1, H, W, Cin), lambda n: (n, 0, 0, 0)),
            pl.BlockSpec((3, 3 * Cin, Cout), lambda n: (0, 0, 0)),
            pl.BlockSpec((1, Cout), lambda n: (0, 0)),
            pl.BlockSpec((3, 3 * Cout, Cout), lambda n: (0, 0, 0)),
            pl.BlockSpec((1, Cout), lambda n: (0, 0)),
        ],
        out_specs=[
            y_spec,
            pl.BlockSpec((1, 2, Cout), lambda n: (n, 0, 0)),
        ],
        out_shape=[
            jax.ShapeDtypeStruct(y_shape, conv_dtype),
            jax.ShapeDtypeStruct((N, 2, Cout), jnp.float32),
        ],
        scratch_shapes=[pltpu.VMEM((H, W, Cout), jnp.float32)],
        compiler_params=pltpu.CompilerParams(
            dimension_semantics=("parallel",),
            vmem_limit_bytes=vmem1),
        cost_estimate=pl.CostEstimate(
            flops=flops1, transcendentals=0, bytes_accessed=bytes1),
    )(x_nhwc, w1f, b1r, w2f, b2r)

    # ---- glue: combine per-image (sum, M2) into batch mean / biased var ----
    cnt_i = float(H * W)
    total = float(N) * cnt_i
    sums = stats[:, 0, :]                                     # (N, Cout)
    m2s = stats[:, 1, :]
    mean_i = sums / cnt_i
    mean = jnp.sum(sums, axis=0) / total
    m2 = jnp.sum(m2s, axis=0) + cnt_i * jnp.sum((mean_i - mean[None, :]) ** 2, axis=0)
    var = m2 / total                                          # biased (train) var
    scale = gamma.astype(jnp.float32) * lax.rsqrt(var + eps)
    shift = beta.astype(jnp.float32) - mean * scale

    # ---- epilogue left to XLA: relu(y*scale+shift) fuses with the NHWC->NCHW
    # transpose into a single HBM pass (was two passes before). ----
    y4 = y_out.reshape(N, H, W, Cout) if pack_lanes else y_out
    out_nhwc = jnp.maximum(y4.astype(jnp.float32) * scale + shift, 0.0)
    return jnp.transpose(out_nhwc, (0, 3, 1, 2))


def _reference(x_nchw, w1, b1, w2, b2, gamma, beta):
    """Pure-JAX reference (NCHW, matches PyTorch ConvBlock in training mode)."""
    w1_oihw = jnp.transpose(w1, (3, 2, 0, 1))
    w2_oihw = jnp.transpose(w2, (3, 2, 0, 1))
    dn = lax.conv_dimension_numbers(x_nchw.shape, w1_oihw.shape,
                                    ("NCHW", "OIHW", "NCHW"))
    y1 = lax.conv_general_dilated(x_nchw, w1_oihw, (1, 1), ((1, 1), (1, 1)),
                                  dimension_numbers=dn)
    y1 = jnp.maximum(y1 + b1[None, :, None, None], 0.0)
    dn2 = lax.conv_dimension_numbers(y1.shape, w2_oihw.shape,
                                     ("NCHW", "OIHW", "NCHW"))
    y2 = lax.conv_general_dilated(y1, w2_oihw, (1, 1), ((1, 1), (1, 1)),
                                  dimension_numbers=dn2)
    y2 = y2 + b2[None, :, None, None]
    mean = jnp.mean(y2, axis=(0, 2, 3), keepdims=True)
    var = jnp.mean((y2 - mean) ** 2, axis=(0, 2, 3), keepdims=True)
    yn = (y2 - mean) * lax.rsqrt(var + 1e-5)
    yn = yn * gamma[None, :, None, None] + beta[None, :, None, None]
    return jnp.maximum(yn, 0.0)


if __name__ == "__main__":
    key = jax.random.PRNGKey(0)
    N, Cin, Cout, H, W = 2, 4, 8, 16, 16

    k_x, k_w1, k_b1, k_w2, k_b2 = jax.random.split(key, 5)
    x = jax.random.normal(k_x, (N, Cin, H, W), dtype=jnp.float32)

    # Deterministic synthetic init (uniform, scale ~ 1/sqrt(fan_in)), HWIO layout.
    s1 = 1.0 / (Cin * 9) ** 0.5
    s2 = 1.0 / (Cout * 9) ** 0.5
    w1 = jax.random.uniform(k_w1, (3, 3, Cin, Cout), jnp.float32, -s1, s1)
    b1 = jax.random.uniform(k_b1, (Cout,), jnp.float32, -s1, s1)
    w2 = jax.random.uniform(k_w2, (3, 3, Cout, Cout), jnp.float32, -s2, s2)
    b2 = jax.random.uniform(k_b2, (Cout,), jnp.float32, -s2, s2)
    gamma = jnp.ones((Cout,), jnp.float32)   # BatchNorm weight init
    beta = jnp.zeros((Cout,), jnp.float32)   # BatchNorm bias init

    ref = _reference(x, w1, b1, w2, b2, gamma, beta)
    fwd = jax.jit(conv_block_forward, static_argnames=("conv_dtype",))

    # exact mode (f32 operands + f32 intermediate): algorithmic correctness check
    out_f32 = jax.block_until_ready(
        fwd(x, w1, b1, w2, b2, gamma, beta, conv_dtype=jnp.float32))
    assert out_f32.shape == (N, Cout, H, W)
    assert jnp.allclose(out_f32, ref, rtol=1e-4, atol=1e-4), "f32 mismatch vs ref"

    # default fast path (bf16 operands + bf16 intermediate, f32 accumulation);
    # tolerance relaxed for bf16 rounding through two chained convs.
    out_bf16 = jax.block_until_ready(fwd(x, w1, b1, w2, b2, gamma, beta))
    assert out_bf16.shape == (N, Cout, H, W)
    assert jnp.allclose(out_bf16, ref, rtol=5e-2, atol=1e-1), "bf16 mismatch vs ref"

    print("KERNEL_OK")
</pallas_src>

<mosaic_0001>
module attributes {stable_mosaic.version = 11 : i64} {
  func.func @_conv_stats_kernel(%arg0: i32, %arg1: memref<1x16x16x4xf32, #tpu.memory_space<vmem>>, %arg2: memref<3x12x8xf32, #tpu.memory_space<vmem>>, %arg3: memref<1x8xf32, #tpu.memory_space<vmem>>, %arg4: memref<3x24x8xf32, #tpu.memory_space<vmem>>, %arg5: memref<1x8xf32, #tpu.memory_space<vmem>>, %arg6: memref<1x16x128xf32, #tpu.memory_space<vmem>>, %arg7: memref<1x2x8xf32, #tpu.memory_space<vmem>>, %arg8: memref<16x16x8xf32, #tpu.memory_space<vmem>>) attributes {dimension_semantics = [#tpu.dimension_semantics<parallel>], iteration_bounds = array<i64: 2>, scalar_prefetch = 0 : i64, scratch_operands = 1 : i64, tpu.core_type = #tpu.core_type<tc>, window_params = [{transform_indices = @transform_0, window_bounds = array<i64: 1, 16, 16, 4>}, {pipeline_mode = #tpu.pipeline_mode<synchronous>, transform_indices = @transform_1, window_bounds = array<i64: 3, 12, 8>}, {pipeline_mode = #tpu.pipeline_mode<synchronous>, transform_indices = @transform_2, window_bounds = array<i64: 1, 8>}, {pipeline_mode = #tpu.pipeline_mode<synchronous>, transform_indices = @transform_3, window_bounds = array<i64: 3, 24, 8>}, {pipeline_mode = #tpu.pipeline_mode<synchronous>, transform_indices = @transform_4, window_bounds = array<i64: 1, 8>}, {transform_indices = @transform_5, window_bounds = array<i64: 1, 16, 128>}, {transform_indices = @transform_6, window_bounds = array<i64: 1, 2, 8>}]} {
    %c0 = arith.constant 0 : index
    %c0_0 = arith.constant 0 : index
    %c0_1 = arith.constant 0 : index
    %c0_2 = arith.constant 0 : index
    %0 = vector.load %arg1[%c0, %c0_0, %c0_1, %c0_2] : memref<1x16x16x4xf32, #tpu.memory_space<vmem>>, vector<1x16x16x4xf32>
    %1 = vector.shape_cast %0 : vector<1x16x16x4xf32> to vector<16x16x4xf32>
    %c1_i32 = arith.constant 1 : i32
    %2 = tpu.dynamic_rotate %1 by %c1_i32 dim 1 : vector<16x16x4xf32>, i32 -> vector<16x16x4xf32>
    %c15_i32 = arith.constant 15 : i32
    %3 = tpu.dynamic_rotate %1 by %c15_i32 dim 1 : vector<16x16x4xf32>, i32 -> vector<16x16x4xf32>
    %c1 = arith.constant 1 : index
    %c0_3 = arith.constant 0 : index
    %c0_4 = arith.constant 0 : index
    %4 = vector.load %arg2[%c1, %c0_3, %c0_4] : memref<3x12x8xf32, #tpu.memory_space<vmem>>, vector<1x12x8xf32>
    %5 = vector.shape_cast %4 : vector<1x12x8xf32> to vector<12x8xf32>
    %6 = tpu.concatenate %2, %1, %3 in 2 : vector<16x16x4xf32>, vector<16x16x4xf32>, vector<16x16x4xf32> -> vector<16x16x12xf32>
    %7 = vector.shape_cast %6 : vector<16x16x12xf32> to vector<256x12xf32>
    %cst = arith.constant dense<0.000000e+00> : vector<256x8xf32>
    %8 = tpu.matmul %7, %5, %cst {dimension_numbers = #tpu.dot_dimension_numbers<[1], [0], [0], [1], [0, 0, 1, 1], [], []>} : vector<256x12xf32>, vector<12x8xf32>, vector<256x8xf32> -> vector<256x8xf32>
    %9 = vector.shape_cast %8 : vector<256x8xf32> to vector<16x16x8xf32>
    %c0_5 = arith.constant 0 : index
    %c0_6 = arith.constant 0 : index
    %c0_7 = arith.constant 0 : index
    %10 = vector.load %arg8[%c0_5, %c0_6, %c0_7] : memref<16x16x8xf32, #tpu.memory_space<vmem>>, vector<16x16x8xf32>
    tpu.vector_store %arg8[%c0_5, %c0_6, %c0_7], %9 {strides = array<i32>} : memref<16x16x8xf32, #tpu.memory_space<vmem>>, vector<16x16x8xf32>,
    %11 = vector.extract_strided_slice %1 {offsets = [0, 15, 0], sizes = [16, 1, 4], strides = [1, 1, 1]} : vector<16x16x4xf32> to vector<16x1x4xf32>
    %12 = vector.shape_cast %11 : vector<16x1x4xf32> to vector<16x4xf32>
    %13 = vector.extract_strided_slice %5 {offsets = [0, 0], sizes = [4, 8], strides = [1, 1]} : vector<12x8xf32> to vector<4x8xf32>
    %cst_8 = arith.constant dense<0.000000e+00> : vector<16x8xf32>
    %14 = tpu.matmul %12, %13, %cst_8 {dimension_numbers = #tpu.dot_dimension_numbers<[1], [0], [0], [1], [0, 0, 1, 1], [], []>} : vector<16x4xf32>, vector<4x8xf32>, vector<16x8xf32> -> vector<16x8xf32>
    %15 = vector.extract_strided_slice %1 {offsets = [0, 0, 0], sizes = [16, 1, 4], strides = [1, 1, 1]} : vector<16x16x4xf32> to vector<16x1x4xf32>
    %16 = vector.shape_cast %15 : vector<16x1x4xf32> to vector<16x4xf32>
    %17 = vector.extract_strided_slice %5 {offsets = [8, 0], sizes = [4, 8], strides = [1, 1]} : vector<12x8xf32> to vector<4x8xf32>
    %cst_9 = arith.constant dense<0.000000e+00> : vector<16x8xf32>
    %18 = tpu.matmul %16, %17, %cst_9 {dimension_numbers = #tpu.dot_dimension_numbers<[1], [0], [0], [1], [0, 0, 1, 1], [], []>} : vector<16x4xf32>, vector<4x8xf32>, vector<16x8xf32> -> vector<16x8xf32>
    %c0_10 = arith.constant 0 : index
    %c0_11 = arith.constant 0 : index
    %c0_12 = arith.constant 0 : index
    %19 = vector.load %arg8[%c0_10, %c0_11, %c0_12] : memref<16x16x8xf32, #tpu.memory_space<vmem>>, vector<16x1x8xf32>
    %20 = vector.shape_cast %14 : vector<16x8xf32> to vector<16x1x8xf32>
    %21 = arith.subf %19, %20 : vector<16x1x8xf32>
    %c0_13 = arith.constant 0 : index
    %c0_14 = arith.constant 0 : index
    %c0_15 = arith.constant 0 : index
    %22 = vector.load %arg8[%c0_13, %c0_14, %c0_15] : memref<16x16x8xf32, #tpu.memory_space<vmem>>, vector<16x1x8xf32>
    tpu.vector_store %arg8[%c0_13, %c0_14, %c0_15], %21 {strides = array<i32>} : memref<16x16x8xf32, #tpu.memory_space<vmem>>, vector<16x1x8xf32>,
    %c0_16 = arith.constant 0 : index
    %c15 = arith.constant 15 : index
    %c0_17 = arith.constant 0 : index
    %23 = vector.load %arg8[%c0_16, %c15, %c0_17] : memref<16x16x8xf32, #tpu.memory_space<vmem>>, vector<16x1x8xf32>
    %24 = vector.shape_cast %18 : vector<16x8xf32> to vector<16x1x8xf32>
    %25 = arith.subf %23, %24 : vector<16x1x8xf32>
    %c0_18 = arith.constant 0 : index
    %c15_19 = arith.constant 15 : index
    %c0_20 = arith.constant 0 : index
    %26 = vector.load %arg8[%c0_18, %c15_19, %c0_20] : memref<16x16x8xf32, #tpu.memory_space<vmem>>, vector<16x1x8xf32>
    tpu.vector_store %arg8[%c0_18, %c15_19, %c0_20], %25 {strides = array<i32>} : memref<16x16x8xf32, #tpu.memory_space<vmem>>, vector<16x1x8xf32>,
    %c0_21 = arith.constant 0 : index
    %c0_22 = arith.constant 0 : index
    %c0_23 = arith.constant 0 : index
    %27 = vector.load %arg2[%c0_21, %c0_22, %c0_23] : memref<3x12x8xf32, #tpu.memory_space<vmem>>, vector<1x12x8xf32>
    %28 = vector.shape_cast %27 : vector<1x12x8xf32> to vector<12x8xf32>
    %29 = vector.extract_strided_slice %2 {offsets = [0, 0, 0], sizes = [15, 16, 4], strides = [1, 1, 1]} : vector<16x16x4xf32> to vector<15x16x4xf32>
    %30 = vector.extract_strided_slice %1 {offsets = [0, 0, 0], sizes = [15, 16, 4], strides = [1, 1, 1]} : vector<16x16x4xf32> to vector<15x16x4xf32>
    %31 = vector.extract_strided_slice %3 {offsets = [0, 0, 0], sizes = [15, 16, 4], strides = [1, 1, 1]} : vector<16x16x4xf32> to vector<15x16x4xf32>
    %32 = tpu.concatenate %29, %30, %31 in 2 : vector<15x16x4xf32>, vector<15x16x4xf32>, vector<15x16x4xf32> -> vector<15x16x12xf32>
    %33 = vector.shape_cast %32 : vector<15x16x12xf32> to vector<240x12xf32>
    %cst_24 = arith.constant dense<0.000000e+00> : vector<240x8xf32>
    %34 = tpu.matmul %33, %28, %cst_24 {dimension_numbers = #tpu.dot_dimension_numbers<[1], [0], [0], [1], [0, 0, 1, 1], [], []>} : vector<240x12xf32>, vector<12x8xf32>, vector<240x8xf32> -> vector<240x8xf32>
    %35 = vector.shape_cast %34 : vector<240x8xf32> to vector<15x16x8xf32>
    %c1_25 = arith.constant 1 : index
    %c0_26 = arith.constant 0 : index
    %c0_27 = arith.constant 0 : index
    %36 = vector.load %arg8[%c1_25, %c0_26, %c0_27] : memref<16x16x8xf32, #tpu.memory_space<vmem>>, vector<15x16x8xf32>
    %37 = arith.addf %36, %35 : vector<15x16x8xf32>
    %c1_28 = arith.constant 1 : index
    %c0_29 = arith.constant 0 : index
    %c0_30 = arith.constant 0 : index
    %38 = vector.load %arg8[%c1_28, %c0_29, %c0_30] : memref<16x16x8xf32, #tpu.memory_space<vmem>>, vector<15x16x8xf32>
    tpu.vector_store %arg8[%c1_28, %c0_29, %c0_30], %37 {strides = array<i32>} : memref<16x16x8xf32, #tpu.memory_space<vmem>>, vector<15x16x8xf32>,
    %39 = vector.extract_strided_slice %1 {offsets = [0, 15, 0], sizes = [15, 1, 4], strides = [1, 1, 1]} : vector<16x16x4xf32> to vector<15x1x4xf32>
    %40 = vector.shape_cast %39 : vector<15x1x4xf32> to vector<15x4xf32>
    %41 = vector.extract_strided_slice %28 {offsets = [0, 0], sizes = [4, 8], strides = [1, 1]} : vector<12x8xf32> to vector<4x8xf32>
    %cst_31 = arith.constant dense<0.000000e+00> : vector<15x8xf32>
    %42 = tpu.matmul %40, %41, %cst_31 {dimension_numbers = #tpu.dot_dimension_numbers<[1], [0], [0], [1], [0, 0, 1, 1], [], []>} : vector<15x4xf32>, vector<4x8xf32>, vector<15x8xf32> -> vector<15x8xf32>
    %43 = vector.extract_strided_slice %1 {offsets = [0, 0, 0], sizes = [15, 1, 4], strides = [1, 1, 1]} : vector<16x16x4xf32> to vector<15x1x4xf32>
    %44 = vector.shape_cast %43 : vector<15x1x4xf32> to vector<15x4xf32>
    %45 = vector.extract_strided_slice %28 {offsets = [8, 0], sizes = [4, 8], strides = [1, 1]} : vector<12x8xf32> to vector<4x8xf32>
    %cst_32 = arith.constant dense<0.000000e+00> : vector<15x8xf32>
    %46 = tpu.matmul %44, %45, %cst_32 {dimension_numbers = #tpu.dot_dimension_numbers<[1], [0], [0], [1], [0, 0, 1, 1], [], []>} : vector<15x4xf32>, vector<4x8xf32>, vector<15x8xf32> -> vector<15x8xf32>
    %c1_33 = arith.constant 1 : index
    %c0_34 = arith.constant 0 : index
    %c0_35 = arith.constant 0 : index
    %47 = vector.load %arg8[%c1_33, %c0_34, %c0_35] : memref<16x16x8xf32, #tpu.memory_space<vmem>>, vector<15x1x8xf32>
    %48 = vector.shape_cast %42 : vector<15x8xf32> to vector<15x1x8xf32>
    %49 = arith.subf %47, %48 : vector<15x1x8xf32>
    %c1_36 = arith.constant 1 : index
    %c0_37 = arith.constant 0 : index
    %c0_38 = arith.constant 0 : index
    %50 = vector.load %arg8[%c1_36, %c0_37, %c0_38] : memref<16x16x8xf32, #tpu.memory_space<vmem>>, vector<15x1x8xf32>
    tpu.vector_store %arg8[%c1_36, %c0_37, %c0_38], %49 {strides = array<i32>} : memref<16x16x8xf32, #tpu.memory_space<vmem>>, vector<15x1x8xf32>,
    %c1_39 = arith.constant 1 : index
    %c15_40 = arith.constant 15 : index
    %c0_41 = arith.constant 0 : index
    %51 = vector.load %arg8[%c1_39, %c15_40, %c0_41] : memref<16x16x8xf32, #tpu.memory_space<vmem>>, vector<15x1x8xf32>
    %52 = vector.shape_cast %46 : vector<15x8xf32> to vector<15x1x8xf32>
    %53 = arith.subf %51, %52 : vector<15x1x8xf32>
    %c1_42 = arith.constant 1 : index
    %c15_43 = arith.constant 15 : index
    %c0_44 = arith.constant 0 : index
    %54 = vector.load %arg8[%c1_42, %c15_43, %c0_44] : memref<16x16x8xf32, #tpu.memory_space<vmem>>, vector<15x1x8xf32>
    tpu.vector_store %arg8[%c1_42, %c15_43, %c0_44], %53 {strides = array<i32>} : memref<16x16x8xf32, #tpu.memory_space<vmem>>, vector<15x1x8xf32>,
    %c2 = arith.constant 2 : index
    %c0_45 = arith.constant 0 : index
    %c0_46 = arith.constant 0 : index
    %55 = vector.load %arg2[%c2, %c0_45, %c0_46] : memref<3x12x8xf32, #tpu.memory_space<vmem>>, vector<1x12x8xf32>
    %56 = vector.shape_cast %55 : vector<1x12x8xf32> to vector<12x8xf32>
    %57 = vector.extract_strided_slice %2 {offsets = [1, 0, 0], sizes = [15, 16, 4], strides = [1, 1, 1]} : vector<16x16x4xf32> to vector<15x16x4xf32>
    %58 = vector.extract_strided_slice %1 {offsets = [1, 0, 0], sizes = [15, 16, 4], strides = [1, 1, 1]} : vector<16x16x4xf32> to vector<15x16x4xf32>
    %59 = vector.extract_strided_slice %3 {offsets = [1, 0, 0], sizes = [15, 16, 4], strides = [1, 1, 1]} : vector<16x16x4xf32> to vector<15x16x4xf32>
    %60 = tpu.concatenate %57, %58, %59 in 2 : vector<15x16x4xf32>, vector<15x16x4xf32>, vector<15x16x4xf32> -> vector<15x16x12xf32>
    %61 = vector.shape_cast %60 : vector<15x16x12xf32> to vector<240x12xf32>
    %cst_47 = arith.constant dense<0.000000e+00> : vector<240x8xf32>
    %62 = tpu.matmul %61, %56, %cst_47 {dimension_numbers = #tpu.dot_dimension_numbers<[1], [0], [0], [1], [0, 0, 1, 1], [], []>} : vector<240x12xf32>, vector<12x8xf32>, vector<240x8xf32> -> vector<240x8xf32>
    %63 = vector.shape_cast %62 : vector<240x8xf32> to vector<15x16x8xf32>
    %c0_48 = arith.constant 0 : index
    %c0_49 = arith.constant 0 : index
    %c0_50 = arith.constant 0 : index
    %64 = vector.load %arg8[%c0_48, %c0_49, %c0_50] : memref<16x16x8xf32, #tpu.memory_space<vmem>>, vector<15x16x8xf32>
    %65 = arith.addf %64, %63 : vector<15x16x8xf32>
    %c0_51 = arith.constant 0 : index
    %c0_52 = arith.constant 0 : index
    %c0_53 = arith.constant 0 : index
    %66 = vector.load %arg8[%c0_51, %c0_52, %c0_53] : memref<16x16x8xf32, #tpu.memory_space<vmem>>, vector<15x16x8xf32>
    tpu.vector_store %arg8[%c0_51, %c0_52, %c0_53], %65 {strides = array<i32>} : memref<16x16x8xf32, #tpu.memory_space<vmem>>, vector<15x16x8xf32>,
    %67 = vector.extract_strided_slice %1 {offsets = [1, 15, 0], sizes = [15, 1, 4], strides = [1, 1, 1]} : vector<16x16x4xf32> to vector<15x1x4xf32>
    %68 = vector.shape_cast %67 : vector<15x1x4xf32> to vector<15x4xf32>
    %69 = vector.extract_strided_slice %56 {offsets = [0, 0], sizes = [4, 8], strides = [1, 1]} : vector<12x8xf32> to vector<4x8xf32>
    %cst_54 = arith.constant dense<0.000000e+00> : vector<15x8xf32>
    %70 = tpu.matmul %68, %69, %cst_54 {dimension_numbers = #tpu.dot_dimension_numbers<[1], [0], [0], [1], [0, 0, 1, 1], [], []>} : vector<15x4xf32>, vector<4x8xf32>, vector<15x8xf32> -> vector<15x8xf32>
    %71 = vector.extract_strided_slice %1 {offsets = [1, 0, 0], sizes = [15, 1, 4], strides = [1, 1, 1]} : vector<16x16x4xf32> to vector<15x1x4xf32>
    %72 = vector.shape_cast %71 : vector<15x1x4xf32> to vector<15x4xf32>
    %73 = vector.extract_strided_slice %56 {offsets = [8, 0], sizes = [4, 8], strides = [1, 1]} : vector<12x8xf32> to vector<4x8xf32>
    %cst_55 = arith.constant dense<0.000000e+00> : vector<15x8xf32>
    %74 = tpu.matmul %72, %73, %cst_55 {dimension_numbers = #tpu.dot_dimension_numbers<[1], [0], [0], [1], [0, 0, 1, 1], [], []>} : vector<15x4xf32>, vector<4x8xf32>, vector<15x8xf32> -> vector<15x8xf32>
    %c0_56 = arith.constant 0 : index
    %c0_57 = arith.constant 0 : index
    %c0_58 = arith.constant 0 : index
    %75 = vector.load %arg8[%c0_56, %c0_57, %c0_58] : memref<16x16x8xf32, #tpu.memory_space<vmem>>, vector<15x1x8xf32>
    %76 = vector.shape_cast %70 : vector<15x8xf32> to vector<15x1x8xf32>
    %77 = arith.subf %75, %76 : vector<15x1x8xf32>
    %c0_59 = arith.constant 0 : index
    %c0_60 = arith.constant 0 : index
    %c0_61 = arith.constant 0 : index
    %78 = vector.load %arg8[%c0_59, %c0_60, %c0_61] : memref<16x16x8xf32, #tpu.memory_space<vmem>>, vector<15x1x8xf32>
    tpu.vector_store %arg8[%c0_59, %c0_60, %c0_61], %77 {strides = array<i32>} : memref<16x16x8xf32, #tpu.memory_space<vmem>>, vector<15x1x8xf32>,
    %c0_62 = arith.constant 0 : index
    %c15_63 = arith.constant 15 : index
    %c0_64 = arith.constant 0 : index
    %79 = vector.load %arg8[%c0_62, %c15_63, %c0_64] : memref<16x16x8xf32, #tpu.memory_space<vmem>>, vector<15x1x8xf32>
    %80 = vector.shape_cast %74 : vector<15x8xf32> to vector<15x1x8xf32>
    %81 = arith.subf %79, %80 : vector<15x1x8xf32>
    %c0_65 = arith.constant 0 : index
    %c15_66 = arith.constant 15 : index
    %c0_67 = arith.constant 0 : index
    %82 = vector.load %arg8[%c0_65, %c15_66, %c0_67] : memref<16x16x8xf32, #tpu.memory_space<vmem>>, vector<15x1x8xf32>
    tpu.vector_store %arg8[%c0_65, %c15_66, %c0_67], %81 {strides = array<i32>} : memref<16x16x8xf32, #tpu.memory_space<vmem>>, vector<15x1x8xf32>,
    %c0_68 = arith.constant 0 : index
    %c0_69 = arith.constant 0 : index
    %c0_70 = arith.constant 0 : index
    %83 = vector.load %arg8[%c0_68, %c0_69, %c0_70] : memref<16x16x8xf32, #tpu.memory_space<vmem>>, vector<16x16x8xf32>
    %c0_71 = arith.constant 0 : index
    %c0_72 = arith.constant 0 : index
    %84 = vector.load %arg3[%c0_71, %c0_72] : memref<1x8xf32, #tpu.memory_space<vmem>>, vector<1x8xf32>
    %85 = vector.shape_cast %84 : vector<1x8xf32> to vector<1x1x8xf32>
    %86 = vector.broadcast %85 : vector<1x1x8xf32> to vector<16x16x8xf32>
    %87 = arith.addf %83, %86 : vector<16x16x8xf32>
    %cst_73 = arith.constant 0.000000e+00 : f32
    %88 = vector.broadcast %cst_73 : f32 to vector<16x16x8xf32>
    %89 = arith.maximumf %87, %88 : vector<16x16x8xf32>
    %c1_i32_74 = arith.constant 1 : i32
    %90 = tpu.dynamic_rotate %89 by %c1_i32_74 dim 1 : vector<16x16x8xf32>, i32 -> vector<16x16x8xf32>
    %c15_i32_75 = arith.constant 15 : i32
    %91 = tpu.dynamic_rotate %89 by %c15_i32_75 dim 1 : vector<16x16x8xf32>, i32 -> vector<16x16x8xf32>
    %c1_76 = arith.constant 1 : index
    %c0_77 = arith.constant 0 : index
    %c0_78 = arith.constant 0 : index
    %92 = vector.load %arg4[%c1_76, %c0_77, %c0_78] : memref<3x24x8xf32, #tpu.memory_space<vmem>>, vector<1x24x8xf32>
    %93 = vector.shape_cast %92 : vector<1x24x8xf32> to vector<24x8xf32>
    %94 = tpu.concatenate %90, %89, %91 in 2 : vector<16x16x8xf32>, vector<16x16x8xf32>, vector<16x16x8xf32> -> vector<16x16x24xf32>
    %95 = vector.shape_cast %94 : vector<16x16x24xf32> to vector<256x24xf32>
    %cst_79 = arith.constant dense<0.000000e+00> : vector<256x8xf32>
    %96 = tpu.matmul %95, %93, %cst_79 {dimension_numbers = #tpu.dot_dimension_numbers<[1], [0], [0], [1], [0, 0, 1, 1], [], []>} : vector<256x24xf32>, vector<24x8xf32>, vector<256x8xf32> -> vector<256x8xf32>
    %97 = vector.shape_cast %96 : vector<256x8xf32> to vector<16x16x8xf32>
    %c0_80 = arith.constant 0 : index
    %c0_81 = arith.constant 0 : index
    %c0_82 = arith.constant 0 : index
    %98 = vector.load %arg8[%c0_80, %c0_81, %c0_82] : memref<16x16x8xf32, #tpu.memory_space<vmem>>, vector<16x16x8xf32>
    tpu.vector_store %arg8[%c0_80, %c0_81, %c0_82], %97 {strides = array<i32>} : memref<16x16x8xf32, #tpu.memory_space<vmem>>, vector<16x16x8xf32>,
    %99 = vector.extract_strided_slice %89 {offsets = [0, 15, 0], sizes = [16, 1, 8], strides = [1, 1, 1]} : vector<16x16x8xf32> to vector<16x1x8xf32>
    %100 = vector.shape_cast %99 : vector<16x1x8xf32> to vector<16x8xf32>
    %101 = vector.extract_strided_slice %93 {offsets = [0, 0], sizes = [8, 8], strides = [1, 1]} : vector<24x8xf32> to vector<8x8xf32>
    %cst_83 = arith.constant dense<0.000000e+00> : vector<16x8xf32>
    %102 = tpu.matmul %100, %101, %cst_83 {dimension_numbers = #tpu.dot_dimension_numbers<[1], [0], [0], [1], [0, 0, 1, 1], [], []>} : vector<16x8xf32>, vector<8x8xf32>, vector<16x8xf32> -> vector<16x8xf32>
    %103 = vector.extract_strided_slice %89 {offsets = [0, 0, 0], sizes = [16, 1, 8], strides = [1, 1, 1]} : vector<16x16x8xf32> to vector<16x1x8xf32>
    %104 = vector.shape_cast %103 : vector<16x1x8xf32> to vector<16x8xf32>
    %105 = vector.extract_strided_slice %93 {offsets = [16, 0], sizes = [8, 8], strides = [1, 1]} : vector<24x8xf32> to vector<8x8xf32>
    %cst_84 = arith.constant dense<0.000000e+00> : vector<16x8xf32>
    %106 = tpu.matmul %104, %105, %cst_84 {dimension_numbers = #tpu.dot_dimension_numbers<[1], [0], [0], [1], [0, 0, 1, 1], [], []>} : vector<16x8xf32>, vector<8x8xf32>, vector<16x8xf32> -> vector<16x8xf32>
    %c0_85 = arith.constant 0 : index
    %c0_86 = arith.constant 0 : index
    %c0_87 = arith.constant 0 : index
    %107 = vector.load %arg8[%c0_85, %c0_86, %c0_87] : memref<16x16x8xf32, #tpu.memory_space<vmem>>, vector<16x1x8xf32>
    %108 = vector.shape_cast %102 : vector<16x8xf32> to vector<16x1x8xf32>
    %109 = arith.subf %107, %108 : vector<16x1x8xf32>
    %c0_88 = arith.constant 0 : index
    %c0_89 = arith.constant 0 : index
    %c0_90 = arith.constant 0 : index
    %110 = vector.load %arg8[%c0_88, %c0_89, %c0_90] : memref<16x16x8xf32, #tpu.memory_space<vmem>>, vector<16x1x8xf32>
    tpu.vector_store %arg8[%c0_88, %c0_89, %c0_90], %109 {strides = array<i32>} : memref<16x16x8xf32, #tpu.memory_space<vmem>>, vector<16x1x8xf32>,
    %c0_91 = arith.constant 0 : index
    %c15_92 = arith.constant 15 : index
    %c0_93 = arith.constant 0 : index
    %111 = vector.load %arg8[%c0_91, %c15_92, %c0_93] : memref<16x16x8xf32, #tpu.memory_space<vmem>>, vector<16x1x8xf32>
    %112 = vector.shape_cast %106 : vector<16x8xf32> to vector<16x1x8xf32>
    %113 = arith.subf %111, %112 : vector<16x1x8xf32>
    %c0_94 = arith.constant 0 : index
    %c15_95 = arith.constant 15 : index
    %c0_96 = arith.constant 0 : index
    %114 = vector.load %arg8[%c0_94, %c15_95, %c0_96] : memref<16x16x8xf32, #tpu.memory_space<vmem>>, vector<16x1x8xf32>
    tpu.vector_store %arg8[%c0_94, %c15_95, %c0_96], %113 {strides = array<i32>} : memref<16x16x8xf32, #tpu.memory_space<vmem>>, vector<16x1x8xf32>,
    %c0_97 = arith.constant 0 : index
    %c0_98 = arith.constant 0 : index
    %c0_99 = arith.constant 0 : index
    %115 = vector.load %arg4[%c0_97, %c0_98, %c0_99] : memref<3x24x8xf32, #tpu.memory_space<vmem>>, vector<1x24x8xf32>
    %116 = vector.shape_cast %115 : vector<1x24x8xf32> to vector<24x8xf32>
    %117 = vector.extract_strided_slice %90 {offsets = [0, 0, 0], sizes = [15, 16, 8], strides = [1, 1, 1]} : vector<16x16x8xf32> to vector<15x16x8xf32>
    %118 = vector.extract_strided_slice %89 {offsets = [0, 0, 0], sizes = [15, 16, 8], strides = [1, 1, 1]} : vector<16x16x8xf32> to vector<15x16x8xf32>
    %119 = vector.extract_strided_slice %91 {offsets = [0, 0, 0], sizes = [15, 16, 8], strides = [1, 1, 1]} : vector<16x16x8xf32> to vector<15x16x8xf32>
    %120 = tpu.concatenate %117, %118, %119 in 2 : vector<15x16x8xf32>, vector<15x16x8xf32>, vector<15x16x8xf32> -> vector<15x16x24xf32>
    %121 = vector.shape_cast %120 : vector<15x16x24xf32> to vector<240x24xf32>
    %cst_100 = arith.constant dense<0.000000e+00> : vector<240x8xf32>
    %122 = tpu.matmul %121, %116, %cst_100 {dimension_numbers = #tpu.dot_dimension_numbers<[1], [0], [0], [1], [0, 0, 1, 1], [], []>} : vector<240x24xf32>, vector<24x8xf32>, vector<240x8xf32> -> vector<240x8xf32>
    %123 = vector.shape_cast %122 : vector<240x8xf32> to vector<15x16x8xf32>
    %c1_101 = arith.constant 1 : index
    %c0_102 = arith.constant 0 : index
    %c0_103 = arith.constant 0 : index
    %124 = vector.load %arg8[%c1_101, %c0_102, %c0_103] : memref<16x16x8xf32, #tpu.memory_space<vmem>>, vector<15x16x8xf32>
    %125 = arith.addf %124, %123 : vector<15x16x8xf32>
    %c1_104 = arith.constant 1 : index
    %c0_105 = arith.constant 0 : index
    %c0_106 = arith.constant 0 : index
    %126 = vector.load %arg8[%c1_104, %c0_105, %c0_106] : memref<16x16x8xf32, #tpu.memory_space<vmem>>, vector<15x16x8xf32>
    tpu.vector_store %arg8[%c1_104, %c0_105, %c0_106], %125 {strides = array<i32>} : memref<16x16x8xf32, #tpu.memory_space<vmem>>, vector<15x16x8xf32>,
    %127 = vector.extract_strided_slice %89 {offsets = [0, 15, 0], sizes = [15, 1, 8], strides = [1, 1, 1]} : vector<16x16x8xf32> to vector<15x1x8xf32>
    %128 = vector.shape_cast %127 : vector<15x1x8xf32> to vector<15x8xf32>
    %129 = vector.extract_strided_slice %116 {offsets = [0, 0], sizes = [8, 8], strides = [1, 1]} : vector<24x8xf32> to vector<8x8xf32>
    %cst_107 = arith.constant dense<0.000000e+00> : vector<15x8xf32>
    %130 = tpu.matmul %128, %129, %cst_107 {dimension_numbers = #tpu.dot_dimension_numbers<[1], [0], [0], [1], [0, 0, 1, 1], [], []>} : vector<15x8xf32>, vector<8x8xf32>, vector<15x8xf32> -> vector<15x8xf32>
    %131 = vector.extract_strided_slice %89 {offsets = [0, 0, 0], sizes = [15, 1, 8], strides = [1, 1, 1]} : vector<16x16x8xf32> to vector<15x1x8xf32>
    %132 = vector.shape_cast %131 : vector<15x1x8xf32> to vector<15x8xf32>
    %133 = vector.extract_strided_slice %116 {offsets = [16, 0], sizes = [8, 8], strides = [1, 1]} : vector<24x8xf32> to vector<8x8xf32>
    %cst_108 = arith.constant dense<0.000000e+00> : vector<15x8xf32>
    %134 = tpu.matmul %132, %133, %cst_108 {dimension_numbers = #tpu.dot_dimension_numbers<[1], [0], [0], [1], [0, 0, 1, 1], [], []>} : vector<15x8xf32>, vector<8x8xf32>, vector<15x8xf32> -> vector<15x8xf32>
    %c1_109 = arith.constant 1 : index
    %c0_110 = arith.constant 0 : index
    %c0_111 = arith.constant 0 : index
    %135 = vector.load %arg8[%c1_109, %c0_110, %c0_111] : memref<16x16x8xf32, #tpu.memory_space<vmem>>, vector<15x1x8xf32>
    %136 = vector.shape_cast %130 : vector<15x8xf32> to vector<15x1x8xf32>
    %137 = arith.subf %135, %136 : vector<15x1x8xf32>
    %c1_112 = arith.constant 1 : index
    %c0_113 = arith.constant 0 : index
    %c0_114 = arith.constant 0 : index
    %138 = vector.load %arg8[%c1_112, %c0_113, %c0_114] : memref<16x16x8xf32, #tpu.memory_space<vmem>>, vector<15x1x8xf32>
    tpu.vector_store %arg8[%c1_112, %c0_113, %c0_114], %137 {strides = array<i32>} : memref<16x16x8xf32, #tpu.memory_space<vmem>>, vector<15x1x8xf32>,
    %c1_115 = arith.constant 1 : index
    %c15_116 = arith.constant 15 : index
    %c0_117 = arith.constant 0 : index
    %139 = vector.load %arg8[%c1_115, %c15_116, %c0_117] : memref<16x16x8xf32, #tpu.memory_space<vmem>>, vector<15x1x8xf32>
    %140 = vector.shape_cast %134 : vector<15x8xf32> to vector<15x1x8xf32>
    %141 = arith.subf %139, %140 : vector<15x1x8xf32>
    %c1_118 = arith.constant 1 : index
    %c15_119 = arith.constant 15 : index
    %c0_120 = arith.constant 0 : index
    %142 = vector.load %arg8[%c1_118, %c15_119, %c0_120] : memref<16x16x8xf32, #tpu.memory_space<vmem>>, vector<15x1x8xf32>
    tpu.vector_store %arg8[%c1_118, %c15_119, %c0_120], %141 {strides = array<i32>} : memref<16x16x8xf32, #tpu.memory_space<vmem>>, vector<15x1x8xf32>,
    %c2_121 = arith.constant 2 : index
    %c0_122 = arith.constant 0 : index
    %c0_123 = arith.constant 0 : index
    %143 = vector.load %arg4[%c2_121, %c0_122, %c0_123] : memref<3x24x8xf32, #tpu.memory_space<vmem>>, vector<1x24x8xf32>
    %144 = vector.shape_cast %143 : vector<1x24x8xf32> to vector<24x8xf32>
    %145 = vector.extract_strided_slice %90 {offsets = [1, 0, 0], sizes = [15, 16, 8], strides = [1, 1, 1]} : vector<16x16x8xf32> to vector<15x16x8xf32>
    %146 = vector.extract_strided_slice %89 {offsets = [1, 0, 0], sizes = [15, 16, 8], strides = [1, 1, 1]} : vector<16x16x8xf32> to vector<15x16x8xf32>
    %147 = vector.extract_strided_slice %91 {offsets = [1, 0, 0], sizes = [15, 16, 8], strides = [1, 1, 1]} : vector<16x16x8xf32> to vector<15x16x8xf32>
    %148 = tpu.concatenate %145, %146, %147 in 2 : vector<15x16x8xf32>, vector<15x16x8xf32>, vector<15x16x8xf32> -> vector<15x16x24xf32>
    %149 = vector.shape_cast %148 : vector<15x16x24xf32> to vector<240x24xf32>
    %cst_124 = arith.constant dense<0.000000e+00> : vector<240x8xf32>
    %150 = tpu.matmul %149, %144, %cst_124 {dimension_numbers = #tpu.dot_dimension_numbers<[1], [0], [0], [1], [0, 0, 1, 1], [], []>} : vector<240x24xf32>, vector<24x8xf32>, vector<240x8xf32> -> vector<240x8xf32>
    %151 = vector.shape_cast %150 : vector<240x8xf32> to vector<15x16x8xf32>
    %c0_125 = arith.constant 0 : index
    %c0_126 = arith.constant 0 : index
    %c0_127 = arith.constant 0 : index
    %152 = vector.load %arg8[%c0_125, %c0_126, %c0_127] : memref<16x16x8xf32, #tpu.memory_space<vmem>>, vector<15x16x8xf32>
    %153 = arith.addf %152, %151 : vector<15x16x8xf32>
    %c0_128 = arith.constant 0 : index
    %c0_129 = arith.constant 0 : index
    %c0_130 = arith.constant 0 : index
    %154 = vector.load %arg8[%c0_128, %c0_129, %c0_130] : memref<16x16x8xf32, #tpu.memory_space<vmem>>, vector<15x16x8xf32>
    tpu.vector_store %arg8[%c0_128, %c0_129, %c0_130], %153 {strides = array<i32>} : memref<16x16x8xf32, #tpu.memory_space<vmem>>, vector<15x16x8xf32>,
    %155 = vector.extract_strided_slice %89 {offsets = [1, 15, 0], sizes = [15, 1, 8], strides = [1, 1, 1]} : vector<16x16x8xf32> to vector<15x1x8xf32>
    %156 = vector.shape_cast %155 : vector<15x1x8xf32> to vector<15x8xf32>
    %157 = vector.extract_strided_slice %144 {offsets = [0, 0], sizes = [8, 8], strides = [1, 1]} : vector<24x8xf32> to vector<8x8xf32>
    %cst_131 = arith.constant dense<0.000000e+00> : vector<15x8xf32>
    %158 = tpu.matmul %156, %157, %cst_131 {dimension_numbers = #tpu.dot_dimension_numbers<[1], [0], [0], [1], [0, 0, 1, 1], [], []>} : vector<15x8xf32>, vector<8x8xf32>, vector<15x8xf32> -> vector<15x8xf32>
    %159 = vector.extract_strided_slice %89 {offsets = [1, 0, 0], sizes = [15, 1, 8], strides = [1, 1, 1]} : vector<16x16x8xf32> to vector<15x1x8xf32>
    %160 = vector.shape_cast %159 : vector<15x1x8xf32> to vector<15x8xf32>
    %161 = vector.extract_strided_slice %144 {offsets = [16, 0], sizes = [8, 8], strides = [1, 1]} : vector<24x8xf32> to vector<8x8xf32>
    %cst_132 = arith.constant dense<0.000000e+00> : vector<15x8xf32>
    %162 = tpu.matmul %160, %161, %cst_132 {dimension_numbers = #tpu.dot_dimension_numbers<[1], [0], [0], [1], [0, 0, 1, 1], [], []>} : vector<15x8xf32>, vector<8x8xf32>, vector<15x8xf32> -> vector<15x8xf32>
    %c0_133 = arith.constant 0 : index
    %c0_134 = arith.constant 0 : index
    %c0_135 = arith.constant 0 : index
    %163 = vector.load %arg8[%c0_133, %c0_134, %c0_135] : memref<16x16x8xf32, #tpu.memory_space<vmem>>, vector<15x1x8xf32>
    %164 = vector.shape_cast %158 : vector<15x8xf32> to vector<15x1x8xf32>
    %165 = arith.subf %163, %164 : vector<15x1x8xf32>
    %c0_136 = arith.constant 0 : index
    %c0_137 = arith.constant 0 : index
    %c0_138 = arith.constant 0 : index
    %166 = vector.load %arg8[%c0_136, %c0_137, %c0_138] : memref<16x16x8xf32, #tpu.memory_space<vmem>>, vector<15x1x8xf32>
    tpu.vector_store %arg8[%c0_136, %c0_137, %c0_138], %165 {strides = array<i32>} : memref<16x16x8xf32, #tpu.memory_space<vmem>>, vector<15x1x8xf32>,
    %c0_139 = arith.constant 0 : index
    %c15_140 = arith.constant 15 : index
    %c0_141 = arith.constant 0 : index
    %167 = vector.load %arg8[%c0_139, %c15_140, %c0_141] : memref<16x16x8xf32, #tpu.memory_space<vmem>>, vector<15x1x8xf32>
    %168 = vector.shape_cast %162 : vector<15x8xf32> to vector<15x1x8xf32>
    %169 = arith.subf %167, %168 : vector<15x1x8xf32>
    %c0_142 = arith.constant 0 : index
    %c15_143 = arith.constant 15 : index
    %c0_144 = arith.constant 0 : index
    %170 = vector.load %arg8[%c0_142, %c15_143, %c0_144] : memref<16x16x8xf32, #tpu.memory_space<vmem>>, vector<15x1x8xf32>
    tpu.vector_store %arg8[%c0_142, %c15_143, %c0_144], %169 {strides = array<i32>} : memref<16x16x8xf32, #tpu.memory_space<vmem>>, vector<15x1x8xf32>,
    %c0_145 = arith.constant 0 : index
    %c0_146 = arith.constant 0 : index
    %c0_147 = arith.constant 0 : index
    %171 = vector.load %arg8[%c0_145, %c0_146, %c0_147] : memref<16x16x8xf32, #tpu.memory_space<vmem>>, vector<16x16x8xf32>
    %c0_148 = arith.constant 0 : index
    %c0_149 = arith.constant 0 : index
    %172 = vector.load %arg5[%c0_148, %c0_149] : memref<1x8xf32, #tpu.memory_space<vmem>>, vector<1x8xf32>
    %173 = vector.shape_cast %172 : vector<1x8xf32> to vector<1x1x8xf32>
    %174 = vector.broadcast %173 : vector<1x1x8xf32> to vector<16x16x8xf32>
    %175 = arith.addf %171, %174 : vector<16x16x8xf32>
    %176 = vector.shape_cast %175 : vector<16x16x8xf32> to vector<256x8xf32>
    %cst_150 = arith.constant dense<0.000000e+00> : vector<8xf32>
    %177 = vector.multi_reduction <add>, %176, %cst_150 [0] : vector<256x8xf32> to vector<8xf32>
    %178 = vector.shape_cast %177 : vector<8xf32> to vector<1x8xf32>
    %cst_151 = arith.constant 3.906250e-03 : f32
    %179 = vector.broadcast %cst_151 : f32 to vector<1x8xf32>
    %180 = arith.mulf %178, %179 : vector<1x8xf32>
    %181 = vector.broadcast %180 : vector<1x8xf32> to vector<256x8xf32>
    %182 = arith.subf %176, %181 : vector<256x8xf32>
    %183 = arith.mulf %182, %182 : vector<256x8xf32>
    %cst_152 = arith.constant dense<0.000000e+00> : vector<8xf32>
    %184 = vector.multi_reduction <add>, %183, %cst_152 [0] : vector<256x8xf32> to vector<8xf32>
    %185 = vector.shape_cast %184 : vector<8xf32> to vector<1x8xf32>
    %186 = tpu.concatenate %178, %185 in 0 : vector<1x8xf32>, vector<1x8xf32> -> vector<2x8xf32>
    %c0_153 = arith.constant 0 : index
    %c0_154 = arith.constant 0 : index
    %c0_155 = arith.constant 0 : index
    %187 = vector.load %arg7[%c0_153, %c0_154, %c0_155] : memref<1x2x8xf32, #tpu.memory_space<vmem>>, vector<1x2x8xf32>
    %188 = vector.shape_cast %187 : vector<1x2x8xf32> to vector<2x8xf32>
    %189 = vector.shape_cast %186 : vector<2x8xf32> to vector<1x2x8xf32>
    tpu.vector_store %arg7[%c0_153, %c0_154, %c0_155], %189 {strides = array<i32>} : memref<1x2x8xf32, #tpu.memory_space<vmem>>, vector<1x2x8xf32>,
    %190 = vector.shape_cast %176 : vector<256x8xf32> to vector<16x128xf32>
    %c0_156 = arith.constant 0 : index
    %c0_157 = arith.constant 0 : index
    %c0_158 = arith.constant 0 : index
    %191 = vector.load %arg6[%c0_156, %c0_157, %c0_158] : memref<1x16x128xf32, #tpu.memory_space<vmem>>, vector<1x16x128xf32>
    %192 = vector.shape_cast %191 : vector<1x16x128xf32> to vector<16x128xf32>
    %193 = vector.shape_cast %190 : vector<16x128xf32> to vector<1x16x128xf32>
    tpu.vector_store %arg6[%c0_156, %c0_157, %c0_158], %193 {strides = array<i32>} : memref<1x16x128xf32, #tpu.memory_space<vmem>>, vector<1x16x128xf32>,
    return
  }
  func.func @transform_0(%arg0: i32) -> (i32, i32, i32, i32) {
    %c0_i32 = arith.constant 0 : i32
    %c0_i32_0 = arith.constant 0 : i32
    %c0_i32_1 = arith.constant 0 : i32
    %c0_i32_2 = arith.constant 0 : i32
    return %arg0, %c0_i32, %c0_i32_0, %c0_i32_1 : i32, i32, i32, i32
  }
  func.func @transform_1(%arg0: i32) -> (i32, i32, i32) {
    %c0_i32 = arith.constant 0 : i32
    %c0_i32_0 = arith.constant 0 : i32
    %c0_i32_1 = arith.constant 0 : i32
    %c0_i32_2 = arith.constant 0 : i32
    return %c0_i32, %c0_i32_0, %c0_i32_1 : i32, i32, i32
  }
  func.func @transform_2(%arg0: i32) -> (i32, i32) {
    %c0_i32 = arith.constant 0 : i32
    %c0_i32_0 = arith.constant 0 : i32
    %c0_i32_1 = arith.constant 0 : i32
    return %c0_i32, %c0_i32_0 : i32, i32
  }
  func.func @transform_3(%arg0: i32) -> (i32, i32, i32) {
    %c0_i32 = arith.constant 0 : i32
    %c0_i32_0 = arith.constant 0 : i32
    %c0_i32_1 = arith.constant 0 : i32
    %c0_i32_2 = arith.constant 0 : i32
    return %c0_i32, %c0_i32_0, %c0_i32_1 : i32, i32, i32
  }
  func.func @transform_4(%arg0: i32) -> (i32, i32) {
    %c0_i32 = arith.constant 0 : i32
    %c0_i32_0 = arith.constant 0 : i32
    %c0_i32_1 = arith.constant 0 : i32
    return %c0_i32, %c0_i32_0 : i32, i32
  }
  func.func @transform_5(%arg0: i32) -> (i32, i32, i32) {
    %c0_i32 = arith.constant 0 : i32
    %c0_i32_0 = arith.constant 0 : i32
    %c0_i32_1 = arith.constant 0 : i32
    return %arg0, %c0_i32, %c0_i32_0 : i32, i32, i32
  }
  func.func @transform_6(%arg0: i32) -> (i32, i32, i32) {
    %c0_i32 = arith.constant 0 : i32
    %c0_i32_0 = arith.constant 0 : i32
    %c0_i32_1 = arith.constant 0 : i32
    return %arg0, %c0_i32, %c0_i32_0 : i32, i32, i32
  }
}

</mosaic_0001>

<llo_original>
// kernel: conv_block_forward.1
$region0: #{conv_block_forward.1}
  #allocation0 [shape = 'u32[]', space=smem, size = 0x4, offset = 0x4, fixed_abs, tag = 'smem constant byte address 0x4 - core index']
  #allocation1 [shape = 'u32[72,128]{1,0:T(1,128)}', space=vmem, size = 0x9000, scoped, tag = 'internal scratch']
  #allocation2 [shape = 'f32[16,16,8]{2,1,0:T(8,128)}', space=vmem, size = 0x20000, scoped, tag = 'scratch operand']
  %s0 = inlined_call_operand.vmem [shape: f32[2,16,16,4], index: 0, kind: input, shape index: {}]
  %s1 = inlined_call_operand.vmem [shape: f32[3,12,8], index: 1, kind: input, shape index: {}]
  %s2 = inlined_call_operand.vmem [shape: f32[1,8], index: 2, kind: input, shape index: {}]
  %s3 = inlined_call_operand.vmem [shape: f32[3,24,8], index: 3, kind: input, shape index: {}]
  %s4 = inlined_call_operand.vmem [shape: f32[1,8], index: 4, kind: input, shape index: {}]
  %s5 = inlined_call_operand.vmem [shape: f32[2,16,128], index: 5, kind: output, shape index: {0}]
  %s6 = inlined_call_operand.vmem [shape: f32[2,2,8], index: 6, kind: output, shape index: {1}]
  %7 = xla_tuple %s5, %s6
  %s8 = sld [smem:[#allocation0]]
  $region61: #{conv_block_forward.1} parent=0
    _
  %s10 = ssub.s32 1, %s8
  %s11 = scalar_select 0, %s10, %s8
  loop: start=0, step=1, limit=4
  $region2: #{conv_block_forward.1} parent=0 // loop_pre_header
    _
  $region3: #{conv_block_forward.1} parent=0 // loop_header
    %s13 = sphi 0, %s17
    %p14 = scmp.ge.s32.totalorder %s13, 4
    %s23 = sphi 0, %s25
    %s26 = sphi 0, %s23
    %s27 = sphi 0, %s26
    %s43 = sphi 0, %s27
    %s47 = sphi 0, %s47
    %s49 = sphi 0, %s47
    %s50 = sphi 0, %s49
    %s64 = sphi 0, %s50
    %s68 = sphi 0, %s68
    %s70 = sphi 0, %s68
    %s71 = sphi 0, %s70
    %s85 = sphi 0, %s71
    %s89 = sphi 0, %s89
    %s91 = sphi 0, %s89
    %s92 = sphi 0, %s91
    %s106 = sphi 0, %s92
    %s110 = sphi 0, %s110
    %s112 = sphi 0, %s110
    %s113 = sphi 0, %s112
    %s127 = sphi 0, %s113
    %s133 = sphi 0, %s135
    %s136 = sphi 0, %s133
    %s137 = sphi 0, %s136
    %s153 = sphi 0, %s137
    %s159 = sphi 0, %s161
    %s162 = sphi 0, %s159
    %s163 = sphi 0, %s162
    %s179 = sphi 0, %s163
  $region4: #{conv_block_forward.1} parent=0 // loop_header_branch
    %16 = sbr.rel (%p14) target = $region8
  $region5: #{conv_block_forward.1} parent=0 // loop_body
    %s18 = ssub.s32 %s13, 1
    %s19 = ssub.s32 %s13, 2
    %s20 = sadd.s32 %s13, 1
    %s21 = ssub.s32 %s13, %s20
    %p22 = scmp.eq.s32.totalorder %s21, 0
    %s24 = sadd.s32 %s23, 1
    %s25 = scalar_select %p22, %s23, %s24
    %p28 = pneg %p22
    %p29 = scmp.eq.s32.totalorder %s13, 1
    %p30 = por %p28, %p29
    %p31 = scmp.ne.s32.totalorder %s23, %s26
    %p32 = scmp.eq.s32.totalorder %s13, 0
    %p33 = por %p31, %p32
    %p34 = scmp.ne.s32.totalorder %s23, %s26
    %p35 = scmp.eq.s32.totalorder %s18, 1
    %p36 = por %p34, %p35
    %p37 = scmp.ne.s32.totalorder %s26, %s27
    %p38 = scmp.eq.s32.totalorder %s18, 0
    %p39 = por %p37, %p38
    %p40 = scmp.ne.s32.totalorder %s26, %s27
    %p41 = scmp.eq.s32.totalorder %s19, 1
    %p42 = por %p40, %p41
    %p44 = scmp.ne.s32.totalorder %s27, %s43
    %p45 = scmp.eq.s32.totalorder %s19, 0
    %p46 = por %p44, %p45
    %s48 = sadd.s32 %s47, 1
    %p51 = scmp.eq.s32.totalorder %s13, 1
    %p52 = scmp.ne.s32.totalorder %s47, %s49
    %p53 = scmp.eq.s32.totalorder %s13, 0
    %p54 = por %p52, %p53
    %p55 = scmp.ne.s32.totalorder %s47, %s49
    %p56 = scmp.eq.s32.totalorder %s18, 1
    %p57 = por %p55, %p56
    %p58 = scmp.ne.s32.totalorder %s49, %s50
    %p59 = scmp.eq.s32.totalorder %s18, 0
    %p60 = por %p58, %p59
    %p61 = scmp.ne.s32.totalorder %s49, %s50
    %p62 = scmp.eq.s32.totalorder %s19, 1
    %p63 = por %p61, %p62
    %p65 = scmp.ne.s32.totalorder %s50, %s64
    %p66 = scmp.eq.s32.totalorder %s19, 0
    %p67 = por %p65, %p66
    %s69 = sadd.s32 %s68, 1
    %p72 = scmp.eq.s32.totalorder %s13, 1
    %p73 = scmp.ne.s32.totalorder %s68, %s70
    %p74 = scmp.eq.s32.totalorder %s13, 0
    %p75 = por %p73, %p74
    %p76 = scmp.ne.s32.totalorder %s68, %s70
    %p77 = scmp.eq.s32.totalorder %s18, 1
    %p78 = por %p76, %p77
    %p79 = scmp.ne.s32.totalorder %s70, %s71
    %p80 = scmp.eq.s32.totalorder %s18, 0
    %p81 = por %p79, %p80
    %p82 = scmp.ne.s32.totalorder %s70, %s71
    %p83 = scmp.eq.s32.totalorder %s19, 1
    %p84 = por %p82, %p83
    %p86 = scmp.ne.s32.totalorder %s71, %s85
    %p87 = scmp.eq.s32.totalorder %s19, 0
    %p88 = por %p86, %p87
    %s90 = sadd.s32 %s89, 1
    %p93 = scmp.eq.s32.totalorder %s13, 1
    %p94 = scmp.ne.s32.totalorder %s89, %s91
    %p95 = scmp.eq.s32.totalorder %s13, 0
    %p96 = por %p94, %p95
    %p97 = scmp.ne.s32.totalorder %s89, %s91
    %p98 = scmp.eq.s32.totalorder %s18, 1
    %p99 = por %p97, %p98
    %p100 = scmp.ne.s32.totalorder %s91, %s92
    %p101 = scmp.eq.s32.totalorder %s18, 0
    %p102 = por %p100, %p101
    %p103 = scmp.ne.s32.totalorder %s91, %s92
    %p104 = scmp.eq.s32.totalorder %s19, 1
    %p105 = por %p103, %p104
    %p107 = scmp.ne.s32.totalorder %s92, %s106
    %p108 = scmp.eq.s32.totalorder %s19, 0
    %p109 = por %p107, %p108
    %s111 = sadd.s32 %s110, 1
    %p114 = scmp.eq.s32.totalorder %s13, 1
    %p115 = scmp.ne.s32.totalorder %s110, %s112
    %p116 = scmp.eq.s32.totalorder %s13, 0
    %p117 = por %p115, %p116
    %p118 = scmp.ne.s32.totalorder %s110, %s112
    %p119 = scmp.eq.s32.totalorder %s18, 1
    %p120 = por %p118, %p119
    %p121 = scmp.ne.s32.totalorder %s112, %s113
    %p122 = scmp.eq.s32.totalorder %s18, 0
    %p123 = por %p121, %p122
    %p124 = scmp.ne.s32.totalorder %s112, %s113
    %p125 = scmp.eq.s32.totalorder %s19, 1
    %p126 = por %p124, %p125
    %p128 = scmp.ne.s32.totalorder %s113, %s127
    %p129 = scmp.eq.s32.totalorder %s19, 0
    %p130 = por %p128, %p129
    %s131 = ssub.s32 %s13, %s20
    %p132 = scmp.eq.s32.totalorder %s131, 0
    %s134 = sadd.s32 %s133, 1
    %s135 = scalar_select %p132, %s133, %s134
    %p138 = pneg %p132
    %p139 = scmp.eq.s32.totalorder %s13, 1
    %p140 = por %p138, %p139
    %p141 = scmp.ne.s32.totalorder %s133, %s136
    %p142 = scmp.eq.s32.totalorder %s13, 0
    %p143 = por %p141, %p142
    %p144 = scmp.ne.s32.totalorder %s133, %s136
    %p145 = scmp.eq.s32.totalorder %s18, 1
    %p146 = por %p144, %p145
    %p147 = scmp.ne.s32.totalorder %s136, %s137
    %p148 = scmp.eq.s32.totalorder %s18, 0
    %p149 = por %p147, %p148
    %p150 = scmp.ne.s32.totalorder %s136, %s137
    %p151 = scmp.eq.s32.totalorder %s19, 1
    %p152 = por %p150, %p151
    %p154 = scmp.ne.s32.totalorder %s137, %s153
    %p155 = scmp.eq.s32.totalorder %s19, 0
    %p156 = por %p154, %p155
    %s157 = ssub.s32 %s13, %s20
    %p158 = scmp.eq.s32.totalorder %s157, 0
    %s160 = sadd.s32 %s159, 1
    %s161 = scalar_select %p158, %s159, %s160
    %p164 = pneg %p158
    %p165 = scmp.eq.s32.totalorder %s13, 1
    %p166 = por %p164, %p165
    %p167 = scmp.ne.s32.totalorder %s159, %s162
    %p168 = scmp.eq.s32.totalorder %s13, 0
    %p169 = por %p167, %p168
    %p170 = scmp.ne.s32.totalorder %s159, %s162
    %p171 = scmp.eq.s32.totalorder %s18, 1
    %p172 = por %p170, %p171
    %p173 = scmp.ne.s32.totalorder %s162, %s163
    %p174 = scmp.eq.s32.totalorder %s18, 0
    %p175 = por %p173, %p174
    %p176 = scmp.ne.s32.totalorder %s162, %s163
    %p177 = scmp.eq.s32.totalorder %s19, 1
    %p178 = por %p176, %p177
    %p180 = scmp.ne.s32.totalorder %s163, %s179
    %p181 = scmp.eq.s32.totalorder %s19, 0
    %p182 = por %p180, %p181
    %p183 = scmp.le.s32.totalorder 1, %s13
    %p184 = scmp.lt.s32.totalorder %s13, 3
    %p185 = pnand %p183, %p184
    %p186 = pneg %p185
    // Predicated region
    $region9: #{conv_block_forward.1} parent=5 // pred_check
      _
    $region10: #{conv_block_forward.1} parent=5 // pred_check_branch
      %188 = sbr.rel (%p185) target = $region12
    $region11: #{conv_block_forward.1} parent=5 // pred_region
      %s189 = ssub.s32 %s13, 1
      // Predicated region
      $region13: #{conv_block_forward.1} parent=11 // pred_check
        %p190 = pneg %p60
      $region14: #{conv_block_forward.1} parent=11 // pred_check_branch
        %192 = sbr.rel (%p190) target = $region16
      $region15: #{conv_block_forward.1} parent=11 // pred_region
        _
      $region16: #{conv_block_forward.1} parent=11 // pred_fallthru
        _
      // Predicated region
      $region17: #{conv_block_forward.1} parent=11 // pred_check
        %p193 = pneg %p81
      $region18: #{conv_block_forward.1} parent=11 // pred_check_branch
        %195 = sbr.rel (%p193) target = $region20
      $region19: #{conv_block_forward.1} parent=11 // pred_region
        _
      $region20: #{conv_block_forward.1} parent=11 // pred_fallthru
        _
      // Predicated region
      $region21: #{conv_block_forward.1} parent=11 // pred_check
        %p196 = pneg %p102
      $region22: #{conv_block_forward.1} parent=11 // pred_check_branch
        %198 = sbr.rel (%p196) target = $region24
      $region23: #{conv_block_forward.1} parent=11 // pred_region
        _
      $region24: #{conv_block_forward.1} parent=11 // pred_fallthru
        _
      // Predicated region
      $region25: #{conv_block_forward.1} parent=11 // pred_check
        %p199 = pneg %p123
      $region26: #{conv_block_forward.1} parent=11 // pred_check_branch
        %201 = sbr.rel (%p199) target = $region28
      $region27: #{conv_block_forward.1} parent=11 // pred_region
        _
      $region28: #{conv_block_forward.1} parent=11 // pred_fallthru
        _
    $region12: #{conv_block_forward.1} parent=5 // pred_fallthru
      _
    %p202 = scmp.lt.s32.totalorder %s13, 2
    // Predicated region
    $region29: #{conv_block_forward.1} parent=5 // pred_check
      %p203 = pneg %p202
    $region30: #{conv_block_forward.1} parent=5 // pred_check_branch
      %205 = sbr.rel (%p203) target = $region32
    $region31: #{conv_block_forward.1} parent=5 // pred_region
      // Predicated region
      $region33: #{conv_block_forward.1} parent=31 // pred_check
        %p206 = pneg %p33
      $region34: #{conv_block_forward.1} parent=31 // pred_check_branch
        %208 = sbr.rel (%p206) target = $region36
      $region35: #{conv_block_forward.1} parent=31 // pred_region
        %p209 = scmp.lt.s32.totalorder %s13, 1
        %s210 = scalar_select %p209, %s13, 1
        %s211 = smul.addr %s210, 32
        %s212 = smul.addr %s211, 8
        %s213 = scalar_lea.vmem %s0, %s212
      $region36: #{conv_block_forward.1} parent=31 // pred_fallthru
        _
    $region32: #{conv_block_forward.1} parent=5 // pred_fallthru
      _
    %p214 = scmp.le.s32.totalorder 1, %s13
    %p215 = scmp.lt.s32.totalorder %s13, 3
    %p216 = pnand %p214, %p215
    %p217 = pneg %p216
    // Predicated region
    $region37: #{conv_block_forward.1} parent=5 // pred_check
      _
    $region38: #{conv_block_forward.1} parent=5 // pred_check_branch
      %219 = sbr.rel (%p216) target = $region40
    $region39: #{conv_block_forward.1} parent=5 // pred_region
      %s220 = ssub.s32 %s13, 1
      %p221 = scmp.lt.s32.totalorder %s18, 1
      %s222 = scalar_select %p221, %s18, 1
      %s223 = smul.addr %s222, 32
      %s224 = smul.addr %s223, 8
      %s225 = scalar_lea.vmem %s0, %s224
      %p226 = pneg %p39
      %p227 = pneg %p36
      %p228 = pneg %p60
      %p229 = pneg %p57
      %p230 = pneg %p81
      %p231 = pneg %p78
      %p232 = pneg %p102
      %p233 = pneg %p99
      %p234 = pneg %p123
      %p235 = pneg %p120
      %p236 = pneg %p149
      %p237 = pneg %p146
      %p238 = scmp.lt.s32.totalorder %s18, 1
      %s239 = scalar_select %p238, %s18, 1
      %s240 = smul.addr %s239, 2
      %s241 = smul.addr %s240, 8
      %s242 = scalar_lea.vmem %s5, %s241
      %p243 = pneg %p175
      %p244 = pneg %p172
      %p245 = scmp.lt.s32.totalorder %s18, 1
      %s246 = scalar_select %p245, %s18, 1
      %s247 = smul.addr %s246, 2
      %s248 = scalar_lea.vmem %s6, %s247
      %p249 = scmp.lt.s32.totalorder %s18, 1
      %s250 = scalar_select %p249, %s18, 1
      %s251 = smul.addr %s250, 32
      %s252 = smul.addr %s251, 8
      %s253 = scalar_lea.vmem %s0, %s252
      %p254 = scmp.lt.s32.totalorder %s18, 1
      %s255 = scalar_select %p254, %s18, 1
      %s256 = smul.addr %s255, 2
      %s257 = smul.addr %s256, 8
      %s258 = scalar_lea.vmem %s5, %s257
      %p259 = scmp.lt.s32.totalorder %s18, 1
      %s260 = scalar_select %p259, %s18, 1
      %s261 = smul.addr %s260, 2
      %s262 = scalar_lea.vmem %s6, %s261
      %v263 = vld [vmem:[%s253] sm:$0xff]
      %v264 = vld [vmem:[%s253 + $0x8] sm:$0xff]
      %v265 = vld [vmem:[%s253 + $0x10] sm:$0xff]
      %v266 = vld [vmem:[%s253 + $0x18] sm:$0xff]
      %v267 = vld [vmem:[%s253 + $0x20] sm:$0xff]
      %v268 = vld [vmem:[%s253 + $0x28] sm:$0xff]
      %v269 = vld [vmem:[%s253 + $0x30] sm:$0xff]
      %v270 = vld [vmem:[%s253 + $0x38] sm:$0xff]
      %v271 = vld [vmem:[%s253 + $0x40] sm:$0xff]
      %v272 = vld [vmem:[%s253 + $0x48] sm:$0xff]
      %v273 = vld [vmem:[%s253 + $0x50] sm:$0xff]
      %v274 = vld [vmem:[%s253 + $0x58] sm:$0xff]
      %v275 = vld [vmem:[%s253 + $0x60] sm:$0xff]
      %v276 = vld [vmem:[%s253 + $0x68] sm:$0xff]
      %v277 = vld [vmem:[%s253 + $0x70] sm:$0xff]
      %v278 = vld [vmem:[%s253 + $0x78] sm:$0xff]
      %v279 = vld [vmem:[%s253 + $0x80] sm:$0xff]
      %v280 = vld [vmem:[%s253 + $0x88] sm:$0xff]
      %v281 = vld [vmem:[%s253 + $0x90] sm:$0xff]
      %v282 = vld [vmem:[%s253 + $0x98] sm:$0xff]
      %v283 = vld [vmem:[%s253 + $0xa0] sm:$0xff]
      %v284 = vld [vmem:[%s253 + $0xa8] sm:$0xff]
      %v285 = vld [vmem:[%s253 + $0xb0] sm:$0xff]
      %v286 = vld [vmem:[%s253 + $0xb8] sm:$0xff]
      %v287 = vld [vmem:[%s253 + $0xc0] sm:$0xff]
      %v288 = vld [vmem:[%s253 + $0xc8] sm:$0xff]
      %v289 = vld [vmem:[%s253 + $0xd0] sm:$0xff]
      %v290 = vld [vmem:[%s253 + $0xd8] sm:$0xff]
      %v291 = vld [vmem:[%s253 + $0xe0] sm:$0xff]
      %v292 = vld [vmem:[%s253 + $0xe8] sm:$0xff]
      %v293 = vld [vmem:[%s253 + $0xf0] sm:$0xff]
      %v294 = vld [vmem:[%s253 + $0xf8] sm:$0xff]
      %v295 = vrot.slane %v263, 7
      %v296 = vrot.slane %v265, 7
      %v297 = vrot.slane %v267, 7
      %v298 = vrot.slane %v269, 7
      %v299 = vrot.slane %v271, 7
      %v300 = vrot.slane %v273, 7
      %v301 = vrot.slane %v275, 7
      %v302 = vrot.slane %v277, 7
      %v303 = vrot.slane %v279, 7
      %v304 = vrot.slane %v281, 7
      %v305 = vrot.slane %v283, 7
      %v306 = vrot.slane %v285, 7
      %v307 = vrot.slane %v287, 7
      %v308 = vrot.slane %v289, 7
      %v309 = vrot.slane %v291, 7
      %v310 = vrot.slane %v293, 7
      %v311 = vrot.slane %v264, 7
      %v312 = vrot.slane %v266, 7
      %v313 = vrot.slane %v268, 7
      %v314 = vrot.slane %v270, 7
      %v315 = vrot.slane %v272, 7
      %v316 = vrot.slane %v274, 7
      %v317 = vrot.slane %v276, 7
      %v318 = vrot.slane %v278, 7
      %v319 = vrot.slane %v280, 7
      %v320 = vrot.slane %v282, 7
      %v321 = vrot.slane %v284, 7
      %v322 = vrot.slane %v286, 7
      %v323 = vrot.slane %v288, 7
      %v324 = vrot.slane %v290, 7
      %v325 = vrot.slane %v292, 7
      %v326 = vrot.slane %v294, 7
      %v327 = vlaneseq
      %v328 = vshrl.u32 %v327, 7
      %vm329 = vcmp.lt.s32.totalorder %v328, 1
      %v330 = vsel %vm329, %v295, %v311
      %v331 = vsel %vm329, %v296, %v312
      %v332 = vsel %vm329, %v297, %v313
      %v333 = vsel %vm329, %v298, %v314
      %v334 = vsel %vm329, %v299, %v315
      %v335 = vsel %vm329, %v300, %v316
      %v336 = vsel %vm329, %v301, %v317
      %v337 = vsel %vm329, %v302, %v318
      %v338 = vsel %vm329, %v303, %v319
      %v339 = vsel %vm329, %v304, %v320
      %v340 = vsel %vm329, %v305, %v321
      %v341 = vsel %vm329, %v306, %v322
      %v342 = vsel %vm329, %v307, %v323
      %v343 = vsel %vm329, %v308, %v324
      %v344 = vsel %vm329, %v309, %v325
      %v345 = vsel %vm329, %v310, %v326
      %v346 = vsel %vm329, %v311, %v295
      %v347 = vsel %vm329, %v312, %v296
      %v348 = vsel %vm329, %v313, %v297
      %v349 = vsel %vm329, %v314, %v298
      %v350 = vsel %vm329, %v315, %v299
      %v351 = vsel %vm329, %v316, %v300
      %v352 = vsel %vm329, %v317, %v301
      %v353 = vsel %vm329, %v318, %v302
      %v354 = vsel %vm329, %v319, %v303
      %v355 = vsel %vm329, %v320, %v304
      %v356 = vsel %vm329, %v321, %v305
      %v357 = vsel %vm329, %v322, %v306
      %v358 = vsel %vm329, %v323, %v307
      %v359 = vsel %vm329, %v324, %v308
      %v360 = vsel %vm329, %v325, %v309
      %v361 = vsel %vm329, %v326, %v310
      %v362 = vrot.slane %v263, 1
      %v363 = vrot.slane %v265, 1
      %v364 = vrot.slane %v267, 1
      %v365 = vrot.slane %v269, 1
      %v366 = vrot.slane %v271, 1
      %v367 = vrot.slane %v273, 1
      %v368 = vrot.slane %v275, 1
      %v369 = vrot.slane %v277, 1
      %v370 = vrot.slane %v279, 1
      %v371 = vrot.slane %v281, 1
      %v372 = vrot.slane %v283, 1
      %v373 = vrot.slane %v285, 1
      %v374 = vrot.slane %v287, 1
      %v375 = vrot.slane %v289, 1
      %v376 = vrot.slane %v291, 1
      %v377 = vrot.slane %v293, 1
      %v378 = vrot.slane %v264, 1
      %v379 = vrot.slane %v266, 1
      %v380 = vrot.slane %v268, 1
      %v381 = vrot.slane %v270, 1
      %v382 = vrot.slane %v272, 1
      %v383 = vrot.slane %v274, 1
      %v384 = vrot.slane %v276, 1
      %v385 = vrot.slane %v278, 1
      %v386 = vrot.slane %v280, 1
      %v387 = vrot.slane %v282, 1
      %v388 = vrot.slane %v284, 1
      %v389 = vrot.slane %v286, 1
      %v390 = vrot.slane %v288, 1
      %v391 = vrot.slane %v290, 1
      %v392 = vrot.slane %v292, 1
      %v393 = vrot.slane %v294, 1
      %vm394 = vcmp.lt.s32.totalorder %v328, 7
      %v395 = vsel %vm394, %v362, %v378
      %v396 = vsel %vm394, %v363, %v379
      %v397 = vsel %vm394, %v364, %v380
      %v398 = vsel %vm394, %v365, %v381
      %v399 = vsel %vm394, %v366, %v382
      %v400 = vsel %vm394, %v367, %v383
      %v401 = vsel %vm394, %v368, %v384
      %v402 = vsel %vm394, %v369, %v385
      %v403 = vsel %vm394, %v370, %v386
      %v404 = vsel %vm394, %v371, %v387
      %v405 = vsel %vm394, %v372, %v388
      %v406 = vsel %vm394, %v373, %v389
      %v407 = vsel %vm394, %v374, %v390
      %v408 = vsel %vm394, %v375, %v391
      %v409 = vsel %vm394, %v376, %v392
      %v410 = vsel %vm394, %v377, %v393
      %v411 = vsel %vm394, %v378, %v362
      %v412 = vsel %vm394, %v379, %v363
      %v413 = vsel %vm394, %v380, %v364
      %v414 = vsel %vm394, %v381, %v365
      %v415 = vsel %vm394, %v382, %v366
      %v416 = vsel %vm394, %v383, %v367
      %v417 = vsel %vm394, %v384, %v368
      %v418 = vsel %vm394, %v385, %v369
      %v419 = vsel %vm394, %v386, %v370
      %v420 = vsel %vm394, %v387, %v371
      %v421 = vsel %vm394, %v388, %v372
      %v422 = vsel %vm394, %v389, %v373
      %v423 = vsel %vm394, %v390, %v374
      %v424 = vsel %vm394, %v391, %v375
      %v425 = vsel %vm394, %v392, %v376
      %v426 = vsel %vm394, %v393, %v377
      %s427 = scalar_lea.vmem %s1, 16
      %v428 = vld [vmem:[%s427] sm:$0xff]
      %v429 = vld [vmem:[%s427 + $0x8] sm:$0xf]
      %462 = vrot.lane.b32.xlu0 %v263, 4
      %v463 = vpop.permute.xlu0 %462
      %464 = vrot.lane.b32.xlu0 %v264, 4
      %v465 = vpop.permute.xlu0 %464
      %466 = vrot.lane.b32.xlu0 %v265, 4
      %v467 = vpop.permute.xlu0 %466
      %468 = vrot.lane.b32.xlu0 %v266, 4
      %v469 = vpop.permute.xlu0 %468
      %470 = vrot.lane.b32.xlu0 %v267, 4
      %v471 = vpop.permute.xlu0 %470
      %472 = vrot.lane.b32.xlu0 %v268, 4
      %v473 = vpop.permute.xlu0 %472
      %474 = vrot.lane.b32.xlu0 %v269, 4
      %v475 = vpop.permute.xlu0 %474
      %476 = vrot.lane.b32.xlu0 %v270, 4
      %v477 = vpop.permute.xlu0 %476
      %478 = vrot.lane.b32.xlu0 %v271, 4
      %v479 = vpop.permute.xlu0 %478
      %480 = vrot.lane.b32.xlu0 %v272, 4
      %v481 = vpop.permute.xlu0 %480
      %482 = vrot.lane.b32.xlu0 %v273, 4
      %v483 = vpop.permute.xlu0 %482
      %484 = vrot.lane.b32.xlu0 %v274, 4
      %v485 = vpop.permute.xlu0 %484
      %486 = vrot.lane.b32.xlu0 %v275, 4
      %v487 = vpop.permute.xlu0 %486
      %488 = vrot.lane.b32.xlu0 %v276, 4
      %v489 = vpop.permute.xlu0 %488
      %490 = vrot.lane.b32.xlu0 %v277, 4
      %v491 = vpop.permute.xlu0 %490
      %492 = vrot.lane.b32.xlu0 %v278, 4
      %v493 = vpop.permute.xlu0 %492
      %494 = vrot.lane.b32.xlu0 %v279, 4
      %v495 = vpop.permute.xlu0 %494
      %496 = vrot.lane.b32.xlu0 %v280, 4
      %v497 = vpop.permute.xlu0 %496
      %498 = vrot.lane.b32.xlu0 %v281, 4
      %v499 = vpop.permute.xlu0 %498
      %500 = vrot.lane.b32.xlu0 %v282, 4
      %v501 = vpop.permute.xlu0 %500
      %502 = vrot.lane.b32.xlu0 %v283, 4
      %v503 = vpop.permute.xlu0 %502
      %504 = vrot.lane.b32.xlu0 %v284, 4
      %v505 = vpop.permute.xlu0 %504
      %506 = vrot.lane.b32.xlu0 %v285, 4
      %v507 = vpop.permute.xlu0 %506
      %508 = vrot.lane.b32.xlu0 %v286, 4
      %v509 = vpop.permute.xlu0 %508
      %510 = vrot.lane.b32.xlu0 %v287, 4
      %v511 = vpop.permute.xlu0 %510
      %512 = vrot.lane.b32.xlu0 %v288, 4
      %v513 = vpop.permute.xlu0 %512
      %514 = vrot.lane.b32.xlu0 %v289, 4
      %v515 = vpop.permute.xlu0 %514
      %516 = vrot.lane.b32.xlu0 %v290, 4
      %v517 = vpop.permute.xlu0 %516
      %518 = vrot.lane.b32.xlu0 %v291, 4
      %v519 = vpop.permute.xlu0 %518
      %520 = vrot.lane.b32.xlu0 %v292, 4
      %v521 = vpop.permute.xlu0 %520
      %522 = vrot.lane.b32.xlu0 %v293, 4
      %v523 = vpop.permute.xlu0 %522
      %524 = vrot.lane.b32.xlu0 %v294, 4
      %v525 = vpop.permute.xlu0 %524
      %590 = vrot.lane.b32.xlu0 %v395, 8
      %v591 = vpop.permute.xlu0 %590
      %592 = vrot.lane.b32.xlu0 %v411, 8
      %v593 = vpop.permute.xlu0 %592
      %594 = vrot.lane.b32.xlu0 %v396, 8
      %v595 = vpop.permute.xlu0 %594
      %596 = vrot.lane.b32.xlu0 %v412, 8
      %v597 = vpop.permute.xlu0 %596
      %598 = vrot.lane.b32.xlu0 %v397, 8
      %v599 = vpop.permute.xlu0 %598
      %600 = vrot.lane.b32.xlu0 %v413, 8
      %v601 = vpop.permute.xlu0 %600
      %602 = vrot.lane.b32.xlu0 %v398, 8
      %v603 = vpop.permute.xlu0 %602
      %604 = vrot.lane.b32.xlu0 %v414, 8
      %v605 = vpop.permute.xlu0 %604
      %606 = vrot.lane.b32.xlu0 %v399, 8
      %v607 = vpop.permute.xlu0 %606
      %608 = vrot.lane.b32.xlu0 %v415, 8
      %v609 = vpop.permute.xlu0 %608
      %610 = vrot.lane.b32.xlu0 %v400, 8
      %v611 = vpop.permute.xlu0 %610
      %612 = vrot.lane.b32.xlu0 %v416, 8
      %v613 = vpop.permute.xlu0 %612
      %614 = vrot.lane.b32.xlu0 %v401, 8
      %v615 = vpop.permute.xlu0 %614
      %616 = vrot.lane.b32.xlu0 %v417, 8
      %v617 = vpop.permute.xlu0 %616
      %618 = vrot.lane.b32.xlu0 %v402, 8
      %v619 = vpop.permute.xlu0 %618
      %620 = vrot.lane.b32.xlu0 %v418, 8
      %v621 = vpop.permute.xlu0 %620
      %622 = vrot.lane.b32.xlu0 %v403, 8
      %v623 = vpop.permute.xlu0 %622
      %624 = vrot.lane.b32.xlu0 %v419, 8
      %v625 = vpop.permute.xlu0 %624
      %626 = vrot.lane.b32.xlu0 %v404, 8
      %v627 = vpop.permute.xlu0 %626
      %628 = vrot.lane.b32.xlu0 %v420, 8
      %v629 = vpop.permute.xlu0 %628
      %630 = vrot.lane.b32.xlu0 %v405, 8
      %v631 = vpop.permute.xlu0 %630
      %632 = vrot.lane.b32.xlu0 %v421, 8
      %v633 = vpop.permute.xlu0 %632
      %634 = vrot.lane.b32.xlu0 %v406, 8
      %v635 = vpop.permute.xlu0 %634
      %636 = vrot.lane.b32.xlu0 %v422, 8
      %v637 = vpop.permute.xlu0 %636
      %638 = vrot.lane.b32.xlu0 %v407, 8
      %v639 = vpop.permute.xlu0 %638
      %640 = vrot.lane.b32.xlu0 %v423, 8
      %v641 = vpop.permute.xlu0 %640
      %642 = vrot.lane.b32.xlu0 %v408, 8
      %v643 = vpop.permute.xlu0 %642
      %644 = vrot.lane.b32.xlu0 %v424, 8
      %v645 = vpop.permute.xlu0 %644
      %646 = vrot.lane.b32.xlu0 %v409, 8
      %v647 = vpop.permute.xlu0 %646
      %648 = vrot.lane.b32.xlu0 %v425, 8
      %v649 = vpop.permute.xlu0 %648
      %650 = vrot.lane.b32.xlu0 %v410, 8
      %v651 = vpop.permute.xlu0 %650
      %652 = vrot.lane.b32.xlu0 %v426, 8
      %v653 = vpop.permute.xlu0 %652
      %vm686 = vcmask 31744
      %v687 = vsel %vm686, %v346, %v463
      %v688 = vsel %vm686, %v330, %v465
      %v689 = vsel %vm686, %v347, %v467
      %v690 = vsel %vm686, %v331, %v469
      %v691 = vsel %vm686, %v348, %v471
      %v692 = vsel %vm686, %v332, %v473
      %v693 = vsel %vm686, %v349, %v475
      %v694 = vsel %vm686, %v333, %v477
      %v695 = vsel %vm686, %v350, %v479
      %v696 = vsel %vm686, %v334, %v481
      %v697 = vsel %vm686, %v351, %v483
      %v698 = vsel %vm686, %v335, %v485
      %v699 = vsel %vm686, %v352, %v487
      %v700 = vsel %vm686, %v336, %v489
      %v701 = vsel %vm686, %v353, %v491
      %v702 = vsel %vm686, %v337, %v493
      %v703 = vsel %vm686, %v354, %v495
      %v704 = vsel %vm686, %v338, %v497
      %v705 = vsel %vm686, %v355, %v499
      %v706 = vsel %vm686, %v339, %v501
      %v707 = vsel %vm686, %v356, %v503
      %v708 = vsel %vm686, %v340, %v505
      %v709 = vsel %vm686, %v357, %v507
      %v710 = vsel %vm686, %v341, %v509
      %v711 = vsel %vm686, %v358, %v511
      %v712 = vsel %vm686, %v342, %v513
      %v713 = vsel %vm686, %v359, %v515
      %v714 = vsel %vm686, %v343, %v517
      %v715 = vsel %vm686, %v360, %v519
      %v716 = vsel %vm686, %v344, %v521
      %v717 = vsel %vm686, %v361, %v523
      %v718 = vsel %vm686, %v345, %v525
      %vm719 = vcmask 64512
      %v720 = vsel %vm719, %v687, %v591
      %v721 = vsel %vm719, %v688, %v593
      %v722 = vsel %vm719, %v689, %v595
      %v723 = vsel %vm719, %v690, %v597
      %v724 = vsel %vm719, %v691, %v599
      %v725 = vsel %vm719, %v692, %v601
      %v726 = vsel %vm719, %v693, %v603
      %v727 = vsel %vm719, %v694, %v605
      %v728 = vsel %vm719, %v695, %v607
      %v729 = vsel %vm719, %v696, %v609
      %v730 = vsel %vm719, %v697, %v611
      %v731 = vsel %vm719, %v698, %v613
      %v732 = vsel %vm719, %v699, %v615
      %v733 = vsel %vm719, %v700, %v617
      %v734 = vsel %vm719, %v701, %v619
      %v735 = vsel %vm719, %v702, %v621
      %v736 = vsel %vm719, %v703, %v623
      %v737 = vsel %vm719, %v704, %v625
      %v738 = vsel %vm719, %v705, %v627
      %v739 = vsel %vm719, %v706, %v629
      %v740 = vsel %vm719, %v707, %v631
      %v741 = vsel %vm719, %v708, %v633
      %v742 = vsel %vm719, %v709, %v635
      %v743 = vsel %vm719, %v710, %v637
      %v744 = vsel %vm719, %v711, %v639
      %v745 = vsel %vm719, %v712, %v641
      %v746 = vsel %vm719, %v713, %v643
      %v747 = vsel %vm719, %v714, %v645
      %v748 = vsel %vm719, %v715, %v647
      %v749 = vsel %vm719, %v716, %v649
      %v750 = vsel %vm719, %v717, %v651
      %v751 = vsel %vm719, %v718, %v653
      %vm752 = vcmask 97280
      %v754 = vsel %vm752, %v720, 0
      %v757 = vsel %vm752, %v721, 0
      %v760 = vsel %vm752, %v722, 0
      %v763 = vsel %vm752, %v723, 0
      %v766 = vsel %vm752, %v724, 0
      %v769 = vsel %vm752, %v725, 0
      %v772 = vsel %vm752, %v726, 0
      %v775 = vsel %vm752, %v727, 0
      %v778 = vsel %vm752, %v728, 0
      %v781 = vsel %vm752, %v729, 0
      %v784 = vsel %vm752, %v730, 0
      %v787 = vsel %vm752, %v731, 0
      %v790 = vsel %vm752, %v732, 0
      %v793 = vsel %vm752, %v733, 0
      %v796 = vsel %vm752, %v734, 0
      %v799 = vsel %vm752, %v735, 0
      %v802 = vsel %vm752, %v736, 0
      %v805 = vsel %vm752, %v737, 0
      %v808 = vsel %vm752, %v738, 0
      %v811 = vsel %vm752, %v739, 0
      %v814 = vsel %vm752, %v740, 0
      %v817 = vsel %vm752, %v741, 0
      %v820 = vsel %vm752, %v742, 0
      %v823 = vsel %vm752, %v743, 0
      %v826 = vsel %vm752, %v744, 0
      %v829 = vsel %vm752, %v745, 0
      %v832 = vsel %vm752, %v746, 0
      %v835 = vsel %vm752, %v747, 0
      %v838 = vsel %vm752, %v748, 0
      %v841 = vsel %vm752, %v749, 0
      %v844 = vsel %vm752, %v750, 0
      %v847 = vsel %vm752, %v751, 0
      %vm849 = vcmask 1043456
      %v851 = vsel %vm849, %v429, 0
      %853 = vmatpush.msra.mxu0 0.0
      %854 = vmatpush.msra.mxu0 0.0
      %855 = vmatpush.msra.mxu0 0.0
      %856 = vmatpush.msra.mxu0 0.0
      %857 = vmatpush.msra.mxu0 0.0
      %858 = vmatpush.msra.mxu0 0.0
      %859 = vmatpush.msra.mxu0 0.0
      %860 = vmatpush.msra.mxu0 0.0
      %861 = vmatpush.msra.mxu0 0.0
      %862 = vmatpush.msra.mxu0 0.0
      %863 = vmatpush.msra.mxu0 0.0
      %864 = vmatpush.msra.mxu0 0.0
      %865 = vmatpush.msra.mxu0 0.0
      %866 = vmatpush.msra.mxu0 0.0
      %867 = vmatpush.msra.mxu0 %v851
      %868 = vmatpush.msra.mxu0 %v428
      %869 = vmatmul.f32.gmra.mxu0 %v754
      %v870 = vpop.f32.mrf.mxu0
      %v871 = vadd.f32 0.0, %v870
      %872 = vmatmul.f32.gmra.mxu0 %v757
      %v873 = vpop.f32.mrf.mxu0
      %v874 = vadd.f32 0.0, %v873
      %875 = vmatmul.f32.gmra.mxu0 %v760
      %v876 = vpop.f32.mrf.mxu0
      %v877 = vadd.f32 0.0, %v876
      %878 = vmatmul.f32.gmra.mxu0 %v763
      %v879 = vpop.f32.mrf.mxu0
      %v880 = vadd.f32 0.0, %v879
      %881 = vmatmul.f32.gmra.mxu0 %v766
      %v882 = vpop.f32.mrf.mxu0
      %v883 = vadd.f32 0.0, %v882
      %884 = vmatmul.f32.gmra.mxu0 %v769
      %v885 = vpop.f32.mrf.mxu0
      %v886 = vadd.f32 0.0, %v885
      %887 = vmatmul.f32.gmra.mxu0 %v772
      %v888 = vpop.f32.mrf.mxu0
      %v889 = vadd.f32 0.0, %v888
      %890 = vmatmul.f32.gmra.mxu0 %v775
      %v891 = vpop.f32.mrf.mxu0
      %v892 = vadd.f32 0.0, %v891
      %893 = vmatmul.f32.gmra.mxu0 %v778
      %v894 = vpop.f32.mrf.mxu0
      %v895 = vadd.f32 0.0, %v894
      %896 = vmatmul.f32.gmra.mxu0 %v781
      %v897 = vpop.f32.mrf.mxu0
      %v898 = vadd.f32 0.0, %v897
      %899 = vmatmul.f32.gmra.mxu0 %v784
      %v900 = vpop.f32.mrf.mxu0
      %v901 = vadd.f32 0.0, %v900
      %902 = vmatmul.f32.gmra.mxu0 %v787
      %v903 = vpop.f32.mrf.mxu0
      %v904 = vadd.f32 0.0, %v903
      %905 = vmatmul.f32.gmra.mxu0 %v790
      %v906 = vpop.f32.mrf.mxu0
      %v907 = vadd.f32 0.0, %v906
      %908 = vmatmul.f32.gmra.mxu0 %v793
      %v909 = vpop.f32.mrf.mxu0
      %v910 = vadd.f32 0.0, %v909
      %911 = vmatmul.f32.gmra.mxu0 %v796
      %v912 = vpop.f32.mrf.mxu0
      %v913 = vadd.f32 0.0, %v912
      %914 = vmatmul.f32.gmra.mxu0 %v799
      %v915 = vpop.f32.mrf.mxu0
      %v916 = vadd.f32 0.0, %v915
      %917 = vmatmul.f32.gmra.mxu0 %v802
      %v918 = vpop.f32.mrf.mxu0
      %v919 = vadd.f32 0.0, %v918
      %920 = vmatmul.f32.gmra.mxu0 %v805
      %v921 = vpop.f32.mrf.mxu0
      %v922 = vadd.f32 0.0, %v921
      %923 = vmatmul.f32.gmra.mxu0 %v808
      %v924 = vpop.f32.mrf.mxu0
      %v925 = vadd.f32 0.0, %v924
      %926 = vmatmul.f32.gmra.mxu0 %v811
      %v927 = vpop.f32.mrf.mxu0
      %v928 = vadd.f32 0.0, %v927
      %929 = vmatmul.f32.gmra.mxu0 %v814
      %v930 = vpop.f32.mrf.mxu0
      %v931 = vadd.f32 0.0, %v930
      %932 = vmatmul.f32.gmra.mxu0 %v817
      %v933 = vpop.f32.mrf.mxu0
      %v934 = vadd.f32 0.0, %v933
      %935 = vmatmul.f32.gmra.mxu0 %v820
      %v936 = vpop.f32.mrf.mxu0
      %v937 = vadd.f32 0.0, %v936
      %938 = vmatmul.f32.gmra.mxu0 %v823
      %v939 = vpop.f32.mrf.mxu0
      %v940 = vadd.f32 0.0, %v939
      %941 = vmatmul.f32.gmra.mxu0 %v826
      %v942 = vpop.f32.mrf.mxu0
      %v943 = vadd.f32 0.0, %v942
      %944 = vmatmul.f32.gmra.mxu0 %v829
      %v945 = vpop.f32.mrf.mxu0
      %v946 = vadd.f32 0.0, %v945
      %947 = vmatmul.f32.gmra.mxu0 %v832
      %v948 = vpop.f32.mrf.mxu0
      %v949 = vadd.f32 0.0, %v948
      %950 = vmatmul.f32.gmra.mxu0 %v835
      %v951 = vpop.f32.mrf.mxu0
      %v952 = vadd.f32 0.0, %v951
      %953 = vmatmul.f32.gmra.mxu0 %v838
      %v954 = vpop.f32.mrf.mxu0
      %v955 = vadd.f32 0.0, %v954
      %956 = vmatmul.f32.gmra.mxu0 %v841
      %v957 = vpop.f32.mrf.mxu0
      %v958 = vadd.f32 0.0, %v957
      %959 = vmatmul.f32.gmra.mxu0 %v844
      %v960 = vpop.f32.mrf.mxu0
      %v961 = vadd.f32 0.0, %v960
      %962 = vmatmul.f32.gmra.mxu0 %v847
      %v963 = vpop.f32.mrf.mxu0
      %v964 = vadd.f32 0.0, %v963
      %965 = vdwg.mxu0
      %966 = vst.msk [vmem:[#allocation2] sm:$0xff] %vm719, %v871
      %967 = vst.msk [vmem:[#allocation2 + $0x8] sm:$0xff] %vm719, %v874
      %968 = vst.msk [vmem:[#allocation2 + $0x10] sm:$0xff] %vm719, %v877
      %969 = vst.msk [vmem:[#allocation2 + $0x18] sm:$0xff] %vm719, %v880
      %970 = vst.msk [vmem:[#allocation2 + $0x20] sm:$0xff] %vm719, %v883
      %971 = vst.msk [vmem:[#allocation2 + $0x28] sm:$0xff] %vm719, %v886
      %972 = vst.msk [vmem:[#allocation2 + $0x30] sm:$0xff] %vm719, %v889
      %973 = vst.msk [vmem:[#allocation2 + $0x38] sm:$0xff] %vm719, %v892
      %974 = vst.msk [vmem:[#allocation2 + $0x40] sm:$0xff] %vm719, %v895
      %975 = vst.msk [vmem:[#allocation2 + $0x48] sm:$0xff] %vm719, %v898
      %976 = vst.msk [vmem:[#allocation2 + $0x50] sm:$0xff] %vm719, %v901
      %977 = vst.msk [vmem:[#allocation2 + $0x58] sm:$0xff] %vm719, %v904
      %978 = vst.msk [vmem:[#allocation2 + $0x60] sm:$0xff] %vm719, %v907
      %979 = vst.msk [vmem:[#allocation2 + $0x68] sm:$0xff] %vm719, %v910
      %980 = vst.msk [vmem:[#allocation2 + $0x70] sm:$0xff] %vm719, %v913
      %981 = vst.msk [vmem:[#allocation2 + $0x78] sm:$0xff] %vm719, %v916
      %982 = vst.msk [vmem:[#allocation2 + $0x80] sm:$0xff] %vm719, %v919
      %983 = vst.msk [vmem:[#allocation2 + $0x88] sm:$0xff] %vm719, %v922
      %984 = vst.msk [vmem:[#allocation2 + $0x90] sm:$0xff] %vm719, %v925
      %985 = vst.msk [vmem:[#allocation2 + $0x98] sm:$0xff] %vm719, %v928
      %986 = vst.msk [vmem:[#allocation2 + $0xa0] sm:$0xff] %vm719, %v931
      %987 = vst.msk [vmem:[#allocation2 + $0xa8] sm:$0xff] %vm719, %v934
      %988 = vst.msk [vmem:[#allocation2 + $0xb0] sm:$0xff] %vm719, %v937
      %989 = vst.msk [vmem:[#allocation2 + $0xb8] sm:$0xff] %vm719, %v940
      %990 = vst.msk [vmem:[#allocation2 + $0xc0] sm:$0xff] %vm719, %v943
      %991 = vst.msk [vmem:[#allocation2 + $0xc8] sm:$0xff] %vm719, %v946
      %992 = vst.msk [vmem:[#allocation2 + $0xd0] sm:$0xff] %vm719, %v949
      %993 = vst.msk [vmem:[#allocation2 + $0xd8] sm:$0xff] %vm719, %v952
      %994 = vst.msk [vmem:[#allocation2 + $0xe0] sm:$0xff] %vm719, %v955
      %995 = vst.msk [vmem:[#allocation2 + $0xe8] sm:$0xff] %vm719, %v958
      %996 = vst.msk [vmem:[#allocation2 + $0xf0] sm:$0xff] %vm719, %v961
      %997 = vst.msk [vmem:[#allocation2 + $0xf8] sm:$0xff] %vm719, %v964
      %v998 = vrot.slane %v264, 7
      %v999 = vrot.slane %v266, 6
      %vm1000 = vcmask 1041409
      %v1001 = vsel %vm1000, %v999, %v998
      %v1002 = vrot.slane %v268, 5
      %vm1003 = vcmask 1042434
      %v1004 = vsel %vm1003, %v1002, %v1001
      %v1005 = vrot.slane %v270, 4
      %vm1006 = vcmask 1043459
      %v1007 = vsel %vm1006, %v1005, %v1004
      %v1008 = vrot.slane %v272, 3
      %vm1009 = vcmask 1044484
      %v1010 = vsel %vm1009, %v1008, %v1007
      %v1011 = vrot.slane %v274, 2
      %vm1012 = vcmask 1045509
      %v1013 = vsel %vm1012, %v1011, %v1010
      %v1014 = vrot.slane %v276, 1
      %vm1015 = vcmask 1046534
      %v1016 = vsel %vm1015, %v1014, %v1013
      %vm1017 = vcmask 1047559
      %v1018 = vsel %vm1017, %v278, %v1016
      %v1019 = vrot.slane %v280, 7
      %v1020 = vrot.slane %v282, 6
      %v1021 = vsel %vm1000, %v1020, %v1019
      %v1022 = vrot.slane %v284, 5
      %v1023 = vsel %vm1003, %v1022, %v1021
      %v1024 = vrot.slane %v286, 4
      %v1025 = vsel %vm1006, %v1024, %v1023
      %v1026 = vrot.slane %v288, 3
      %v1027 = vsel %vm1009, %v1026, %v1025
      %v1028 = vrot.slane %v290, 2
      %v1029 = vsel %vm1012, %v1028, %v1027
      %v1030 = vrot.slane %v292, 1
      %v1031 = vsel %vm1015, %v1030, %v1029
      %v1032 = vsel %vm1017, %v294, %v1031
      %v1033 = vsel %vm686, %v1018, 0
      %v1035 = vsel %vm686, %v1032, 0
      %v1038 = vsel %vm849, %v428, 0
      %1040 = vmatpush.msra.mxu0 0.0
      %1041 = vmatpush.msra.mxu0 0.0
      %1042 = vmatpush.msra.mxu0 0.0
      %1043 = vmatpush.msra.mxu0 0.0
      %1044 = vmatpush.msra.mxu0 0.0
      %1045 = vmatpush.msra.mxu0 0.0
      %1046 = vmatpush.msra.mxu0 0.0
      %1047 = vmatpush.msra.mxu0 0.0
      %1048 = vmatpush.msra.mxu0 0.0
      %1049 = vmatpush.msra.mxu0 0.0
      %1050 = vmatpush.msra.mxu0 0.0
      %1051 = vmatpush.msra.mxu0 0.0
      %1052 = vmatpush.msra.mxu0 0.0
      %1053 = vmatpush.msra.mxu0 0.0
      %1054 = vmatpush.msra.mxu0 0.0
      %1055 = vmatpush.msra.mxu0 %v1038
      %1056 = vmatmul.f32.gmra.mxu0 %v1033
      %v1057 = vpop.f32.mrf.mxu0
      %v1058 = vadd.f32 0.0, %v1057
      %1059 = vmatmul.f32.gmra.mxu0 %v1035
      %v1060 = vpop.f32.mrf.mxu0
      %v1061 = vadd.f32 0.0, %v1060
      %1062 = vdwg.mxu0
      %v1063 = vrot.slane %v265, 7
      %v1064 = vsel %vm1000, %v1063, %v263
      %v1065 = vrot.slane %v267, 6
      %v1066 = vsel %vm1003, %v1065, %v1064
      %v1067 = vrot.slane %v269, 5
      %v1068 = vsel %vm1006, %v1067, %v1066
      %v1069 = vrot.slane %v271, 4
      %v1070 = vsel %vm1009, %v1069, %v1068
      %v1071 = vrot.slane %v273, 3
      %v1072 = vsel %vm1012, %v1071, %v1070
      %v1073 = vrot.slane %v275, 2
      %v1074 = vsel %vm1015, %v1073, %v1072
      %v1075 = vrot.slane %v277, 1
      %v1076 = vsel %vm1017, %v1075, %v1074
      %v1077 = vrot.slane %v281, 7
      %v1078 = vsel %vm1000, %v1077, %v279
      %v1079 = vrot.slane %v283, 6
      %v1080 = vsel %vm1003, %v1079, %v1078
      %v1081 = vrot.slane %v285, 5
      %v1082 = vsel %vm1006, %v1081, %v1080
      %v1083 = vrot.slane %v287, 4
      %v1084 = vsel %vm1009, %v1083, %v1082
      %v1085 = vrot.slane %v289, 3
      %v1086 = vsel %vm1012, %v1085, %v1084
      %v1087 = vrot.slane %v291, 2
      %v1088 = vsel %vm1015, %v1087, %v1086
      %v1089 = vrot.slane %v293, 1
      %v1090 = vsel %vm1017, %v1089, %v1088
      %v1091 = vsel %vm686, %v1076, 0
      %v1093 = vsel %vm686, %v1090, 0
      %1095 = vmatpush.msra.mxu0 0.0
      %1096 = vmatpush.msra.mxu0 0.0
      %1097 = vmatpush.msra.mxu0 0.0
      %1098 = vmatpush.msra.mxu0 0.0
      %1099 = vmatpush.msra.mxu0 0.0
      %1100 = vmatpush.msra.mxu0 0.0
      %1101 = vmatpush.msra.mxu0 0.0
      %1102 = vmatpush.msra.mxu0 0.0
      %1103 = vmatpush.msra.mxu0 0.0
      %1104 = vmatpush.msra.mxu0 0.0
      %1105 = vmatpush.msra.mxu0 0.0
      %1106 = vmatpush.msra.mxu0 0.0
      %1107 = vmatpush.msra.mxu0 0.0
      %1108 = vmatpush.msra.mxu0 0.0
      %1109 = vmatpush.msra.mxu0 0.0
      %1110 = vmatpush.msra.mxu0 %v851
      %1111 = vmatmul.f32.gmra.mxu0 %v1091
      %v1112 = vpop.f32.mrf.mxu0
      %v1113 = vadd.f32 0.0, %v1112
      %1114 = vmatmul.f32.gmra.mxu0 %v1093
      %v1115 = vpop.f32.mrf.mxu0
      %v1116 = vadd.f32 0.0, %v1115
      %1117 = vdwg.mxu0
      %v1118 = vld [vmem:[#allocation2] sm:$0x1]
      %v1119 = vld [vmem:[#allocation2 + $0x10] sm:$0x1]
      %v1120 = vld [vmem:[#allocation2 + $0x20] sm:$0x1]
      %v1121 = vld [vmem:[#allocation2 + $0x30] sm:$0x1]
      %v1122 = vld [vmem:[#allocation2 + $0x40] sm:$0x1]
      %v1123 = vld [vmem:[#allocation2 + $0x50] sm:$0x1]
      %v1124 = vld [vmem:[#allocation2 + $0x60] sm:$0x1]
      %v1125 = vld [vmem:[#allocation2 + $0x70] sm:$0x1]
      %v1126 = vld [vmem:[#allocation2 + $0x80] sm:$0x1]
      %v1127 = vld [vmem:[#allocation2 + $0x90] sm:$0x1]
      %v1128 = vld [vmem:[#allocation2 + $0xa0] sm:$0x1]
      %v1129 = vld [vmem:[#allocation2 + $0xb0] sm:$0x1]
      %v1130 = vld [vmem:[#allocation2 + $0xc0] sm:$0x1]
      %v1131 = vld [vmem:[#allocation2 + $0xd0] sm:$0x1]
      %v1132 = vld [vmem:[#allocation2 + $0xe0] sm:$0x1]
      %v1133 = vld [vmem:[#allocation2 + $0xf0] sm:$0x1]
      %v1136 = vrot.slane %v1058, 1
      %v1137 = vrot.slane %v1058, 2
      %v1138 = vrot.slane %v1058, 3
      %v1139 = vrot.slane %v1058, 4
      %v1140 = vrot.slane %v1058, 5
      %v1141 = vrot.slane %v1058, 6
      %v1142 = vrot.slane %v1058, 7
      %v1143 = vrot.slane %v1061, 1
      %v1144 = vrot.slane %v1061, 2
      %v1145 = vrot.slane %v1061, 3
      %v1146 = vrot.slane %v1061, 4
      %v1147 = vrot.slane %v1061, 5
      %v1148 = vrot.slane %v1061, 6
      %v1149 = vrot.slane %v1061, 7
      %v1164 = vsub.f32 %v1118, %v1058
      %v1165 = vsub.f32 %v1119, %v1136
      %v1166 = vsub.f32 %v1120, %v1137
      %v1167 = vsub.f32 %v1121, %v1138
      %v1168 = vsub.f32 %v1122, %v1139
      %v1169 = vsub.f32 %v1123, %v1140
      %v1170 = vsub.f32 %v1124, %v1141
      %v1171 = vsub.f32 %v1125, %v1142
      %v1172 = vsub.f32 %v1126, %v1061
      %v1173 = vsub.f32 %v1127, %v1143
      %v1174 = vsub.f32 %v1128, %v1144
      %v1175 = vsub.f32 %v1129, %v1145
      %v1176 = vsub.f32 %v1130, %v1146
      %v1177 = vsub.f32 %v1131, %v1147
      %v1178 = vsub.f32 %v1132, %v1148
      %v1179 = vsub.f32 %v1133, %v1149
      %vm1180 = vcmask 57344
      %1181 = vst.msk [vmem:[#allocation2] sm:$0x1] %vm1180, %v1164
      %1182 = vst.msk [vmem:[#allocation2 + $0x10] sm:$0x1] %vm1180, %v1165
      %1183 = vst.msk [vmem:[#allocation2 + $0x20] sm:$0x1] %vm1180, %v1166
      %1184 = vst.msk [vmem:[#allocation2 + $0x30] sm:$0x1] %vm1180, %v1167
      %1185 = vst.msk [vmem:[#allocation2 + $0x40] sm:$0x1] %vm1180, %v1168
      %1186 = vst.msk [vmem:[#allocation2 + $0x50] sm:$0x1] %vm1180, %v1169
      %1187 = vst.msk [vmem:[#allocation2 + $0x60] sm:$0x1] %vm1180, %v1170
      %1188 = vst.msk [vmem:[#allocation2 + $0x70] sm:$0x1] %vm1180, %v1171
      %1189 = vst.msk [vmem:[#allocation2 + $0x80] sm:$0x1] %vm1180, %v1172
      %1190 = vst.msk [vmem:[#allocation2 + $0x90] sm:$0x1] %vm1180, %v1173
      %1191 = vst.msk [vmem:[#allocation2 + $0xa0] sm:$0x1] %vm1180, %v1174
      %1192 = vst.msk [vmem:[#allocation2 + $0xb0] sm:$0x1] %vm1180, %v1175
      %1193 = vst.msk [vmem:[#allocation2 + $0xc0] sm:$0x1] %vm1180, %v1176
      %1194 = vst.msk [vmem:[#allocation2 + $0xd0] sm:$0x1] %vm1180, %v1177
      %1195 = vst.msk [vmem:[#allocation2 + $0xe0] sm:$0x1] %vm1180, %v1178
      %1196 = vst.msk [vmem:[#allocation2 + $0xf0] sm:$0x1] %vm1180, %v1179
      %v1197 = vld [vmem:[#allocation2 + $0xf] sm:$0x1]
      %v1198 = vld [vmem:[#allocation2 + $0x1f] sm:$0x1]
      %v1199 = vld [vmem:[#allocation2 + $0x2f] sm:$0x1]
      %v1200 = vld [vmem:[#allocation2 + $0x3f] sm:$0x1]
      %v1201 = vld [vmem:[#allocation2 + $0x4f] sm:$0x1]
      %v1202 = vld [vmem:[#allocation2 + $0x5f] sm:$0x1]
      %v1203 = vld [vmem:[#allocation2 + $0x6f] sm:$0x1]
      %v1204 = vld [vmem:[#allocation2 + $0x7f] sm:$0x1]
      %v1205 = vld [vmem:[#allocation2 + $0x8f] sm:$0x1]
      %v1206 = vld [vmem:[#allocation2 + $0x9f] sm:$0x1]
      %v1207 = vld [vmem:[#allocation2 + $0xaf] sm:$0x1]
      %v1208 = vld [vmem:[#allocation2 + $0xbf] sm:$0x1]
      %v1209 = vld [vmem:[#allocation2 + $0xcf] sm:$0x1]
      %v1210 = vld [vmem:[#allocation2 + $0xdf] sm:$0x1]
      %v1211 = vld [vmem:[#allocation2 + $0xef] sm:$0x1]
      %v1212 = vld [vmem:[#allocation2 + $0xff] sm:$0x1]
      %v1215 = vrot.slane %v1113, 1
      %v1216 = vrot.slane %v1113, 2
      %v1217 = vrot.slane %v1113, 3
      %v1218 = vrot.slane %v1113, 4
      %v1219 = vrot.slane %v1113, 5
      %v1220 = vrot.slane %v1113, 6
      %v1221 = vrot.slane %v1113, 7
      %v1222 = vrot.slane %v1116, 1
      %v1223 = vrot.slane %v1116, 2
      %v1224 = vrot.slane %v1116, 3
      %v1225 = vrot.slane %v1116, 4
      %v1226 = vrot.slane %v1116, 5
      %v1227 = vrot.slane %v1116, 6
      %v1228 = vrot.slane %v1116, 7
      %v1243 = vsub.f32 %v1197, %v1113
      %v1244 = vsub.f32 %v1198, %v1215
      %v1245 = vsub.f32 %v1199, %v1216
      %v1246 = vsub.f32 %v1200, %v1217
      %v1247 = vsub.f32 %v1201, %v1218
      %v1248 = vsub.f32 %v1202, %v1219
      %v1249 = vsub.f32 %v1203, %v1220
      %v1250 = vsub.f32 %v1204, %v1221
      %v1251 = vsub.f32 %v1205, %v1116
      %v1252 = vsub.f32 %v1206, %v1222
      %v1253 = vsub.f32 %v1207, %v1223
      %v1254 = vsub.f32 %v1208, %v1224
      %v1255 = vsub.f32 %v1209, %v1225
      %v1256 = vsub.f32 %v1210, %v1226
      %v1257 = vsub.f32 %v1211, %v1227
      %v1258 = vsub.f32 %v1212, %v1228
      %1259 = vst.msk [vmem:[#allocation2 + $0xf] sm:$0x1] %vm1180, %v1243
      %1260 = vst.msk [vmem:[#allocation2 + $0x1f] sm:$0x1] %vm1180, %v1244
      %1261 = vst.msk [vmem:[#allocation2 + $0x2f] sm:$0x1] %vm1180, %v1245
      %1262 = vst.msk [vmem:[#allocation2 + $0x3f] sm:$0x1] %vm1180, %v1246
      %1263 = vst.msk [vmem:[#allocation2 + $0x4f] sm:$0x1] %vm1180, %v1247
      %1264 = vst.msk [vmem:[#allocation2 + $0x5f] sm:$0x1] %vm1180, %v1248
      %1265 = vst.msk [vmem:[#allocation2 + $0x6f] sm:$0x1] %vm1180, %v1249
      %1266 = vst.msk [vmem:[#allocation2 + $0x7f] sm:$0x1] %vm1180, %v1250
      %1267 = vst.msk [vmem:[#allocation2 + $0x8f] sm:$0x1] %vm1180, %v1251
      %1268 = vst.msk [vmem:[#allocation2 + $0x9f] sm:$0x1] %vm1180, %v1252
      %1269 = vst.msk [vmem:[#allocation2 + $0xaf] sm:$0x1] %vm1180, %v1253
      %1270 = vst.msk [vmem:[#allocation2 + $0xbf] sm:$0x1] %vm1180, %v1254
      %1271 = vst.msk [vmem:[#allocation2 + $0xcf] sm:$0x1] %vm1180, %v1255
      %1272 = vst.msk [vmem:[#allocation2 + $0xdf] sm:$0x1] %vm1180, %v1256
      %1273 = vst.msk [vmem:[#allocation2 + $0xef] sm:$0x1] %vm1180, %v1257
      %1274 = vst.msk [vmem:[#allocation2 + $0xff] sm:$0x1] %vm1180, %v1258
      %v1275 = vld [vmem:[%s1] sm:$0xff]
      %v1276 = vld [vmem:[%s1 + $0x8] sm:$0xf]
      %v1278 = vsel %vm849, %v1276, 0
      %1280 = vmatpush.msra.mxu0 0.0
      %1281 = vmatpush.msra.mxu0 0.0
      %1282 = vmatpush.msra.mxu0 0.0
      %1283 = vmatpush.msra.mxu0 0.0
      %1284 = vmatpush.msra.mxu0 0.0
      %1285 = vmatpush.msra.mxu0 0.0
      %1286 = vmatpush.msra.mxu0 0.0
      %1287 = vmatpush.msra.mxu0 0.0
      %1288 = vmatpush.msra.mxu0 0.0
      %1289 = vmatpush.msra.mxu0 0.0
      %1290 = vmatpush.msra.mxu0 0.0
      %1291 = vmatpush.msra.mxu0 0.0
      %1292 = vmatpush.msra.mxu0 0.0
      %1293 = vmatpush.msra.mxu0 0.0
      %1294 = vmatpush.msra.mxu0 %v1278
      %1295 = vmatpush.msra.mxu0 %v1275
      %1296 = vmatmul.f32.gmra.mxu0 %v754
      %v1297 = vpop.f32.mrf.mxu0
      %v1298 = vadd.f32 0.0, %v1297
      %1299 = vmatmul.f32.gmra.mxu0 %v757
      %v1300 = vpop.f32.mrf.mxu0
      %v1301 = vadd.f32 0.0, %v1300
      %1302 = vmatmul.f32.gmra.mxu0 %v760
      %v1303 = vpop.f32.mrf.mxu0
      %v1304 = vadd.f32 0.0, %v1303
      %1305 = vmatmul.f32.gmra.mxu0 %v763
      %v1306 = vpop.f32.mrf.mxu0
      %v1307 = vadd.f32 0.0, %v1306
      %1308 = vmatmul.f32.gmra.mxu0 %v766
      %v1309 = vpop.f32.mrf.mxu0
      %v1310 = vadd.f32 0.0, %v1309
      %1311 = vmatmul.f32.gmra.mxu0 %v769
      %v1312 = vpop.f32.mrf.mxu0
      %v1313 = vadd.f32 0.0, %v1312
      %1314 = vmatmul.f32.gmra.mxu0 %v772
      %v1315 = vpop.f32.mrf.mxu0
      %v1316 = vadd.f32 0.0, %v1315
      %1317 = vmatmul.f32.gmra.mxu0 %v775
      %v1318 = vpop.f32.mrf.mxu0
      %v1319 = vadd.f32 0.0, %v1318
      %1320 = vmatmul.f32.gmra.mxu0 %v778
      %v1321 = vpop.f32.mrf.mxu0
      %v1322 = vadd.f32 0.0, %v1321
      %1323 = vmatmul.f32.gmra.mxu0 %v781
      %v1324 = vpop.f32.mrf.mxu0
      %v1325 = vadd.f32 0.0, %v1324
      %1326 = vmatmul.f32.gmra.mxu0 %v784
      %v1327 = vpop.f32.mrf.mxu0
      %v1328 = vadd.f32 0.0, %v1327
      %1329 = vmatmul.f32.gmra.mxu0 %v787
      %v1330 = vpop.f32.mrf.mxu0
      %v1331 = vadd.f32 0.0, %v1330
      %1332 = vmatmul.f32.gmra.mxu0 %v790
      %v1333 = vpop.f32.mrf.mxu0
      %v1334 = vadd.f32 0.0, %v1333
      %1335 = vmatmul.f32.gmra.mxu0 %v793
      %v1336 = vpop.f32.mrf.mxu0
      %v1337 = vadd.f32 0.0, %v1336
      %1338 = vmatmul.f32.gmra.mxu0 %v796
      %v1339 = vpop.f32.mrf.mxu0
      %v1340 = vadd.f32 0.0, %v1339
      %1341 = vmatmul.f32.gmra.mxu0 %v799
      %v1342 = vpop.f32.mrf.mxu0
      %v1343 = vadd.f32 0.0, %v1342
      %1344 = vmatmul.f32.gmra.mxu0 %v802
      %v1345 = vpop.f32.mrf.mxu0
      %v1346 = vadd.f32 0.0, %v1345
      %1347 = vmatmul.f32.gmra.mxu0 %v805
      %v1348 = vpop.f32.mrf.mxu0
      %v1349 = vadd.f32 0.0, %v1348
      %1350 = vmatmul.f32.gmra.mxu0 %v808
      %v1351 = vpop.f32.mrf.mxu0
      %v1352 = vadd.f32 0.0, %v1351
      %1353 = vmatmul.f32.gmra.mxu0 %v811
      %v1354 = vpop.f32.mrf.mxu0
      %v1355 = vadd.f32 0.0, %v1354
      %1356 = vmatmul.f32.gmra.mxu0 %v814
      %v1357 = vpop.f32.mrf.mxu0
      %v1358 = vadd.f32 0.0, %v1357
      %1359 = vmatmul.f32.gmra.mxu0 %v817
      %v1360 = vpop.f32.mrf.mxu0
      %v1361 = vadd.f32 0.0, %v1360
      %1362 = vmatmul.f32.gmra.mxu0 %v820
      %v1363 = vpop.f32.mrf.mxu0
      %v1364 = vadd.f32 0.0, %v1363
      %1365 = vmatmul.f32.gmra.mxu0 %v823
      %v1366 = vpop.f32.mrf.mxu0
      %v1367 = vadd.f32 0.0, %v1366
      %1368 = vmatmul.f32.gmra.mxu0 %v826
      %v1369 = vpop.f32.mrf.mxu0
      %v1370 = vadd.f32 0.0, %v1369
      %1371 = vmatmul.f32.gmra.mxu0 %v829
      %v1372 = vpop.f32.mrf.mxu0
      %v1373 = vadd.f32 0.0, %v1372
      %1374 = vmatmul.f32.gmra.mxu0 %v832
      %v1375 = vpop.f32.mrf.mxu0
      %v1376 = vadd.f32 0.0, %v1375
      %1377 = vmatmul.f32.gmra.mxu0 %v835
      %v1378 = vpop.f32.mrf.mxu0
      %v1379 = vadd.f32 0.0, %v1378
      %1380 = vmatmul.f32.gmra.mxu0 %v838
      %v1381 = vpop.f32.mrf.mxu0
      %v1382 = vadd.f32 0.0, %v1381
      %1383 = vmatmul.f32.gmra.mxu0 %v841
      %v1384 = vpop.f32.mrf.mxu0
      %v1385 = vadd.f32 0.0, %v1384
      %1386 = vdwg.mxu0
      %s1387 = scalar_lea.vmem [#allocation2], 16
      %v1388 = vld [vmem:[%s1387] sm:$0xff]
      %v1389 = vld [vmem:[%s1387 + $0x8] sm:$0xff]
      %v1390 = vld [vmem:[%s1387 + $0x10] sm:$0xff]
      %v1391 = vld [vmem:[%s1387 + $0x18] sm:$0xff]
      %v1392 = vld [vmem:[%s1387 + $0x20] sm:$0xff]
      %v1393 = vld [vmem:[%s1387 + $0x28] sm:$0xff]
      %v1394 = vld [vmem:[%s1387 + $0x30] sm:$0xff]
      %v1395 = vld [vmem:[%s1387 + $0x38] sm:$0xff]
      %v1396 = vld [vmem:[%s1387 + $0x40] sm:$0xff]
      %v1397 = vld [vmem:[%s1387 + $0x48] sm:$0xff]
      %v1398 = vld [vmem:[%s1387 + $0x50] sm:$0xff]
      %v1399 = vld [vmem:[%s1387 + $0x58] sm:$0xff]
      %v1400 = vld [vmem:[%s1387 + $0x60] sm:$0xff]
      %v1401 = vld [vmem:[%s1387 + $0x68] sm:$0xff]
      %v1402 = vld [vmem:[%s1387 + $0x70] sm:$0xff]
      %v1403 = vld [vmem:[%s1387 + $0x78] sm:$0xff]
      %v1404 = vld [vmem:[%s1387 + $0x80] sm:$0xff]
      %v1405 = vld [vmem:[%s1387 + $0x88] sm:$0xff]
      %v1406 = vld [vmem:[%s1387 + $0x90] sm:$0xff]
      %v1407 = vld [vmem:[%s1387 + $0x98] sm:$0xff]
      %v1408 = vld [vmem:[%s1387 + $0xa0] sm:$0xff]
      %v1409 = vld [vmem:[%s1387 + $0xa8] sm:$0xff]
      %v1410 = vld [vmem:[%s1387 + $0xb0] sm:$0xff]
      %v1411 = vld [vmem:[%s1387 + $0xb8] sm:$0xff]
      %v1412 = vld [vmem:[%s1387 + $0xc0] sm:$0xff]
      %v1413 = vld [vmem:[%s1387 + $0xc8] sm:$0xff]
      %v1414 = vld [vmem:[%s1387 + $0xd0] sm:$0xff]
      %v1415 = vld [vmem:[%s1387 + $0xd8] sm:$0xff]
      %v1416 = vld [vmem:[%s1387 + $0xe0] sm:$0xff]
      %v1417 = vld [vmem:[%s1387 + $0xe8] sm:$0xff]
      %v1418 = vadd.f32 %v1388, %v1298
      %v1419 = vadd.f32 %v1389, %v1301
      %v1420 = vadd.f32 %v1390, %v1304
      %v1421 = vadd.f32 %v1391, %v1307
      %v1422 = vadd.f32 %v1392, %v1310
      %v1423 = vadd.f32 %v1393, %v1313
      %v1424 = vadd.f32 %v1394, %v1316
      %v1425 = vadd.f32 %v1395, %v1319
      %v1426 = vadd.f32 %v1396, %v1322
      %v1427 = vadd.f32 %v1397, %v1325
      %v1428 = vadd.f32 %v1398, %v1328
      %v1429 = vadd.f32 %v1399, %v1331
      %v1430 = vadd.f32 %v1400, %v1334
      %v1431 = vadd.f32 %v1401, %v1337
      %v1432 = vadd.f32 %v1402, %v1340
      %v1433 = vadd.f32 %v1403, %v1343
      %v1434 = vadd.f32 %v1404, %v1346
      %v1435 = vadd.f32 %v1405, %v1349
      %v1436 = vadd.f32 %v1406, %v1352
      %v1437 = vadd.f32 %v1407, %v1355
      %v1438 = vadd.f32 %v1408, %v1358
      %v1439 = vadd.f32 %v1409, %v1361
      %v1440 = vadd.f32 %v1410, %v1364
      %v1441 = vadd.f32 %v1411, %v1367
      %v1442 = vadd.f32 %v1412, %v1370
      %v1443 = vadd.f32 %v1413, %v1373
      %v1444 = vadd.f32 %v1414, %v1376
      %v1445 = vadd.f32 %v1415, %v1379
      %v1446 = vadd.f32 %v1416, %v1382
      %v1447 = vadd.f32 %v1417, %v1385
      %1448 = vst.msk [vmem:[%s1387] sm:$0xff] %vm719, %v1418
      %1449 = vst.msk [vmem:[%s1387 + $0x8] sm:$0xff] %vm719, %v1419
      %1450 = vst.msk [vmem:[%s1387 + $0x10] sm:$0xff] %vm719, %v1420
      %1451 = vst.msk [vmem:[%s1387 + $0x18] sm:$0xff] %vm719, %v1421
      %1452 = vst.msk [vmem:[%s1387 + $0x20] sm:$0xff] %vm719, %v1422
      %1453 = vst.msk [vmem:[%s1387 + $0x28] sm:$0xff] %vm719, %v1423
      %1454 = vst.msk [vmem:[%s1387 + $0x30] sm:$0xff] %vm719, %v1424
      %1455 = vst.msk [vmem:[%s1387 + $0x38] sm:$0xff] %vm719, %v1425
      %1456 = vst.msk [vmem:[%s1387 + $0x40] sm:$0xff] %vm719, %v1426
      %1457 = vst.msk [vmem:[%s1387 + $0x48] sm:$0xff] %vm719, %v1427
      %1458 = vst.msk [vmem:[%s1387 + $0x50] sm:$0xff] %vm719, %v1428
      %1459 = vst.msk [vmem:[%s1387 + $0x58] sm:$0xff] %vm719, %v1429
      %1460 = vst.msk [vmem:[%s1387 + $0x60] sm:$0xff] %vm719, %v1430
      %1461 = vst.msk [vmem:[%s1387 + $0x68] sm:$0xff] %vm719, %v1431
      %1462 = vst.msk [vmem:[%s1387 + $0x70] sm:$0xff] %vm719, %v1432
      %1463 = vst.msk [vmem:[%s1387 + $0x78] sm:$0xff] %vm719, %v1433
      %1464 = vst.msk [vmem:[%s1387 + $0x80] sm:$0xff] %vm719, %v1434
      %1465 = vst.msk [vmem:[%s1387 + $0x88] sm:$0xff] %vm719, %v1435
      %1466 = vst.msk [vmem:[%s1387 + $0x90] sm:$0xff] %vm719, %v1436
      %1467 = vst.msk [vmem:[%s1387 + $0x98] sm:$0xff] %vm719, %v1437
      %1468 = vst.msk [vmem:[%s1387 + $0xa0] sm:$0xff] %vm719, %v1438
      %1469 = vst.msk [vmem:[%s1387 + $0xa8] sm:$0xff] %vm719, %v1439
      %1470 = vst.msk [vmem:[%s1387 + $0xb0] sm:$0xff] %vm719, %v1440
      %1471 = vst.msk [vmem:[%s1387 + $0xb8] sm:$0xff] %vm719, %v1441
      %1472 = vst.msk [vmem:[%s1387 + $0xc0] sm:$0xff] %vm719, %v1442
      %1473 = vst.msk [vmem:[%s1387 + $0xc8] sm:$0xff] %vm719, %v1443
      %1474 = vst.msk [vmem:[%s1387 + $0xd0] sm:$0xff] %vm719, %v1444
      %1475 = vst.msk [vmem:[%s1387 + $0xd8] sm:$0xff] %vm719, %v1445
      %1476 = vst.msk [vmem:[%s1387 + $0xe0] sm:$0xff] %vm719, %v1446
      %1477 = vst.msk [vmem:[%s1387 + $0xe8] sm:$0xff] %vm719, %v1447
      %v1478 = vsel %vm686, %v1031, 0
      %v1481 = vsel %vm849, %v1275, 0
      %1483 = vmatpush.msra.mxu0 0.0
      %1484 = vmatpush.msra.mxu0 0.0
      %1485 = vmatpush.msra.mxu0 0.0
      %1486 = vmatpush.msra.mxu0 0.0
      %1487 = vmatpush.msra.mxu0 0.0
      %1488 = vmatpush.msra.mxu0 0.0
      %1489 = vmatpush.msra.mxu0 0.0
      %1490 = vmatpush.msra.mxu0 0.0
      %1491 = vmatpush.msra.mxu0 0.0
      %1492 = vmatpush.msra.mxu0 0.0
      %1493 = vmatpush.msra.mxu0 0.0
      %1494 = vmatpush.msra.mxu0 0.0
      %1495 = vmatpush.msra.mxu0 0.0
      %1496 = vmatpush.msra.mxu0 0.0
      %1497 = vmatpush.msra.mxu0 0.0
      %1498 = vmatpush.msra.mxu0 %v1481
      %1499 = vmatmul.f32.gmra.mxu0 %v1033
      %v1500 = vpop.f32.mrf.mxu0
      %v1501 = vadd.f32 0.0, %v1500
      %1502 = vmatmul.f32.gmra.mxu0 %v1478
      %v1503 = vpop.f32.mrf.mxu0
      %v1504 = vadd.f32 0.0, %v1503
      %1505 = vdwg.mxu0
      %v1506 = vsel %vm686, %v1088, 0
      %1508 = vmatpush.msra.mxu0 0.0
      %1509 = vmatpush.msra.mxu0 0.0
      %1510 = vmatpush.msra.mxu0 0.0
      %1511 = vmatpush.msra.mxu0 0.0
      %1512 = vmatpush.msra.mxu0 0.0
      %1513 = vmatpush.msra.mxu0 0.0
      %1514 = vmatpush.msra.mxu0 0.0
      %1515 = vmatpush.msra.mxu0 0.0
      %1516 = vmatpush.msra.mxu0 0.0
      %1517 = vmatpush.msra.mxu0 0.0
      %1518 = vmatpush.msra.mxu0 0.0
      %1519 = vmatpush.msra.mxu0 0.0
      %1520 = vmatpush.msra.mxu0 0.0
      %1521 = vmatpush.msra.mxu0 0.0
      %1522 = vmatpush.msra.mxu0 0.0
      %1523 = vmatpush.msra.mxu0 %v1278
      %1524 = vmatmul.f32.gmra.mxu0 %v1091
      %v1525 = vpop.f32.mrf.mxu0
      %v1526 = vadd.f32 0.0, %v1525
      %1527 = vmatmul.f32.gmra.mxu0 %v1506
      %v1528 = vpop.f32.mrf.mxu0
      %v1529 = vadd.f32 0.0, %v1528
      %1530 = vdwg.mxu0
      %v1531 = vld [vmem:[%s1387] sm:$0x1]
      %v1532 = vld [vmem:[%s1387 + $0x10] sm:$0x1]
      %v1533 = vld [vmem:[%s1387 + $0x20] sm:$0x1]
      %v1534 = vld [vmem:[%s1387 + $0x30] sm:$0x1]
      %v1535 = vld [vmem:[%s1387 + $0x40] sm:$0x1]
      %v1536 = vld [vmem:[%s1387 + $0x50] sm:$0x1]
      %v1537 = vld [vmem:[%s1387 + $0x60] sm:$0x1]
      %v1538 = vld [vmem:[%s1387 + $0x70] sm:$0x1]
      %v1539 = vld [vmem:[%s1387 + $0x80] sm:$0x1]
      %v1540 = vld [vmem:[%s1387 + $0x90] sm:$0x1]
      %v1541 = vld [vmem:[%s1387 + $0xa0] sm:$0x1]
      %v1542 = vld [vmem:[%s1387 + $0xb0] sm:$0x1]
      %v1543 = vld [vmem:[%s1387 + $0xc0] sm:$0x1]
      %v1544 = vld [vmem:[%s1387 + $0xd0] sm:$0x1]
      %v1545 = vld [vmem:[%s1387 + $0xe0] sm:$0x1]
      %v1548 = vrot.slane %v1501, 1
      %v1549 = vrot.slane %v1501, 2
      %v1550 = vrot.slane %v1501, 3
      %v1551 = vrot.slane %v1501, 4
      %v1552 = vrot.slane %v1501, 5
      %v1553 = vrot.slane %v1501, 6
      %v1554 = vrot.slane %v1501, 7
      %v1555 = vrot.slane %v1504, 1
      %v1556 = vrot.slane %v1504, 2
      %v1557 = vrot.slane %v1504, 3
      %v1558 = vrot.slane %v1504, 4
      %v1559 = vrot.slane %v1504, 5
      %v1560 = vrot.slane %v1504, 6
      %v1574 = vsub.f32 %v1531, %v1501
      %v1575 = vsub.f32 %v1532, %v1548
      %v1576 = vsub.f32 %v1533, %v1549
      %v1577 = vsub.f32 %v1534, %v1550
      %v1578 = vsub.f32 %v1535, %v1551
      %v1579 = vsub.f32 %v1536, %v1552
      %v1580 = vsub.f32 %v1537, %v1553
      %v1581 = vsub.f32 %v1538, %v1554
      %v1582 = vsub.f32 %v1539, %v1504
      %v1583 = vsub.f32 %v1540, %v1555
      %v1584 = vsub.f32 %v1541, %v1556
      %v1585 = vsub.f32 %v1542, %v1557
      %v1586 = vsub.f32 %v1543, %v1558
      %v1587 = vsub.f32 %v1544, %v1559
      %v1588 = vsub.f32 %v1545, %v1560
      %1589 = vst.msk [vmem:[%s1387] sm:$0x1] %vm1180, %v1574
      %1590 = vst.msk [vmem:[%s1387 + $0x10] sm:$0x1] %vm1180, %v1575
      %1591 = vst.msk [vmem:[%s1387 + $0x20] sm:$0x1] %vm1180, %v1576
      %1592 = vst.msk [vmem:[%s1387 + $0x30] sm:$0x1] %vm1180, %v1577
      %1593 = vst.msk [vmem:[%s1387 + $0x40] sm:$0x1] %vm1180, %v1578
      %1594 = vst.msk [vmem:[%s1387 + $0x50] sm:$0x1] %vm1180, %v1579
      %1595 = vst.msk [vmem:[%s1387 + $0x60] sm:$0x1] %vm1180, %v1580
      %1596 = vst.msk [vmem:[%s1387 + $0x70] sm:$0x1] %vm1180, %v1581
      %1597 = vst.msk [vmem:[%s1387 + $0x80] sm:$0x1] %vm1180, %v1582
      %1598 = vst.msk [vmem:[%s1387 + $0x90] sm:$0x1] %vm1180, %v1583
      %1599 = vst.msk [vmem:[%s1387 + $0xa0] sm:$0x1] %vm1180, %v1584
      %1600 = vst.msk [vmem:[%s1387 + $0xb0] sm:$0x1] %vm1180, %v1585
      %1601 = vst.msk [vmem:[%s1387 + $0xc0] sm:$0x1] %vm1180, %v1586
      %1602 = vst.msk [vmem:[%s1387 + $0xd0] sm:$0x1] %vm1180, %v1587
      %1603 = vst.msk [vmem:[%s1387 + $0xe0] sm:$0x1] %vm1180, %v1588
      %v1604 = vld [vmem:[%s1387 + $0xf] sm:$0x1]
      %v1605 = vld [vmem:[%s1387 + $0x1f] sm:$0x1]
      %v1606 = vld [vmem:[%s1387 + $0x2f] sm:$0x1]
      %v1607 = vld [vmem:[%s1387 + $0x3f] sm:$0x1]
      %v1608 = vld [vmem:[%s1387 + $0x4f] sm:$0x1]
      %v1609 = vld [vmem:[%s1387 + $0x5f] sm:$0x1]
      %v1610 = vld [vmem:[%s1387 + $0x6f] sm:$0x1]
      %v1611 = vld [vmem:[%s1387 + $0x7f] sm:$0x1]
      %v1612 = vld [vmem:[%s1387 + $0x8f] sm:$0x1]
      %v1613 = vld [vmem:[%s1387 + $0x9f] sm:$0x1]
      %v1614 = vld [vmem:[%s1387 + $0xaf] sm:$0x1]
      %v1615 = vld [vmem:[%s1387 + $0xbf] sm:$0x1]
      %v1616 = vld [vmem:[%s1387 + $0xcf] sm:$0x1]
      %v1617 = vld [vmem:[%s1387 + $0xdf] sm:$0x1]
      %v1618 = vld [vmem:[%s1387 + $0xef] sm:$0x1]
      %v1621 = vrot.slane %v1526, 1
      %v1622 = vrot.slane %v1526, 2
      %v1623 = vrot.slane %v1526, 3
      %v1624 = vrot.slane %v1526, 4
      %v1625 = vrot.slane %v1526, 5
      %v1626 = vrot.slane %v1526, 6
      %v1627 = vrot.slane %v1526, 7
      %v1628 = vrot.slane %v1529, 1
      %v1629 = vrot.slane %v1529, 2
      %v1630 = vrot.slane %v1529, 3
      %v1631 = vrot.slane %v1529, 4
      %v1632 = vrot.slane %v1529, 5
      %v1633 = vrot.slane %v1529, 6
      %v1647 = vsub.f32 %v1604, %v1526
      %v1648 = vsub.f32 %v1605, %v1621
      %v1649 = vsub.f32 %v1606, %v1622
      %v1650 = vsub.f32 %v1607, %v1623
      %v1651 = vsub.f32 %v1608, %v1624
      %v1652 = vsub.f32 %v1609, %v1625
      %v1653 = vsub.f32 %v1610, %v1626
      %v1654 = vsub.f32 %v1611, %v1627
      %v1655 = vsub.f32 %v1612, %v1529
      %v1656 = vsub.f32 %v1613, %v1628
      %v1657 = vsub.f32 %v1614, %v1629
      %v1658 = vsub.f32 %v1615, %v1630
      %v1659 = vsub.f32 %v1616, %v1631
      %v1660 = vsub.f32 %v1617, %v1632
      %v1661 = vsub.f32 %v1618, %v1633
      %1662 = vst.msk [vmem:[%s1387 + $0xf] sm:$0x1] %vm1180, %v1647
      %1663 = vst.msk [vmem:[%s1387 + $0x1f] sm:$0x1] %vm1180, %v1648
      %1664 = vst.msk [vmem:[%s1387 + $0x2f] sm:$0x1] %vm1180, %v1649
      %1665 = vst.msk [vmem:[%s1387 + $0x3f] sm:$0x1] %vm1180, %v1650
      %1666 = vst.msk [vmem:[%s1387 + $0x4f] sm:$0x1] %vm1180, %v1651
      %1667 = vst.msk [vmem:[%s1387 + $0x5f] sm:$0x1] %vm1180, %v1652
      %1668 = vst.msk [vmem:[%s1387 + $0x6f] sm:$0x1] %vm1180, %v1653
      %1669 = vst.msk [vmem:[%s1387 + $0x7f] sm:$0x1] %vm1180, %v1654
      %1670 = vst.msk [vmem:[%s1387 + $0x8f] sm:$0x1] %vm1180, %v1655
      %1671 = vst.msk [vmem:[%s1387 + $0x9f] sm:$0x1] %vm1180, %v1656
      %1672 = vst.msk [vmem:[%s1387 + $0xaf] sm:$0x1] %vm1180, %v1657
      %1673 = vst.msk [vmem:[%s1387 + $0xbf] sm:$0x1] %vm1180, %v1658
      %1674 = vst.msk [vmem:[%s1387 + $0xcf] sm:$0x1] %vm1180, %v1659
      %1675 = vst.msk [vmem:[%s1387 + $0xdf] sm:$0x1] %vm1180, %v1660
      %1676 = vst.msk [vmem:[%s1387 + $0xef] sm:$0x1] %vm1180, %v1661
      %s1677 = scalar_lea.vmem %s1, 32
      %v1678 = vld [vmem:[%s1677] sm:$0xff]
      %v1679 = vld [vmem:[%s1677 + $0x8] sm:$0xf]
      %v1681 = vsel %vm849, %v1679, 0
      %1683 = vmatpush.msra.mxu0 0.0
      %1684 = vmatpush.msra.mxu0 0.0
      %1685 = vmatpush.msra.mxu0 0.0
      %1686 = vmatpush.msra.mxu0 0.0
      %1687 = vmatpush.msra.mxu0 0.0
      %1688 = vmatpush.msra.mxu0 0.0
      %1689 = vmatpush.msra.mxu0 0.0
      %1690 = vmatpush.msra.mxu0 0.0
      %1691 = vmatpush.msra.mxu0 0.0
      %1692 = vmatpush.msra.mxu0 0.0
      %1693 = vmatpush.msra.mxu0 0.0
      %1694 = vmatpush.msra.mxu0 0.0
      %1695 = vmatpush.msra.mxu0 0.0
      %1696 = vmatpush.msra.mxu0 0.0
      %1697 = vmatpush.msra.mxu0 %v1681
      %1698 = vmatpush.msra.mxu0 %v1678
      %1699 = vmatmul.f32.gmra.mxu0 %v760
      %v1700 = vpop.f32.mrf.mxu0
      %v1701 = vadd.f32 0.0, %v1700
      %1702 = vmatmul.f32.gmra.mxu0 %v763
      %v1703 = vpop.f32.mrf.mxu0
      %v1704 = vadd.f32 0.0, %v1703
      %1705 = vmatmul.f32.gmra.mxu0 %v766
      %v1706 = vpop.f32.mrf.mxu0
      %v1707 = vadd.f32 0.0, %v1706
      %1708 = vmatmul.f32.gmra.mxu0 %v769
      %v1709 = vpop.f32.mrf.mxu0
      %v1710 = vadd.f32 0.0, %v1709
      %1711 = vmatmul.f32.gmra.mxu0 %v772
      %v1712 = vpop.f32.mrf.mxu0
      %v1713 = vadd.f32 0.0, %v1712
      %1714 = vmatmul.f32.gmra.mxu0 %v775
      %v1715 = vpop.f32.mrf.mxu0
      %v1716 = vadd.f32 0.0, %v1715
      %1717 = vmatmul.f32.gmra.mxu0 %v778
      %v1718 = vpop.f32.mrf.mxu0
      %v1719 = vadd.f32 0.0, %v1718
      %1720 = vmatmul.f32.gmra.mxu0 %v781
      %v1721 = vpop.f32.mrf.mxu0
      %v1722 = vadd.f32 0.0, %v1721
      %1723 = vmatmul.f32.gmra.mxu0 %v784
      %v1724 = vpop.f32.mrf.mxu0
      %v1725 = vadd.f32 0.0, %v1724
      %1726 = vmatmul.f32.gmra.mxu0 %v787
      %v1727 = vpop.f32.mrf.mxu0
      %v1728 = vadd.f32 0.0, %v1727
      %1729 = vmatmul.f32.gmra.mxu0 %v790
      %v1730 = vpop.f32.mrf.mxu0
      %v1731 = vadd.f32 0.0, %v1730
      %1732 = vmatmul.f32.gmra.mxu0 %v793
      %v1733 = vpop.f32.mrf.mxu0
      %v1734 = vadd.f32 0.0, %v1733
      %1735 = vmatmul.f32.gmra.mxu0 %v796
      %v1736 = vpop.f32.mrf.mxu0
      %v1737 = vadd.f32 0.0, %v1736
      %1738 = vmatmul.f32.gmra.mxu0 %v799
      %v1739 = vpop.f32.mrf.mxu0
      %v1740 = vadd.f32 0.0, %v1739
      %1741 = vmatmul.f32.gmra.mxu0 %v802
      %v1742 = vpop.f32.mrf.mxu0
      %v1743 = vadd.f32 0.0, %v1742
      %1744 = vmatmul.f32.gmra.mxu0 %v805
      %v1745 = vpop.f32.mrf.mxu0
      %v1746 = vadd.f32 0.0, %v1745
      %1747 = vmatmul.f32.gmra.mxu0 %v808
      %v1748 = vpop.f32.mrf.mxu0
      %v1749 = vadd.f32 0.0, %v1748
      %1750 = vmatmul.f32.gmra.mxu0 %v811
      %v1751 = vpop.f32.mrf.mxu0
      %v1752 = vadd.f32 0.0, %v1751
      %1753 = vmatmul.f32.gmra.mxu0 %v814
      %v1754 = vpop.f32.mrf.mxu0
      %v1755 = vadd.f32 0.0, %v1754
      %1756 = vmatmul.f32.gmra.mxu0 %v817
      %v1757 = vpop.f32.mrf.mxu0
      %v1758 = vadd.f32 0.0, %v1757
      %1759 = vmatmul.f32.gmra.mxu0 %v820
      %v1760 = vpop.f32.mrf.mxu0
      %v1761 = vadd.f32 0.0, %v1760
      %1762 = vmatmul.f32.gmra.mxu0 %v823
      %v1763 = vpop.f32.mrf.mxu0
      %v1764 = vadd.f32 0.0, %v1763
      %1765 = vmatmul.f32.gmra.mxu0 %v826
      %v1766 = vpop.f32.mrf.mxu0
      %v1767 = vadd.f32 0.0, %v1766
      %1768 = vmatmul.f32.gmra.mxu0 %v829
      %v1769 = vpop.f32.mrf.mxu0
      %v1770 = vadd.f32 0.0, %v1769
      %1771 = vmatmul.f32.gmra.mxu0 %v832
      %v1772 = vpop.f32.mrf.mxu0
      %v1773 = vadd.f32 0.0, %v1772
      %1774 = vmatmul.f32.gmra.mxu0 %v835
      %v1775 = vpop.f32.mrf.mxu0
      %v1776 = vadd.f32 0.0, %v1775
      %1777 = vmatmul.f32.gmra.mxu0 %v838
      %v1778 = vpop.f32.mrf.mxu0
      %v1779 = vadd.f32 0.0, %v1778
      %1780 = vmatmul.f32.gmra.mxu0 %v841
      %v1781 = vpop.f32.mrf.mxu0
      %v1782 = vadd.f32 0.0, %v1781
      %1783 = vmatmul.f32.gmra.mxu0 %v844
      %v1784 = vpop.f32.mrf.mxu0
      %v1785 = vadd.f32 0.0, %v1784
      %1786 = vmatmul.f32.gmra.mxu0 %v847
      %v1787 = vpop.f32.mrf.mxu0
      %v1788 = vadd.f32 0.0, %v1787
      %1789 = vdwg.mxu0
      %v1790 = vld [vmem:[#allocation2] sm:$0xff]
      %v1791 = vld [vmem:[#allocation2 + $0x8] sm:$0xff]
      %v1792 = vld [vmem:[#allocation2 + $0x10] sm:$0xff]
      %v1793 = vld [vmem:[#allocation2 + $0x18] sm:$0xff]
      %v1794 = vld [vmem:[#allocation2 + $0x20] sm:$0xff]
      %v1795 = vld [vmem:[#allocation2 + $0x28] sm:$0xff]
      %v1796 = vld [vmem:[#allocation2 + $0x30] sm:$0xff]
      %v1797 = vld [vmem:[#allocation2 + $0x38] sm:$0xff]
      %v1798 = vld [vmem:[#allocation2 + $0x40] sm:$0xff]
      %v1799 = vld [vmem:[#allocation2 + $0x48] sm:$0xff]
      %v1800 = vld [vmem:[#allocation2 + $0x50] sm:$0xff]
      %v1801 = vld [vmem:[#allocation2 + $0x58] sm:$0xff]
      %v1802 = vld [vmem:[#allocation2 + $0x60] sm:$0xff]
      %v1803 = vld [vmem:[#allocation2 + $0x68] sm:$0xff]
      %v1804 = vld [vmem:[#allocation2 + $0x70] sm:$0xff]
      %v1805 = vld [vmem:[#allocation2 + $0x78] sm:$0xff]
      %v1806 = vld [vmem:[#allocation2 + $0x80] sm:$0xff]
      %v1807 = vld [vmem:[#allocation2 + $0x88] sm:$0xff]
      %v1808 = vld [vmem:[#allocation2 + $0x90] sm:$0xff]
      %v1809 = vld [vmem:[#allocation2 + $0x98] sm:$0xff]
      %v1810 = vld [vmem:[#allocation2 + $0xa0] sm:$0xff]
      %v1811 = vld [vmem:[#allocation2 + $0xa8] sm:$0xff]
      %v1812 = vld [vmem:[#allocation2 + $0xb0] sm:$0xff]
      %v1813 = vld [vmem:[#allocation2 + $0xb8] sm:$0xff]
      %v1814 = vld [vmem:[#allocation2 + $0xc0] sm:$0xff]
      %v1815 = vld [vmem:[#allocation2 + $0xc8] sm:$0xff]
      %v1816 = vld [vmem:[#allocation2 + $0xd0] sm:$0xff]
      %v1817 = vld [vmem:[#allocation2 + $0xd8] sm:$0xff]
      %v1818 = vld [vmem:[#allocation2 + $0xe0] sm:$0xff]
      %v1819 = vld [vmem:[#allocation2 + $0xe8] sm:$0xff]
      %v1820 = vadd.f32 %v1790, %v1701
      %v1821 = vadd.f32 %v1791, %v1704
      %v1822 = vadd.f32 %v1792, %v1707
      %v1823 = vadd.f32 %v1793, %v1710
      %v1824 = vadd.f32 %v1794, %v1713
      %v1825 = vadd.f32 %v1795, %v1716
      %v1826 = vadd.f32 %v1796, %v1719
      %v1827 = vadd.f32 %v1797, %v1722
      %v1828 = vadd.f32 %v1798, %v1725
      %v1829 = vadd.f32 %v1799, %v1728
      %v1830 = vadd.f32 %v1800, %v1731
      %v1831 = vadd.f32 %v1801, %v1734
      %v1832 = vadd.f32 %v1802, %v1737
      %v1833 = vadd.f32 %v1803, %v1740
      %v1834 = vadd.f32 %v1804, %v1743
      %v1835 = vadd.f32 %v1805, %v1746
      %v1836 = vadd.f32 %v1806, %v1749
      %v1837 = vadd.f32 %v1807, %v1752
      %v1838 = vadd.f32 %v1808, %v1755
      %v1839 = vadd.f32 %v1809, %v1758
      %v1840 = vadd.f32 %v1810, %v1761
      %v1841 = vadd.f32 %v1811, %v1764
      %v1842 = vadd.f32 %v1812, %v1767
      %v1843 = vadd.f32 %v1813, %v1770
      %v1844 = vadd.f32 %v1814, %v1773
      %v1845 = vadd.f32 %v1815, %v1776
      %v1846 = vadd.f32 %v1816, %v1779
      %v1847 = vadd.f32 %v1817, %v1782
      %v1848 = vadd.f32 %v1818, %v1785
      %v1849 = vadd.f32 %v1819, %v1788
      %1850 = vst.msk [vmem:[#allocation2] sm:$0xff] %vm719, %v1820
      %1851 = vst.msk [vmem:[#allocation2 + $0x8] sm:$0xff] %vm719, %v1821
      %1852 = vst.msk [vmem:[#allocation2 + $0x10] sm:$0xff] %vm719, %v1822
      %1853 = vst.msk [vmem:[#allocation2 + $0x18] sm:$0xff] %vm719, %v1823
      %1854 = vst.msk [vmem:[#allocation2 + $0x20] sm:$0xff] %vm719, %v1824
      %1855 = vst.msk [vmem:[#allocation2 + $0x28] sm:$0xff] %vm719, %v1825
      %1856 = vst.msk [vmem:[#allocation2 + $0x30] sm:$0xff] %vm719, %v1826
      %1857 = vst.msk [vmem:[#allocation2 + $0x38] sm:$0xff] %vm719, %v1827
      %1858 = vst.msk [vmem:[#allocation2 + $0x40] sm:$0xff] %vm719, %v1828
      %1859 = vst.msk [vmem:[#allocation2 + $0x48] sm:$0xff] %vm719, %v1829
      %1860 = vst.msk [vmem:[#allocation2 + $0x50] sm:$0xff] %vm719, %v1830
      %1861 = vst.msk [vmem:[#allocation2 + $0x58] sm:$0xff] %vm719, %v1831
      %1862 = vst.msk [vmem:[#allocation2 + $0x60] sm:$0xff] %vm719, %v1832
      %1863 = vst.msk [vmem:[#allocation2 + $0x68] sm:$0xff] %vm719, %v1833
      %1864 = vst.msk [vmem:[#allocation2 + $0x70] sm:$0xff] %vm719, %v1834
      %1865 = vst.msk [vmem:[#allocation2 + $0x78] sm:$0xff] %vm719, %v1835
      %1866 = vst.msk [vmem:[#allocation2 + $0x80] sm:$0xff] %vm719, %v1836
      %1867 = vst.msk [vmem:[#allocation2 + $0x88] sm:$0xff] %vm719, %v1837
      %1868 = vst.msk [vmem:[#allocation2 + $0x90] sm:$0xff] %vm719, %v1838
      %1869 = vst.msk [vmem:[#allocation2 + $0x98] sm:$0xff] %vm719, %v1839
      %1870 = vst.msk [vmem:[#allocation2 + $0xa0] sm:$0xff] %vm719, %v1840
      %1871 = vst.msk [vmem:[#allocation2 + $0xa8] sm:$0xff] %vm719, %v1841
      %1872 = vst.msk [vmem:[#allocation2 + $0xb0] sm:$0xff] %vm719, %v1842
      %1873 = vst.msk [vmem:[#allocation2 + $0xb8] sm:$0xff] %vm719, %v1843
      %1874 = vst.msk [vmem:[#allocation2 + $0xc0] sm:$0xff] %vm719, %v1844
      %1875 = vst.msk [vmem:[#allocation2 + $0xc8] sm:$0xff] %vm719, %v1845
      %1876 = vst.msk [vmem:[#allocation2 + $0xd0] sm:$0xff] %vm719, %v1846
      %1877 = vst.msk [vmem:[#allocation2 + $0xd8] sm:$0xff] %vm719, %v1847
      %1878 = vst.msk [vmem:[#allocation2 + $0xe0] sm:$0xff] %vm719, %v1848
      %1879 = vst.msk [vmem:[#allocation2 + $0xe8] sm:$0xff] %vm719, %v1849
      %v1880 = vrot.slane %v266, 7
      %v1881 = vrot.slane %v268, 6
      %v1882 = vsel %vm1000, %v1881, %v1880
      %v1883 = vrot.slane %v270, 5
      %v1884 = vsel %vm1003, %v1883, %v1882
      %v1885 = vrot.slane %v272, 4
      %v1886 = vsel %vm1006, %v1885, %v1884
      %v1887 = vrot.slane %v274, 3
      %v1888 = vsel %vm1009, %v1887, %v1886
      %v1889 = vrot.slane %v276, 2
      %v1890 = vsel %vm1012, %v1889, %v1888
      %v1891 = vrot.slane %v278, 1
      %v1892 = vsel %vm1015, %v1891, %v1890
      %v1893 = vsel %vm1017, %v280, %v1892
      %v1894 = vrot.slane %v282, 7
      %v1895 = vrot.slane %v284, 6
      %v1896 = vsel %vm1000, %v1895, %v1894
      %v1897 = vrot.slane %v286, 5
      %v1898 = vsel %vm1003, %v1897, %v1896
      %v1899 = vrot.slane %v288, 4
      %v1900 = vsel %vm1006, %v1899, %v1898
      %v1901 = vrot.slane %v290, 3
      %v1902 = vsel %vm1009, %v1901, %v1900
      %v1903 = vrot.slane %v292, 2
      %v1904 = vsel %vm1012, %v1903, %v1902
      %v1905 = vrot.slane %v294, 1
      %v1906 = vsel %vm1015, %v1905, %v1904
      %v1907 = vsel %vm686, %v1893, 0
      %v1909 = vsel %vm686, %v1906, 0
      %v1912 = vsel %vm849, %v1678, 0
      %1914 = vmatpush.msra.mxu0 0.0
      %1915 = vmatpush.msra.mxu0 0.0
      %1916 = vmatpush.msra.mxu0 0.0
      %1917 = vmatpush.msra.mxu0 0.0
      %1918 = vmatpush.msra.mxu0 0.0
      %1919 = vmatpush.msra.mxu0 0.0
      %1920 = vmatpush.msra.mxu0 0.0
      %1921 = vmatpush.msra.mxu0 0.0
      %1922 = vmatpush.msra.mxu0 0.0
      %1923 = vmatpush.msra.mxu0 0.0
      %1924 = vmatpush.msra.mxu0 0.0
      %1925 = vmatpush.msra.mxu0 0.0
      %1926 = vmatpush.msra.mxu0 0.0
      %1927 = vmatpush.msra.mxu0 0.0
      %1928 = vmatpush.msra.mxu0 0.0
      %1929 = vmatpush.msra.mxu0 %v1912
      %1930 = vmatmul.f32.gmra.mxu0 %v1907
      %v1931 = vpop.f32.mrf.mxu0
      %v1932 = vadd.f32 0.0, %v1931
      %1933 = vmatmul.f32.gmra.mxu0 %v1909
      %v1934 = vpop.f32.mrf.mxu0
      %v1935 = vadd.f32 0.0, %v1934
      %1936 = vdwg.mxu0
      %v1937 = vrot.slane %v267, 7
      %v1938 = vsel %vm1000, %v1937, %v265
      %v1939 = vrot.slane %v269, 6
      %v1940 = vsel %vm1003, %v1939, %v1938
      %v1941 = vrot.slane %v271, 5
      %v1942 = vsel %vm1006, %v1941, %v1940
      %v1943 = vrot.slane %v273, 4
      %v1944 = vsel %vm1009, %v1943, %v1942
      %v1945 = vrot.slane %v275, 3
      %v1946 = vsel %vm1012, %v1945, %v1944
      %v1947 = vrot.slane %v277, 2
      %v1948 = vsel %vm1015, %v1947, %v1946
      %v1949 = vrot.slane %v279, 1
      %v1950 = vsel %vm1017, %v1949, %v1948
      %v1951 = vrot.slane %v283, 7
      %v1952 = vsel %vm1000, %v1951, %v281
      %v1953 = vrot.slane %v285, 6
      %v1954 = vsel %vm1003, %v1953, %v1952
      %v1955 = vrot.slane %v287, 5
      %v1956 = vsel %vm1006, %v1955, %v1954
      %v1957 = vrot.slane %v289, 4
      %v1958 = vsel %vm1009, %v1957, %v1956
      %v1959 = vrot.slane %v291, 3
      %v1960 = vsel %vm1012, %v1959, %v1958
      %v1961 = vrot.slane %v293, 2
      %v1962 = vsel %vm1015, %v1961, %v1960
      %v1963 = vsel %vm686, %v1950, 0
      %v1965 = vsel %vm686, %v1962, 0
      %1967 = vmatpush.msra.mxu0 0.0
      %1968 = vmatpush.msra.mxu0 0.0
      %1969 = vmatpush.msra.mxu0 0.0
      %1970 = vmatpush.msra.mxu0 0.0
      %1971 = vmatpush.msra.mxu0 0.0
      %1972 = vmatpush.msra.mxu0 0.0
      %1973 = vmatpush.msra.mxu0 0.0
      %1974 = vmatpush.msra.mxu0 0.0
      %1975 = vmatpush.msra.mxu0 0.0
      %1976 = vmatpush.msra.mxu0 0.0
      %1977 = vmatpush.msra.mxu0 0.0
      %1978 = vmatpush.msra.mxu0 0.0
      %1979 = vmatpush.msra.mxu0 0.0
      %1980 = vmatpush.msra.mxu0 0.0
      %1981 = vmatpush.msra.mxu0 0.0
      %1982 = vmatpush.msra.mxu0 %v1681
      %1983 = vmatmul.f32.gmra.mxu0 %v1963
      %v1984 = vpop.f32.mrf.mxu0
      %v1985 = vadd.f32 0.0, %v1984
      %1986 = vmatmul.f32.gmra.mxu0 %v1965
      %v1987 = vpop.f32.mrf.mxu0
      %v1988 = vadd.f32 0.0, %v1987
      %1989 = vdwg.mxu0
      %v1990 = vld [vmem:[#allocation2] sm:$0x1]
      %v1991 = vld [vmem:[#allocation2 + $0x10] sm:$0x1]
      %v1992 = vld [vmem:[#allocation2 + $0x20] sm:$0x1]
      %v1993 = vld [vmem:[#allocation2 + $0x30] sm:$0x1]
      %v1994 = vld [vmem:[#allocation2 + $0x40] sm:$0x1]
      %v1995 = vld [vmem:[#allocation2 + $0x50] sm:$0x1]
      %v1996 = vld [vmem:[#allocation2 + $0x60] sm:$0x1]
      %v1997 = vld [vmem:[#allocation2 + $0x70] sm:$0x1]
      %v1998 = vld [vmem:[#allocation2 + $0x80] sm:$0x1]
      %v1999 = vld [vmem:[#allocation2 + $0x90] sm:$0x1]
      %v2000 = vld [vmem:[#allocation2 + $0xa0] sm:$0x1]
      %v2001 = vld [vmem:[#allocation2 + $0xb0] sm:$0x1]
      %v2002 = vld [vmem:[#allocation2 + $0xc0] sm:$0x1]
      %v2003 = vld [vmem:[#allocation2 + $0xd0] sm:$0x1]
      %v2004 = vld [vmem:[#allocation2 + $0xe0] sm:$0x1]
      %v2007 = vrot.slane %v1932, 1
      %v2008 = vrot.slane %v1932, 2
      %v2009 = vrot.slane %v1932, 3
      %v2010 = vrot.slane %v1932, 4
      %v2011 = vrot.slane %v1932, 5
      %v2012 = vrot.slane %v1932, 6
      %v2013 = vrot.slane %v1932, 7
      %v2014 = vrot.slane %v1935, 1
      %v2015 = vrot.slane %v1935, 2
      %v2016 = vrot.slane %v1935, 3
      %v2017 = vrot.slane %v1935, 4
      %v2018 = vrot.slane %v1935, 5
      %v2019 = vrot.slane %v1935, 6
      %v2033 = vsub.f32 %v1990, %v1932
      %v2034 = vsub.f32 %v1991, %v2007
      %v2035 = vsub.f32 %v1992, %v2008
      %v2036 = vsub.f32 %v1993, %v2009
      %v2037 = vsub.f32 %v1994, %v2010
      %v2038 = vsub.f32 %v1995, %v2011
      %v2039 = vsub.f32 %v1996, %v2012
      %v2040 = vsub.f32 %v1997, %v2013
      %v2041 = vsub.f32 %v1998, %v1935
      %v2042 = vsub.f32 %v1999, %v2014
      %v2043 = vsub.f32 %v2000, %v2015
      %v2044 = vsub.f32 %v2001, %v2016
      %v2045 = vsub.f32 %v2002, %v2017
      %v2046 = vsub.f32 %v2003, %v2018
      %v2047 = vsub.f32 %v2004, %v2019
      %2048 = vst.msk [vmem:[#allocation2] sm:$0x1] %vm1180, %v2033
      %2049 = vst.msk [vmem:[#allocation2 + $0x10] sm:$0x1] %vm1180, %v2034
      %2050 = vst.msk [vmem:[#allocation2 + $0x20] sm:$0x1] %vm1180, %v2035
      %2051 = vst.msk [vmem:[#allocation2 + $0x30] sm:$0x1] %vm1180, %v2036
      %2052 = vst.msk [vmem:[#allocation2 + $0x40] sm:$0x1] %vm1180, %v2037
      %2053 = vst.msk [vmem:[#allocation2 + $0x50] sm:$0x1] %vm1180, %v2038
      %2054 = vst.msk [vmem:[#allocation2 + $0x60] sm:$0x1] %vm1180, %v2039
      %2055 = vst.msk [vmem:[#allocation2 + $0x70] sm:$0x1] %vm1180, %v2040
      %2056 = vst.msk [vmem:[#allocation2 + $0x80] sm:$0x1] %vm1180, %v2041
      %2057 = vst.msk [vmem:[#allocation2 + $0x90] sm:$0x1] %vm1180, %v2042
      %2058 = vst.msk [vmem:[#allocation2 + $0xa0] sm:$0x1] %vm1180, %v2043
      %2059 = vst.msk [vmem:[#allocation2 + $0xb0] sm:$0x1] %vm1180, %v2044
      %2060 = vst.msk [vmem:[#allocation2 + $0xc0] sm:$0x1] %vm1180, %v2045
      %2061 = vst.msk [vmem:[#allocation2 + $0xd0] sm:$0x1] %vm1180, %v2046
      %2062 = vst.msk [vmem:[#allocation2 + $0xe0] sm:$0x1] %vm1180, %v2047
      %v2063 = vld [vmem:[#allocation2 + $0xf] sm:$0x1]
      %v2064 = vld [vmem:[#allocation2 + $0x1f] sm:$0x1]
      %v2065 = vld [vmem:[#allocation2 + $0x2f] sm:$0x1]
      %v2066 = vld [vmem:[#allocation2 + $0x3f] sm:$0x1]
      %v2067 = vld [vmem:[#allocation2 + $0x4f] sm:$0x1]
      %v2068 = vld [vmem:[#allocation2 + $0x5f] sm:$0x1]
      %v2069 = vld [vmem:[#allocation2 + $0x6f] sm:$0x1]
      %v2070 = vld [vmem:[#allocation2 + $0x7f] sm:$0x1]
      %v2071 = vld [vmem:[#allocation2 + $0x8f] sm:$0x1]
      %v2072 = vld [vmem:[#allocation2 + $0x9f] sm:$0x1]
      %v2073 = vld [vmem:[#allocation2 + $0xaf] sm:$0x1]
      %v2074 = vld [vmem:[#allocation2 + $0xbf] sm:$0x1]
      %v2075 = vld [vmem:[#allocation2 + $0xcf] sm:$0x1]
      %v2076 = vld [vmem:[#allocation2 + $0xdf] sm:$0x1]
      %v2077 = vld [vmem:[#allocation2 + $0xef] sm:$0x1]
      %v2080 = vrot.slane %v1985, 1
      %v2081 = vrot.slane %v1985, 2
      %v2082 = vrot.slane %v1985, 3
      %v2083 = vrot.slane %v1985, 4
      %v2084 = vrot.slane %v1985, 5
      %v2085 = vrot.slane %v1985, 6
      %v2086 = vrot.slane %v1985, 7
      %v2087 = vrot.slane %v1988, 1
      %v2088 = vrot.slane %v1988, 2
      %v2089 = vrot.slane %v1988, 3
      %v2090 = vrot.slane %v1988, 4
      %v2091 = vrot.slane %v1988, 5
      %v2092 = vrot.slane %v1988, 6
      %v2106 = vsub.f32 %v2063, %v1985
      %v2107 = vsub.f32 %v2064, %v2080
      %v2108 = vsub.f32 %v2065, %v2081
      %v2109 = vsub.f32 %v2066, %v2082
      %v2110 = vsub.f32 %v2067, %v2083
      %v2111 = vsub.f32 %v2068, %v2084
      %v2112 = vsub.f32 %v2069, %v2085
      %v2113 = vsub.f32 %v2070, %v2086
      %v2114 = vsub.f32 %v2071, %v1988
      %v2115 = vsub.f32 %v2072, %v2087
      %v2116 = vsub.f32 %v2073, %v2088
      %v2117 = vsub.f32 %v2074, %v2089
      %v2118 = vsub.f32 %v2075, %v2090
      %v2119 = vsub.f32 %v2076, %v2091
      %v2120 = vsub.f32 %v2077, %v2092
      %2121 = vst.msk [vmem:[#allocation2 + $0xf] sm:$0x1] %vm1180, %v2106
      %2122 = vst.msk [vmem:[#allocation2 + $0x1f] sm:$0x1] %vm1180, %v2107
      %2123 = vst.msk [vmem:[#allocation2 + $0x2f] sm:$0x1] %vm1180, %v2108
      %2124 = vst.msk [vmem:[#allocation2 + $0x3f] sm:$0x1] %vm1180, %v2109
      %2125 = vst.msk [vmem:[#allocation2 + $0x4f] sm:$0x1] %vm1180, %v2110
      %2126 = vst.msk [vmem:[#allocation2 + $0x5f] sm:$0x1] %vm1180, %v2111
      %2127 = vst.msk [vmem:[#allocation2 + $0x6f] sm:$0x1] %vm1180, %v2112
      %2128 = vst.msk [vmem:[#allocation2 + $0x7f] sm:$0x1] %vm1180, %v2113
      %2129 = vst.msk [vmem:[#allocation2 + $0x8f] sm:$0x1] %vm1180, %v2114
      %2130 = vst.msk [vmem:[#allocation2 + $0x9f] sm:$0x1] %vm1180, %v2115
      %2131 = vst.msk [vmem:[#allocation2 + $0xaf] sm:$0x1] %vm1180, %v2116
      %2132 = vst.msk [vmem:[#allocation2 + $0xbf] sm:$0x1] %vm1180, %v2117
      %2133 = vst.msk [vmem:[#allocation2 + $0xcf] sm:$0x1] %vm1180, %v2118
      %2134 = vst.msk [vmem:[#allocation2 + $0xdf] sm:$0x1] %vm1180, %v2119
      %2135 = vst.msk [vmem:[#allocation2 + $0xef] sm:$0x1] %vm1180, %v2120
      %v2136 = vld [vmem:[#allocation2] sm:$0xff]
      %v2137 = vld [vmem:[#allocation2 + $0x8] sm:$0xff]
      %v2138 = vld [vmem:[#allocation2 + $0x10] sm:$0xff]
      %v2139 = vld [vmem:[#allocation2 + $0x18] sm:$0xff]
      %v2140 = vld [vmem:[#allocation2 + $0x20] sm:$0xff]
      %v2141 = vld [vmem:[#allocation2 + $0x28] sm:$0xff]
      %v2142 = vld [vmem:[#allocation2 + $0x30] sm:$0xff]
      %v2143 = vld [vmem:[#allocation2 + $0x38] sm:$0xff]
      %v2144 = vld [vmem:[#allocation2 + $0x40] sm:$0xff]
      %v2145 = vld [vmem:[#allocation2 + $0x48] sm:$0xff]
      %v2146 = vld [vmem:[#allocation2 + $0x50] sm:$0xff]
      %v2147 = vld [vmem:[#allocation2 + $0x58] sm:$0xff]
      %v2148 = vld [vmem:[#allocation2 + $0x60] sm:$0xff]
      %v2149 = vld [vmem:[#allocation2 + $0x68] sm:$0xff]
      %v2150 = vld [vmem:[#allocation2 + $0x70] sm:$0xff]
      %v2151 = vld [vmem:[#allocation2 + $0x78] sm:$0xff]
      %v2152 = vld [vmem:[#allocation2 + $0x80] sm:$0xff]
      %v2153 = vld [vmem:[#allocation2 + $0x88] sm:$0xff]
      %v2154 = vld [vmem:[#allocation2 + $0x90] sm:$0xff]
      %v2155 = vld [vmem:[#allocation2 + $0x98] sm:$0xff]
      %v2156 = vld [vmem:[#allocation2 + $0xa0] sm:$0xff]
      %v2157 = vld [vmem:[#allocation2 + $0xa8] sm:$0xff]
      %v2158 = vld [vmem:[#allocation2 + $0xb0] sm:$0xff]
      %v2159 = vld [vmem:[#allocation2 + $0xb8] sm:$0xff]
      %v2160 = vld [vmem:[#allocation2 + $0xc0] sm:$0xff]
      %v2161 = vld [vmem:[#allocation2 + $0xc8] sm:$0xff]
      %v2162 = vld [vmem:[#allocation2 + $0xd0] sm:$0xff]
      %v2163 = vld [vmem:[#allocation2 + $0xd8] sm:$0xff]
      %v2164 = vld [vmem:[#allocation2 + $0xe0] sm:$0xff]
      %v2165 = vld [vmem:[#allocation2 + $0xe8] sm:$0xff]
      %v2166 = vld [vmem:[#allocation2 + $0xf0] sm:$0xff]
      %v2167 = vld [vmem:[#allocation2 + $0xf8] sm:$0xff]
      %v2168 = vld [vmem:[%s2] sm:$0x1]
      %v2170 = vperm.slane %v2168, 0
      %v2172 = vadd.f32 %v2136, %v2170
      %v2173 = vadd.f32 %v2137, %v2170
      %v2174 = vadd.f32 %v2138, %v2170
      %v2175 = vadd.f32 %v2139, %v2170
      %v2176 = vadd.f32 %v2140, %v2170
      %v2177 = vadd.f32 %v2141, %v2170
      %v2178 = vadd.f32 %v2142, %v2170
      %v2179 = vadd.f32 %v2143, %v2170
      %v2180 = vadd.f32 %v2144, %v2170
      %v2181 = vadd.f32 %v2145, %v2170
      %v2182 = vadd.f32 %v2146, %v2170
      %v2183 = vadd.f32 %v2147, %v2170
      %v2184 = vadd.f32 %v2148, %v2170
      %v2185 = vadd.f32 %v2149, %v2170
      %v2186 = vadd.f32 %v2150, %v2170
      %v2187 = vadd.f32 %v2151, %v2170
      %v2188 = vadd.f32 %v2152, %v2170
      %v2189 = vadd.f32 %v2153, %v2170
      %v2190 = vadd.f32 %v2154, %v2170
      %v2191 = vadd.f32 %v2155, %v2170
      %v2192 = vadd.f32 %v2156, %v2170
      %v2193 = vadd.f32 %v2157, %v2170
      %v2194 = vadd.f32 %v2158, %v2170
      %v2195 = vadd.f32 %v2159, %v2170
      %v2196 = vadd.f32 %v2160, %v2170
      %v2197 = vadd.f32 %v2161, %v2170
      %v2198 = vadd.f32 %v2162, %v2170
      %v2199 = vadd.f32 %v2163, %v2170
      %v2200 = vadd.f32 %v2164, %v2170
      %v2201 = vadd.f32 %v2165, %v2170
      %v2202 = vadd.f32 %v2166, %v2170
      %v2203 = vadd.f32 %v2167, %v2170
      %v2204 = vmax.f32 %v2172, 0.0
      %v2205 = vmax.f32 %v2173, 0.0
      %v2206 = vmax.f32 %v2174, 0.0
      %v2207 = vmax.f32 %v2175, 0.0
      %v2208 = vmax.f32 %v2176, 0.0
      %v2209 = vmax.f32 %v2177, 0.0
      %v2210 = vmax.f32 %v2178, 0.0
      %v2211 = vmax.f32 %v2179, 0.0
      %v2212 = vmax.f32 %v2180, 0.0
      %v2213 = vmax.f32 %v2181, 0.0
      %v2214 = vmax.f32 %v2182, 0.0
      %v2215 = vmax.f32 %v2183, 0.0
      %v2216 = vmax.f32 %v2184, 0.0
      %v2217 = vmax.f32 %v2185, 0.0
      %v2218 = vmax.f32 %v2186, 0.0
      %v2219 = vmax.f32 %v2187, 0.0
      %v2220 = vmax.f32 %v2188, 0.0
      %v2221 = vmax.f32 %v2189, 0.0
      %v2222 = vmax.f32 %v2190, 0.0
      %v2223 = vmax.f32 %v2191, 0.0
      %v2224 = vmax.f32 %v2192, 0.0
      %v2225 = vmax.f32 %v2193, 0.0
      %v2226 = vmax.f32 %v2194, 0.0
      %v2227 = vmax.f32 %v2195, 0.0
      %v2228 = vmax.f32 %v2196, 0.0
      %v2229 = vmax.f32 %v2197, 0.0
      %v2230 = vmax.f32 %v2198, 0.0
      %v2231 = vmax.f32 %v2199, 0.0
      %v2232 = vmax.f32 %v2200, 0.0
      %v2233 = vmax.f32 %v2201, 0.0
      %v2234 = vmax.f32 %v2202, 0.0
      %v2235 = vmax.f32 %v2203, 0.0
      %v2236 = vrot.slane %v2204, 7
      %v2237 = vrot.slane %v2206, 7
      %v2238 = vrot.slane %v2208, 7
      %v2239 = vrot.slane %v2210, 7
      %v2240 = vrot.slane %v2212, 7
      %v2241 = vrot.slane %v2214, 7
      %v2242 = vrot.slane %v2216, 7
      %v2243 = vrot.slane %v2218, 7
      %v2244 = vrot.slane %v2220, 7
      %v2245 = vrot.slane %v2222, 7
      %v2246 = vrot.slane %v2224, 7
      %v2247 = vrot.slane %v2226, 7
      %v2248 = vrot.slane %v2228, 7
      %v2249 = vrot.slane %v2230, 7
      %v2250 = vrot.slane %v2232, 7
      %v2251 = vrot.slane %v2234, 7
      %v2252 = vrot.slane %v2205, 7
      %v2253 = vrot.slane %v2207, 7
      %v2254 = vrot.slane %v2209, 7
      %v2255 = vrot.slane %v2211, 7
      %v2256 = vrot.slane %v2213, 7
      %v2257 = vrot.slane %v2215, 7
      %v2258 = vrot.slane %v2217, 7
      %v2259 = vrot.slane %v2219, 7
      %v2260 = vrot.slane %v2221, 7
      %v2261 = vrot.slane %v2223, 7
      %v2262 = vrot.slane %v2225, 7
      %v2263 = vrot.slane %v2227, 7
      %v2264 = vrot.slane %v2229, 7
      %v2265 = vrot.slane %v2231, 7
      %v2266 = vrot.slane %v2233, 7
      %v2267 = vrot.slane %v2235, 7
      %v2268 = vsel %vm329, %v2236, %v2252
      %v2269 = vsel %vm329, %v2237, %v2253
      %v2270 = vsel %vm329, %v2238, %v2254
      %v2271 = vsel %vm329, %v2239, %v2255
      %v2272 = vsel %vm329, %v2240, %v2256
      %v2273 = vsel %vm329, %v2241, %v2257
      %v2274 = vsel %vm329, %v2242, %v2258
      %v2275 = vsel %vm329, %v2243, %v2259
      %v2276 = vsel %vm329, %v2244, %v2260
      %v2277 = vsel %vm329, %v2245, %v2261
      %v2278 = vsel %vm329, %v2246, %v2262
      %v2279 = vsel %vm329, %v2247, %v2263
      %v2280 = vsel %vm329, %v2248, %v2264
      %v2281 = vsel %vm329, %v2249, %v2265
      %v2282 = vsel %vm329, %v2250, %v2266
      %v2283 = vsel %vm329, %v2251, %v2267
      %v2284 = vsel %vm329, %v2252, %v2236
      %v2285 = vsel %vm329, %v2253, %v2237
      %v2286 = vsel %vm329, %v2254, %v2238
      %v2287 = vsel %vm329, %v2255, %v2239
      %v2288 = vsel %vm329, %v2256, %v2240
      %v2289 = vsel %vm329, %v2257, %v2241
      %v2290 = vsel %vm329, %v2258, %v2242
      %v2291 = vsel %vm329, %v2259, %v2243
      %v2292 = vsel %vm329, %v2260, %v2244
      %v2293 = vsel %vm329, %v2261, %v2245
      %v2294 = vsel %vm329, %v2262, %v2246
      %v2295 = vsel %vm329, %v2263, %v2247
      %v2296 = vsel %vm329, %v2264, %v2248
      %v2297 = vsel %vm329, %v2265, %v2249
      %v2298 = vsel %vm329, %v2266, %v2250
      %v2299 = vsel %vm329, %v2267, %v2251
      %v2300 = vrot.slane %v2204, 1
      %v2301 = vrot.slane %v2206, 1
      %v2302 = vrot.slane %v2208, 1
      %v2303 = vrot.slane %v2210, 1
      %v2304 = vrot.slane %v2212, 1
      %v2305 = vrot.slane %v2214, 1
      %v2306 = vrot.slane %v2216, 1
      %v2307 = vrot.slane %v2218, 1
      %v2308 = vrot.slane %v2220, 1
      %v2309 = vrot.slane %v2222, 1
      %v2310 = vrot.slane %v2224, 1
      %v2311 = vrot.slane %v2226, 1
      %v2312 = vrot.slane %v2228, 1
      %v2313 = vrot.slane %v2230, 1
      %v2314 = vrot.slane %v2232, 1
      %v2315 = vrot.slane %v2234, 1
      %v2316 = vrot.slane %v2205, 1
      %v2317 = vrot.slane %v2207, 1
      %v2318 = vrot.slane %v2209, 1
      %v2319 = vrot.slane %v2211, 1
      %v2320 = vrot.slane %v2213, 1
      %v2321 = vrot.slane %v2215, 1
      %v2322 = vrot.slane %v2217, 1
      %v2323 = vrot.slane %v2219, 1
      %v2324 = vrot.slane %v2221, 1
      %v2325 = vrot.slane %v2223, 1
      %v2326 = vrot.slane %v2225, 1
      %v2327 = vrot.slane %v2227, 1
      %v2328 = vrot.slane %v2229, 1
      %v2329 = vrot.slane %v2231, 1
      %v2330 = vrot.slane %v2233, 1
      %v2331 = vrot.slane %v2235, 1
      %v2332 = vsel %vm394, %v2300, %v2316
      %v2333 = vsel %vm394, %v2301, %v2317
      %v2334 = vsel %vm394, %v2302, %v2318
      %v2335 = vsel %vm394, %v2303, %v2319
      %v2336 = vsel %vm394, %v2304, %v2320
      %v2337 = vsel %vm394, %v2305, %v2321
      %v2338 = vsel %vm394, %v2306, %v2322
      %v2339 = vsel %vm394, %v2307, %v2323
      %v2340 = vsel %vm394, %v2308, %v2324
      %v2341 = vsel %vm394, %v2309, %v2325
      %v2342 = vsel %vm394, %v2310, %v2326
      %v2343 = vsel %vm394, %v2311, %v2327
      %v2344 = vsel %vm394, %v2312, %v2328
      %v2345 = vsel %vm394, %v2313, %v2329
      %v2346 = vsel %vm394, %v2314, %v2330
      %v2347 = vsel %vm394, %v2315, %v2331
      %v2348 = vsel %vm394, %v2316, %v2300
      %v2349 = vsel %vm394, %v2317, %v2301
      %v2350 = vsel %vm394, %v2318, %v2302
      %v2351 = vsel %vm394, %v2319, %v2303
      %v2352 = vsel %vm394, %v2320, %v2304
      %v2353 = vsel %vm394, %v2321, %v2305
      %v2354 = vsel %vm394, %v2322, %v2306
      %v2355 = vsel %vm394, %v2323, %v2307
      %v2356 = vsel %vm394, %v2324, %v2308
      %v2357 = vsel %vm394, %v2325, %v2309
      %v2358 = vsel %vm394, %v2326, %v2310
      %v2359 = vsel %vm394, %v2327, %v2311
      %v2360 = vsel %vm394, %v2328, %v2312
      %v2361 = vsel %vm394, %v2329, %v2313
      %v2362 = vsel %vm394, %v2330, %v2314
      %v2363 = vsel %vm394, %v2331, %v2315
      %s2364 = scalar_lea.vmem %s3, 24
      %v2365 = vld [vmem:[%s2364] sm:$0xff]
      %v2366 = vld [vmem:[%s2364 + $0x8] sm:$0xff]
      %v2367 = vld [vmem:[%s2364 + $0x10] sm:$0xff]
      %2400 = vrot.lane.b32.xlu0 %v2204, 8
      %v2401 = vpop.permute.xlu0 %2400
      %2402 = vrot.lane.b32.xlu0 %v2205, 8
      %v2403 = vpop.permute.xlu0 %2402
      %2404 = vrot.lane.b32.xlu0 %v2206, 8
      %v2405 = vpop.permute.xlu0 %2404
      %2406 = vrot.lane.b32.xlu0 %v2207, 8
      %v2407 = vpop.permute.xlu0 %2406
      %2408 = vrot.lane.b32.xlu0 %v2208, 8
      %v2409 = vpop.permute.xlu0 %2408
      %2410 = vrot.lane.b32.xlu0 %v2209, 8
      %v2411 = vpop.permute.xlu0 %2410
      %2412 = vrot.lane.b32.xlu0 %v2210, 8
      %v2413 = vpop.permute.xlu0 %2412
      %2414 = vrot.lane.b32.xlu0 %v2211, 8
      %v2415 = vpop.permute.xlu0 %2414
      %2416 = vrot.lane.b32.xlu0 %v2212, 8
      %v2417 = vpop.permute.xlu0 %2416
      %2418 = vrot.lane.b32.xlu0 %v2213, 8
      %v2419 = vpop.permute.xlu0 %2418
      %2420 = vrot.lane.b32.xlu0 %v2214, 8
      %v2421 = vpop.permute.xlu0 %2420
      %2422 = vrot.lane.b32.xlu0 %v2215, 8
      %v2423 = vpop.permute.xlu0 %2422
      %2424 = vrot.lane.b32.xlu0 %v2216, 8
      %v2425 = vpop.permute.xlu0 %2424
      %2426 = vrot.lane.b32.xlu0 %v2217, 8
      %v2427 = vpop.permute.xlu0 %2426
      %2428 = vrot.lane.b32.xlu0 %v2218, 8
      %v2429 = vpop.permute.xlu0 %2428
      %2430 = vrot.lane.b32.xlu0 %v2219, 8
      %v2431 = vpop.permute.xlu0 %2430
      %2432 = vrot.lane.b32.xlu0 %v2220, 8
      %v2433 = vpop.permute.xlu0 %2432
      %2434 = vrot.lane.b32.xlu0 %v2221, 8
      %v2435 = vpop.permute.xlu0 %2434
      %2436 = vrot.lane.b32.xlu0 %v2222, 8
      %v2437 = vpop.permute.xlu0 %2436
      %2438 = vrot.lane.b32.xlu0 %v2223, 8
      %v2439 = vpop.permute.xlu0 %2438
      %2440 = vrot.lane.b32.xlu0 %v2224, 8
      %v2441 = vpop.permute.xlu0 %2440
      %2442 = vrot.lane.b32.xlu0 %v2225, 8
      %v2443 = vpop.permute.xlu0 %2442
      %2444 = vrot.lane.b32.xlu0 %v2226, 8
      %v2445 = vpop.permute.xlu0 %2444
      %2446 = vrot.lane.b32.xlu0 %v2227, 8
      %v2447 = vpop.permute.xlu0 %2446
      %2448 = vrot.lane.b32.xlu0 %v2228, 8
      %v2449 = vpop.permute.xlu0 %2448
      %2450 = vrot.lane.b32.xlu0 %v2229, 8
      %v2451 = vpop.permute.xlu0 %2450
      %2452 = vrot.lane.b32.xlu0 %v2230, 8
      %v2453 = vpop.permute.xlu0 %2452
      %2454 = vrot.lane.b32.xlu0 %v2231, 8
      %v2455 = vpop.permute.xlu0 %2454
      %2456 = vrot.lane.b32.xlu0 %v2232, 8
      %v2457 = vpop.permute.xlu0 %2456
      %2458 = vrot.lane.b32.xlu0 %v2233, 8
      %v2459 = vpop.permute.xlu0 %2458
      %2460 = vrot.lane.b32.xlu0 %v2234, 8
      %v2461 = vpop.permute.xlu0 %2460
      %2462 = vrot.lane.b32.xlu0 %v2235, 8
      %v2463 = vpop.permute.xlu0 %2462
      %2528 = vrot.lane.b32.xlu0 %v2332, 16
      %v2529 = vpop.permute.xlu0 %2528
      %2530 = vrot.lane.b32.xlu0 %v2348, 16
      %v2531 = vpop.permute.xlu0 %2530
      %2532 = vrot.lane.b32.xlu0 %v2333, 16
      %v2533 = vpop.permute.xlu0 %2532
      %2534 = vrot.lane.b32.xlu0 %v2349, 16
      %v2535 = vpop.permute.xlu0 %2534
      %2536 = vrot.lane.b32.xlu0 %v2334, 16
      %v2537 = vpop.permute.xlu0 %2536
      %2538 = vrot.lane.b32.xlu0 %v2350, 16
      %v2539 = vpop.permute.xlu0 %2538
      %2540 = vrot.lane.b32.xlu0 %v2335, 16
      %v2541 = vpop.permute.xlu0 %2540
      %2542 = vrot.lane.b32.xlu0 %v2351, 16
      %v2543 = vpop.permute.xlu0 %2542
      %2544 = vrot.lane.b32.xlu0 %v2336, 16
      %v2545 = vpop.permute.xlu0 %2544
      %2546 = vrot.lane.b32.xlu0 %v2352, 16
      %v2547 = vpop.permute.xlu0 %2546
      %2548 = vrot.lane.b32.xlu0 %v2337, 16
      %v2549 = vpop.permute.xlu0 %2548
      %2550 = vrot.lane.b32.xlu0 %v2353, 16
      %v2551 = vpop.permute.xlu0 %2550
      %2552 = vrot.lane.b32.xlu0 %v2338, 16
      %v2553 = vpop.permute.xlu0 %2552
      %2554 = vrot.lane.b32.xlu0 %v2354, 16
      %v2555 = vpop.permute.xlu0 %2554
      %2556 = vrot.lane.b32.xlu0 %v2339, 16
      %v2557 = vpop.permute.xlu0 %2556
      %2558 = vrot.lane.b32.xlu0 %v2355, 16
      %v2559 = vpop.permute.xlu0 %2558
      %2560 = vrot.lane.b32.xlu0 %v2340, 16
      %v2561 = vpop.permute.xlu0 %2560
      %2562 = vrot.lane.b32.xlu0 %v2356, 16
      %v2563 = vpop.permute.xlu0 %2562
      %2564 = vrot.lane.b32.xlu0 %v2341, 16
      %v2565 = vpop.permute.xlu0 %2564
      %2566 = vrot.lane.b32.xlu0 %v2357, 16
      %v2567 = vpop.permute.xlu0 %2566
      %2568 = vrot.lane.b32.xlu0 %v2342, 16
      %v2569 = vpop.permute.xlu0 %2568
      %2570 = vrot.lane.b32.xlu0 %v2358, 16
      %v2571 = vpop.permute.xlu0 %2570
      %2572 = vrot.lane.b32.xlu0 %v2343, 16
      %v2573 = vpop.permute.xlu0 %2572
      %2574 = vrot.lane.b32.xlu0 %v2359, 16
      %v2575 = vpop.permute.xlu0 %2574
      %2576 = vrot.lane.b32.xlu0 %v2344, 16
      %v2577 = vpop.permute.xlu0 %2576
      %2578 = vrot.lane.b32.xlu0 %v2360, 16
      %v2579 = vpop.permute.xlu0 %2578
      %2580 = vrot.lane.b32.xlu0 %v2345, 16
      %v2581 = vpop.permute.xlu0 %2580
      %2582 = vrot.lane.b32.xlu0 %v2361, 16
      %v2583 = vpop.permute.xlu0 %2582
      %2584 = vrot.lane.b32.xlu0 %v2346, 16
      %v2585 = vpop.permute.xlu0 %2584
      %2586 = vrot.lane.b32.xlu0 %v2362, 16
      %v2587 = vpop.permute.xlu0 %2586
      %2588 = vrot.lane.b32.xlu0 %v2347, 16
      %v2589 = vpop.permute.xlu0 %2588
      %2590 = vrot.lane.b32.xlu0 %v2363, 16
      %v2591 = vpop.permute.xlu0 %2590
      %v2624 = vsel %vm719, %v2284, %v2401
      %v2625 = vsel %vm719, %v2268, %v2403
      %v2626 = vsel %vm719, %v2285, %v2405
      %v2627 = vsel %vm719, %v2269, %v2407
      %v2628 = vsel %vm719, %v2286, %v2409
      %v2629 = vsel %vm719, %v2270, %v2411
      %v2630 = vsel %vm719, %v2287, %v2413
      %v2631 = vsel %vm719, %v2271, %v2415
      %v2632 = vsel %vm719, %v2288, %v2417
      %v2633 = vsel %vm719, %v2272, %v2419
      %v2634 = vsel %vm719, %v2289, %v2421
      %v2635 = vsel %vm719, %v2273, %v2423
      %v2636 = vsel %vm719, %v2290, %v2425
      %v2637 = vsel %vm719, %v2274, %v2427
      %v2638 = vsel %vm719, %v2291, %v2429
      %v2639 = vsel %vm719, %v2275, %v2431
      %v2640 = vsel %vm719, %v2292, %v2433
      %v2641 = vsel %vm719, %v2276, %v2435
      %v2642 = vsel %vm719, %v2293, %v2437
      %v2643 = vsel %vm719, %v2277, %v2439
      %v2644 = vsel %vm719, %v2294, %v2441
      %v2645 = vsel %vm719, %v2278, %v2443
      %v2646 = vsel %vm719, %v2295, %v2445
      %v2647 = vsel %vm719, %v2279, %v2447
      %v2648 = vsel %vm719, %v2296, %v2449
      %v2649 = vsel %vm719, %v2280, %v2451
      %v2650 = vsel %vm719, %v2297, %v2453
      %v2651 = vsel %vm719, %v2281, %v2455
      %v2652 = vsel %vm719, %v2298, %v2457
      %v2653 = vsel %vm719, %v2282, %v2459
      %v2654 = vsel %vm719, %v2299, %v2461
      %v2655 = vsel %vm719, %v2283, %v2463
      %vm2656 = vcmask 130048
      %v2657 = vsel %vm2656, %v2624, %v2529
      %v2658 = vsel %vm2656, %v2625, %v2531
      %v2659 = vsel %vm2656, %v2626, %v2533
      %v2660 = vsel %vm2656, %v2627, %v2535
      %v2661 = vsel %vm2656, %v2628, %v2537
      %v2662 = vsel %vm2656, %v2629, %v2539
      %v2663 = vsel %vm2656, %v2630, %v2541
      %v2664 = vsel %vm2656, %v2631, %v2543
      %v2665 = vsel %vm2656, %v2632, %v2545
      %v2666 = vsel %vm2656, %v2633, %v2547
      %v2667 = vsel %vm2656, %v2634, %v2549
      %v2668 = vsel %vm2656, %v2635, %v2551
      %v2669 = vsel %vm2656, %v2636, %v2553
      %v2670 = vsel %vm2656, %v2637, %v2555
      %v2671 = vsel %vm2656, %v2638, %v2557
      %v2672 = vsel %vm2656, %v2639, %v2559
      %v2673 = vsel %vm2656, %v2640, %v2561
      %v2674 = vsel %vm2656, %v2641, %v2563
      %v2675 = vsel %vm2656, %v2642, %v2565
      %v2676 = vsel %vm2656, %v2643, %v2567
      %v2677 = vsel %vm2656, %v2644, %v2569
      %v2678 = vsel %vm2656, %v2645, %v2571
      %v2679 = vsel %vm2656, %v2646, %v2573
      %v2680 = vsel %vm2656, %v2647, %v2575
      %v2681 = vsel %vm2656, %v2648, %v2577
      %v2682 = vsel %vm2656, %v2649, %v2579
      %v2683 = vsel %vm2656, %v2650, %v2581
      %v2684 = vsel %vm2656, %v2651, %v2583
      %v2685 = vsel %vm2656, %v2652, %v2585
      %v2686 = vsel %vm2656, %v2653, %v2587
      %v2687 = vsel %vm2656, %v2654, %v2589
      %v2688 = vsel %vm2656, %v2655, %v2591
      %vm2689 = vcmask 195584
      %v2691 = vsel %vm2689, %v2657, 0
      %v2694 = vsel %vm2689, %v2658, 0
      %v2697 = vsel %vm2689, %v2659, 0
      %v2700 = vsel %vm2689, %v2660, 0
      %v2703 = vsel %vm2689, %v2661, 0
      %v2706 = vsel %vm2689, %v2662, 0
      %v2709 = vsel %vm2689, %v2663, 0
      %v2712 = vsel %vm2689, %v2664, 0
      %v2715 = vsel %vm2689, %v2665, 0
      %v2718 = vsel %vm2689, %v2666, 0
      %v2721 = vsel %vm2689, %v2667, 0
      %v2724 = vsel %vm2689, %v2668, 0
      %v2727 = vsel %vm2689, %v2669, 0
      %v2730 = vsel %vm2689, %v2670, 0
      %v2733 = vsel %vm2689, %v2671, 0
      %v2736 = vsel %vm2689, %v2672, 0
      %v2739 = vsel %vm2689, %v2673, 0
      %v2742 = vsel %vm2689, %v2674, 0
      %v2745 = vsel %vm2689, %v2675, 0
      %v2748 = vsel %vm2689, %v2676, 0
      %v2751 = vsel %vm2689, %v2677, 0
      %v2754 = vsel %vm2689, %v2678, 0
      %v2757 = vsel %vm2689, %v2679, 0
      %v2760 = vsel %vm2689, %v2680, 0
      %v2763 = vsel %vm2689, %v2681, 0
      %v2766 = vsel %vm2689, %v2682, 0
      %v2769 = vsel %vm2689, %v2683, 0
      %v2772 = vsel %vm2689, %v2684, 0
      %v2775 = vsel %vm2689, %v2685, 0
      %v2778 = vsel %vm2689, %v2686, 0
      %v2781 = vsel %vm2689, %v2687, 0
      %v2784 = vsel %vm2689, %v2688, 0
      %2786 = vmatpush.msra.mxu0 0.0
      %2787 = vmatpush.msra.mxu0 0.0
      %2788 = vmatpush.msra.mxu0 0.0
      %2789 = vmatpush.msra.mxu0 0.0
      %2790 = vmatpush.msra.mxu0 0.0
      %2791 = vmatpush.msra.mxu0 0.0
      %2792 = vmatpush.msra.mxu0 0.0
      %2793 = vmatpush.msra.mxu0 0.0
      %2794 = vmatpush.msra.mxu0 0.0
      %2795 = vmatpush.msra.mxu0 0.0
      %2796 = vmatpush.msra.mxu0 0.0
      %2797 = vmatpush.msra.mxu0 0.0
      %2798 = vmatpush.msra.mxu0 0.0
      %2799 = vmatpush.msra.mxu0 %v2367
      %2800 = vmatpush.msra.mxu0 %v2366
      %2801 = vmatpush.msra.mxu0 %v2365
      %2802 = vmatmul.f32.gmra.mxu0 %v2691
      %v2803 = vpop.f32.mrf.mxu0
      %v2804 = vadd.f32 0.0, %v2803
      %2805 = vmatmul.f32.gmra.mxu0 %v2694
      %v2806 = vpop.f32.mrf.mxu0
      %v2807 = vadd.f32 0.0, %v2806
      %2808 = vmatmul.f32.gmra.mxu0 %v2697
      %v2809 = vpop.f32.mrf.mxu0
      %v2810 = vadd.f32 0.0, %v2809
      %2811 = vmatmul.f32.gmra.mxu0 %v2700
      %v2812 = vpop.f32.mrf.mxu0
      %v2813 = vadd.f32 0.0, %v2812
      %2814 = vmatmul.f32.gmra.mxu0 %v2703
      %v2815 = vpop.f32.mrf.mxu0
      %v2816 = vadd.f32 0.0, %v2815
      %2817 = vmatmul.f32.gmra.mxu0 %v2706
      %v2818 = vpop.f32.mrf.mxu0
      %v2819 = vadd.f32 0.0, %v2818
      %2820 = vmatmul.f32.gmra.mxu0 %v2709
      %v2821 = vpop.f32.mrf.mxu0
      %v2822 = vadd.f32 0.0, %v2821
      %2823 = vmatmul.f32.gmra.mxu0 %v2712
      %v2824 = vpop.f32.mrf.mxu0
      %v2825 = vadd.f32 0.0, %v2824
      %2826 = vmatmul.f32.gmra.mxu0 %v2715
      %v2827 = vpop.f32.mrf.mxu0
      %v2828 = vadd.f32 0.0, %v2827
      %2829 = vmatmul.f32.gmra.mxu0 %v2718
      %v2830 = vpop.f32.mrf.mxu0
      %v2831 = vadd.f32 0.0, %v2830
      %2832 = vmatmul.f32.gmra.mxu0 %v2721
      %v2833 = vpop.f32.mrf.mxu0
      %v2834 = vadd.f32 0.0, %v2833
      %2835 = vmatmul.f32.gmra.mxu0 %v2724
      %v2836 = vpop.f32.mrf.mxu0
      %v2837 = vadd.f32 0.0, %v2836
      %2838 = vmatmul.f32.gmra.mxu0 %v2727
      %v2839 = vpop.f32.mrf.mxu0
      %v2840 = vadd.f32 0.0, %v2839
      %2841 = vmatmul.f32.gmra.mxu0 %v2730
      %v2842 = vpop.f32.mrf.mxu0
      %v2843 = vadd.f32 0.0, %v2842
      %2844 = vmatmul.f32.gmra.mxu0 %v2733
      %v2845 = vpop.f32.mrf.mxu0
      %v2846 = vadd.f32 0.0, %v2845
      %2847 = vmatmul.f32.gmra.mxu0 %v2736
      %v2848 = vpop.f32.mrf.mxu0
      %v2849 = vadd.f32 0.0, %v2848
      %2850 = vmatmul.f32.gmra.mxu0 %v2739
      %v2851 = vpop.f32.mrf.mxu0
      %v2852 = vadd.f32 0.0, %v2851
      %2853 = vmatmul.f32.gmra.mxu0 %v2742
      %v2854 = vpop.f32.mrf.mxu0
      %v2855 = vadd.f32 0.0, %v2854
      %2856 = vmatmul.f32.gmra.mxu0 %v2745
      %v2857 = vpop.f32.mrf.mxu0
      %v2858 = vadd.f32 0.0, %v2857
      %2859 = vmatmul.f32.gmra.mxu0 %v2748
      %v2860 = vpop.f32.mrf.mxu0
      %v2861 = vadd.f32 0.0, %v2860
      %2862 = vmatmul.f32.gmra.mxu0 %v2751
      %v2863 = vpop.f32.mrf.mxu0
      %v2864 = vadd.f32 0.0, %v2863
      %2865 = vmatmul.f32.gmra.mxu0 %v2754
      %v2866 = vpop.f32.mrf.mxu0
      %v2867 = vadd.f32 0.0, %v2866
      %2868 = vmatmul.f32.gmra.mxu0 %v2757
      %v2869 = vpop.f32.mrf.mxu0
      %v2870 = vadd.f32 0.0, %v2869
      %2871 = vmatmul.f32.gmra.mxu0 %v2760
      %v2872 = vpop.f32.mrf.mxu0
      %v2873 = vadd.f32 0.0, %v2872
      %2874 = vmatmul.f32.gmra.mxu0 %v2763
      %v2875 = vpop.f32.mrf.mxu0
      %v2876 = vadd.f32 0.0, %v2875
      %2877 = vmatmul.f32.gmra.mxu0 %v2766
      %v2878 = vpop.f32.mrf.mxu0
      %v2879 = vadd.f32 0.0, %v2878
      %2880 = vmatmul.f32.gmra.mxu0 %v2769
      %v2881 = vpop.f32.mrf.mxu0
      %v2882 = vadd.f32 0.0, %v2881
      %2883 = vmatmul.f32.gmra.mxu0 %v2772
      %v2884 = vpop.f32.mrf.mxu0
      %v2885 = vadd.f32 0.0, %v2884
      %2886 = vmatmul.f32.gmra.mxu0 %v2775
      %v2887 = vpop.f32.mrf.mxu0
      %v2888 = vadd.f32 0.0, %v2887
      %2889 = vmatmul.f32.gmra.mxu0 %v2778
      %v2890 = vpop.f32.mrf.mxu0
      %v2891 = vadd.f32 0.0, %v2890
      %2892 = vmatmul.f32.gmra.mxu0 %v2781
      %v2893 = vpop.f32.mrf.mxu0
      %v2894 = vadd.f32 0.0, %v2893
      %2895 = vmatmul.f32.gmra.mxu0 %v2784
      %v2896 = vpop.f32.mrf.mxu0
      %v2897 = vadd.f32 0.0, %v2896
      %2898 = vdwg.mxu0
      %2899 = vst.msk [vmem:[#allocation2] sm:$0xff] %vm719, %v2804
      %2900 = vst.msk [vmem:[#allocation2 + $0x8] sm:$0xff] %vm719, %v2807
      %2901 = vst.msk [vmem:[#allocation2 + $0x10] sm:$0xff] %vm719, %v2810
      %2902 = vst.msk [vmem:[#allocation2 + $0x18] sm:$0xff] %vm719, %v2813
      %2903 = vst.msk [vmem:[#allocation2 + $0x20] sm:$0xff] %vm719, %v2816
      %2904 = vst.msk [vmem:[#allocation2 + $0x28] sm:$0xff] %vm719, %v2819
      %2905 = vst.msk [vmem:[#allocation2 + $0x30] sm:$0xff] %vm719, %v2822
      %2906 = vst.msk [vmem:[#allocation2 + $0x38] sm:$0xff] %vm719, %v2825
      %2907 = vst.msk [vmem:[#allocation2 + $0x40] sm:$0xff] %vm719, %v2828
      %2908 = vst.msk [vmem:[#allocation2 + $0x48] sm:$0xff] %vm719, %v2831
      %2909 = vst.msk [vmem:[#allocation2 + $0x50] sm:$0xff] %vm719, %v2834
      %2910 = vst.msk [vmem:[#allocation2 + $0x58] sm:$0xff] %vm719, %v2837
      %2911 = vst.msk [vmem:[#allocation2 + $0x60] sm:$0xff] %vm719, %v2840
      %2912 = vst.msk [vmem:[#allocation2 + $0x68] sm:$0xff] %vm719, %v2843
      %2913 = vst.msk [vmem:[#allocation2 + $0x70] sm:$0xff] %vm719, %v2846
      %2914 = vst.msk [vmem:[#allocation2 + $0x78] sm:$0xff] %vm719, %v2849
      %2915 = vst.msk [vmem:[#allocation2 + $0x80] sm:$0xff] %vm719, %v2852
      %2916 = vst.msk [vmem:[#allocation2 + $0x88] sm:$0xff] %vm719, %v2855
      %2917 = vst.msk [vmem:[#allocation2 + $0x90] sm:$0xff] %vm719, %v2858
      %2918 = vst.msk [vmem:[#allocation2 + $0x98] sm:$0xff] %vm719, %v2861
      %2919 = vst.msk [vmem:[#allocation2 + $0xa0] sm:$0xff] %vm719, %v2864
      %2920 = vst.msk [vmem:[#allocation2 + $0xa8] sm:$0xff] %vm719, %v2867
      %2921 = vst.msk [vmem:[#allocation2 + $0xb0] sm:$0xff] %vm719, %v2870
      %2922 = vst.msk [vmem:[#allocation2 + $0xb8] sm:$0xff] %vm719, %v2873
      %2923 = vst.msk [vmem:[#allocation2 + $0xc0] sm:$0xff] %vm719, %v2876
      %2924 = vst.msk [vmem:[#allocation2 + $0xc8] sm:$0xff] %vm719, %v2879
      %2925 = vst.msk [vmem:[#allocation2 + $0xd0] sm:$0xff] %vm719, %v2882
      %2926 = vst.msk [vmem:[#allocation2 + $0xd8] sm:$0xff] %vm719, %v2885
      %2927 = vst.msk [vmem:[#allocation2 + $0xe0] sm:$0xff] %vm719, %v2888
      %2928 = vst.msk [vmem:[#allocation2 + $0xe8] sm:$0xff] %vm719, %v2891
      %2929 = vst.msk [vmem:[#allocation2 + $0xf0] sm:$0xff] %vm719, %v2894
      %2930 = vst.msk [vmem:[#allocation2 + $0xf8] sm:$0xff] %vm719, %v2897
      %v2931 = vrot.slane %v2205, 7
      %v2932 = vrot.slane %v2207, 6
      %v2933 = vsel %vm1000, %v2932, %v2931
      %v2934 = vrot.slane %v2209, 5
      %v2935 = vsel %vm1003, %v2934, %v2933
      %v2936 = vrot.slane %v2211, 4
      %v2937 = vsel %vm1006, %v2936, %v2935
      %v2938 = vrot.slane %v2213, 3
      %v2939 = vsel %vm1009, %v2938, %v2937
      %v2940 = vrot.slane %v2215, 2
      %v2941 = vsel %vm1012, %v2940, %v2939
      %v2942 = vrot.slane %v2217, 1
      %v2943 = vsel %vm1015, %v2942, %v2941
      %v2944 = vsel %vm1017, %v2219, %v2943
      %v2945 = vrot.slane %v2221, 7
      %v2946 = vrot.slane %v2223, 6
      %v2947 = vsel %vm1000, %v2946, %v2945
      %v2948 = vrot.slane %v2225, 5
      %v2949 = vsel %vm1003, %v2948, %v2947
      %v2950 = vrot.slane %v2227, 4
      %v2951 = vsel %vm1006, %v2950, %v2949
      %v2952 = vrot.slane %v2229, 3
      %v2953 = vsel %vm1009, %v2952, %v2951
      %v2954 = vrot.slane %v2231, 2
      %v2955 = vsel %vm1012, %v2954, %v2953
      %v2956 = vrot.slane %v2233, 1
      %v2957 = vsel %vm1015, %v2956, %v2955
      %v2958 = vsel %vm1017, %v2235, %v2957
      %v2959 = vsel %vm719, %v2944, 0
      %v2961 = vsel %vm719, %v2958, 0
      %2963 = vmatpush.msra.mxu0 0.0
      %2964 = vmatpush.msra.mxu0 0.0
      %2965 = vmatpush.msra.mxu0 0.0
      %2966 = vmatpush.msra.mxu0 0.0
      %2967 = vmatpush.msra.mxu0 0.0
      %2968 = vmatpush.msra.mxu0 0.0
      %2969 = vmatpush.msra.mxu0 0.0
      %2970 = vmatpush.msra.mxu0 0.0
      %2971 = vmatpush.msra.mxu0 0.0
      %2972 = vmatpush.msra.mxu0 0.0
      %2973 = vmatpush.msra.mxu0 0.0
      %2974 = vmatpush.msra.mxu0 0.0
      %2975 = vmatpush.msra.mxu0 0.0
      %2976 = vmatpush.msra.mxu0 0.0
      %2977 = vmatpush.msra.mxu0 0.0
      %2978 = vmatpush.msra.mxu0 %v2365
      %2979 = vmatmul.f32.gmra.mxu0 %v2959
      %v2980 = vpop.f32.mrf.mxu0
      %v2981 = vadd.f32 0.0, %v2980
      %2982 = vmatmul.f32.gmra.mxu0 %v2961
      %v2983 = vpop.f32.mrf.mxu0
      %v2984 = vadd.f32 0.0, %v2983
      %2985 = vdwg.mxu0
      %v2986 = vrot.slane %v2206, 7
      %v2987 = vsel %vm1000, %v2986, %v2204
      %v2988 = vrot.slane %v2208, 6
      %v2989 = vsel %vm1003, %v2988, %v2987
      %v2990 = vrot.slane %v2210, 5
      %v2991 = vsel %vm1006, %v2990, %v2989
      %v2992 = vrot.slane %v2212, 4
      %v2993 = vsel %vm1009, %v2992, %v2991
      %v2994 = vrot.slane %v2214, 3
      %v2995 = vsel %vm1012, %v2994, %v2993
      %v2996 = vrot.slane %v2216, 2
      %v2997 = vsel %vm1015, %v2996, %v2995
      %v2998 = vrot.slane %v2218, 1
      %v2999 = vsel %vm1017, %v2998, %v2997
      %v3000 = vrot.slane %v2222, 7
      %v3001 = vsel %vm1000, %v3000, %v2220
      %v3002 = vrot.slane %v2224, 6
      %v3003 = vsel %vm1003, %v3002, %v3001
      %v3004 = vrot.slane %v2226, 5
      %v3005 = vsel %vm1006, %v3004, %v3003
      %v3006 = vrot.slane %v2228, 4
      %v3007 = vsel %vm1009, %v3006, %v3005
      %v3008 = vrot.slane %v2230, 3
      %v3009 = vsel %vm1012, %v3008, %v3007
      %v3010 = vrot.slane %v2232, 2
      %v3011 = vsel %vm1015, %v3010, %v3009
      %v3012 = vrot.slane %v2234, 1
      %v3013 = vsel %vm1017, %v3012, %v3011
      %v3014 = vsel %vm719, %v2999, 0
      %v3016 = vsel %vm719, %v3013, 0
      %3018 = vmatpush.msra.mxu0 0.0
      %3019 = vmatpush.msra.mxu0 0.0
      %3020 = vmatpush.msra.mxu0 0.0
      %3021 = vmatpush.msra.mxu0 0.0
      %3022 = vmatpush.msra.mxu0 0.0
      %3023 = vmatpush.msra.mxu0 0.0
      %3024 = vmatpush.msra.mxu0 0.0
      %3025 = vmatpush.msra.mxu0 0.0
      %3026 = vmatpush.msra.mxu0 0.0
      %3027 = vmatpush.msra.mxu0 0.0
      %3028 = vmatpush.msra.mxu0 0.0
      %3029 = vmatpush.msra.mxu0 0.0
      %3030 = vmatpush.msra.mxu0 0.0
      %3031 = vmatpush.msra.mxu0 0.0
      %3032 = vmatpush.msra.mxu0 0.0
      %3033 = vmatpush.msra.mxu0 %v2367
      %3034 = vmatmul.f32.gmra.mxu0 %v3014
      %v3035 = vpop.f32.mrf.mxu0
      %v3036 = vadd.f32 0.0, %v3035
      %3037 = vmatmul.f32.gmra.mxu0 %v3016
      %v3038 = vpop.f32.mrf.mxu0
      %v3039 = vadd.f32 0.0, %v3038
      %3040 = vdwg.mxu0
      %v3041 = vld [vmem:[#allocation2] sm:$0x1]
      %v3042 = vld [vmem:[#allocation2 + $0x10] sm:$0x1]
      %v3043 = vld [vmem:[#allocation2 + $0x20] sm:$0x1]
      %v3044 = vld [vmem:[#allocation2 + $0x30] sm:$0x1]
      %v3045 = vld [vmem:[#allocation2 + $0x40] sm:$0x1]
      %v3046 = vld [vmem:[#allocation2 + $0x50] sm:$0x1]
      %v3047 = vld [vmem:[#allocation2 + $0x60] sm:$0x1]
      %v3048 = vld [vmem:[#allocation2 + $0x70] sm:$0x1]
      %v3049 = vld [vmem:[#allocation2 + $0x80] sm:$0x1]
      %v3050 = vld [vmem:[#allocation2 + $0x90] sm:$0x1]
      %v3051 = vld [vmem:[#allocation2 + $0xa0] sm:$0x1]
      %v3052 = vld [vmem:[#allocation2 + $0xb0] sm:$0x1]
      %v3053 = vld [vmem:[#allocation2 + $0xc0] sm:$0x1]
      %v3054 = vld [vmem:[#allocation2 + $0xd0] sm:$0x1]
      %v3055 = vld [vmem:[#allocation2 + $0xe0] sm:$0x1]
      %v3056 = vld [vmem:[#allocation2 + $0xf0] sm:$0x1]
      %v3059 = vrot.slane %v2981, 1
      %v3060 = vrot.slane %v2981, 2
      %v3061 = vrot.slane %v2981, 3
      %v3062 = vrot.slane %v2981, 4
      %v3063 = vrot.slane %v2981, 5
      %v3064 = vrot.slane %v2981, 6
      %v3065 = vrot.slane %v2981, 7
      %v3066 = vrot.slane %v2984, 1
      %v3067 = vrot.slane %v2984, 2
      %v3068 = vrot.slane %v2984, 3
      %v3069 = vrot.slane %v2984, 4
      %v3070 = vrot.slane %v2984, 5
      %v3071 = vrot.slane %v2984, 6
      %v3072 = vrot.slane %v2984, 7
      %v3087 = vsub.f32 %v3041, %v2981
      %v3088 = vsub.f32 %v3042, %v3059
      %v3089 = vsub.f32 %v3043, %v3060
      %v3090 = vsub.f32 %v3044, %v3061
      %v3091 = vsub.f32 %v3045, %v3062
      %v3092 = vsub.f32 %v3046, %v3063
      %v3093 = vsub.f32 %v3047, %v3064
      %v3094 = vsub.f32 %v3048, %v3065
      %v3095 = vsub.f32 %v3049, %v2984
      %v3096 = vsub.f32 %v3050, %v3066
      %v3097 = vsub.f32 %v3051, %v3067
      %v3098 = vsub.f32 %v3052, %v3068
      %v3099 = vsub.f32 %v3053, %v3069
      %v3100 = vsub.f32 %v3054, %v3070
      %v3101 = vsub.f32 %v3055, %v3071
      %v3102 = vsub.f32 %v3056, %v3072
      %3103 = vst.msk [vmem:[#allocation2] sm:$0x1] %vm1180, %v3087
      %3104 = vst.msk [vmem:[#allocation2 + $0x10] sm:$0x1] %vm1180, %v3088
      %3105 = vst.msk [vmem:[#allocation2 + $0x20] sm:$0x1] %vm1180, %v3089
      %3106 = vst.msk [vmem:[#allocation2 + $0x30] sm:$0x1] %vm1180, %v3090
      %3107 = vst.msk [vmem:[#allocation2 + $0x40] sm:$0x1] %vm1180, %v3091
      %3108 = vst.msk [vmem:[#allocation2 + $0x50] sm:$0x1] %vm1180, %v3092
      %3109 = vst.msk [vmem:[#allocation2 + $0x60] sm:$0x1] %vm1180, %v3093
      %3110 = vst.msk [vmem:[#allocation2 + $0x70] sm:$0x1] %vm1180, %v3094
      %3111 = vst.msk [vmem:[#allocation2 + $0x80] sm:$0x1] %vm1180, %v3095
      %3112 = vst.msk [vmem:[#allocation2 + $0x90] sm:$0x1] %vm1180, %v3096
      %3113 = vst.msk [vmem:[#allocation2 + $0xa0] sm:$0x1] %vm1180, %v3097
      %3114 = vst.msk [vmem:[#allocation2 + $0xb0] sm:$0x1] %vm1180, %v3098
      %3115 = vst.msk [vmem:[#allocation2 + $0xc0] sm:$0x1] %vm1180, %v3099
      %3116 = vst.msk [vmem:[#allocation2 + $0xd0] sm:$0x1] %vm1180, %v3100
      %3117 = vst.msk [vmem:[#allocation2 + $0xe0] sm:$0x1] %vm1180, %v3101
      %3118 = vst.msk [vmem:[#allocation2 + $0xf0] sm:$0x1] %vm1180, %v3102
      %v3119 = vld [vmem:[#allocation2 + $0xf] sm:$0x1]
      %v3120 = vld [vmem:[#allocation2 + $0x1f] sm:$0x1]
      %v3121 = vld [vmem:[#allocation2 + $0x2f] sm:$0x1]
      %v3122 = vld [vmem:[#allocation2 + $0x3f] sm:$0x1]
      %v3123 = vld [vmem:[#allocation2 + $0x4f] sm:$0x1]
      %v3124 = vld [vmem:[#allocation2 + $0x5f] sm:$0x1]
      %v3125 = vld [vmem:[#allocation2 + $0x6f] sm:$0x1]
      %v3126 = vld [vmem:[#allocation2 + $0x7f] sm:$0x1]
      %v3127 = vld [vmem:[#allocation2 + $0x8f] sm:$0x1]
      %v3128 = vld [vmem:[#allocation2 + $0x9f] sm:$0x1]
      %v3129 = vld [vmem:[#allocation2 + $0xaf] sm:$0x1]
      %v3130 = vld [vmem:[#allocation2 + $0xbf] sm:$0x1]
      %v3131 = vld [vmem:[#allocation2 + $0xcf] sm:$0x1]
      %v3132 = vld [vmem:[#allocation2 + $0xdf] sm:$0x1]
      %v3133 = vld [vmem:[#allocation2 + $0xef] sm:$0x1]
      %v3134 = vld [vmem:[#allocation2 + $0xff] sm:$0x1]
      %v3137 = vrot.slane %v3036, 1
      %v3138 = vrot.slane %v3036, 2
      %v3139 = vrot.slane %v3036, 3
      %v3140 = vrot.slane %v3036, 4
      %v3141 = vrot.slane %v3036, 5
      %v3142 = vrot.slane %v3036, 6
      %v3143 = vrot.slane %v3036, 7
      %v3144 = vrot.slane %v3039, 1
      %v3145 = vrot.slane %v3039, 2
      %v3146 = vrot.slane %v3039, 3
      %v3147 = vrot.slane %v3039, 4
      %v3148 = vrot.slane %v3039, 5
      %v3149 = vrot.slane %v3039, 6
      %v3150 = vrot.slane %v3039, 7
      %v3165 = vsub.f32 %v3119, %v3036
      %v3166 = vsub.f32 %v3120, %v3137
      %v3167 = vsub.f32 %v3121, %v3138
      %v3168 = vsub.f32 %v3122, %v3139
      %v3169 = vsub.f32 %v3123, %v3140
      %v3170 = vsub.f32 %v3124, %v3141
      %v3171 = vsub.f32 %v3125, %v3142
      %v3172 = vsub.f32 %v3126, %v3143
      %v3173 = vsub.f32 %v3127, %v3039
      %v3174 = vsub.f32 %v3128, %v3144
      %v3175 = vsub.f32 %v3129, %v3145
      %v3176 = vsub.f32 %v3130, %v3146
      %v3177 = vsub.f32 %v3131, %v3147
      %v3178 = vsub.f32 %v3132, %v3148
      %v3179 = vsub.f32 %v3133, %v3149
      %v3180 = vsub.f32 %v3134, %v3150
      %3181 = vst.msk [vmem:[#allocation2 + $0xf] sm:$0x1] %vm1180, %v3165
      %3182 = vst.msk [vmem:[#allocation2 + $0x1f] sm:$0x1] %vm1180, %v3166
      %3183 = vst.msk [vmem:[#allocation2 + $0x2f] sm:$0x1] %vm1180, %v3167
      %3184 = vst.msk [vmem:[#allocation2 + $0x3f] sm:$0x1] %vm1180, %v3168
      %3185 = vst.msk [vmem:[#allocation2 + $0x4f] sm:$0x1] %vm1180, %v3169
      %3186 = vst.msk [vmem:[#allocation2 + $0x5f] sm:$0x1] %vm1180, %v3170
      %3187 = vst.msk [vmem:[#allocation2 + $0x6f] sm:$0x1] %vm1180, %v3171
      %3188 = vst.msk [vmem:[#allocation2 + $0x7f] sm:$0x1] %vm1180, %v3172
      %3189 = vst.msk [vmem:[#allocation2 + $0x8f] sm:$0x1] %vm1180, %v3173
      %3190 = vst.msk [vmem:[#allocation2 + $0x9f] sm:$0x1] %vm1180, %v3174
      %3191 = vst.msk [vmem:[#allocation2 + $0xaf] sm:$0x1] %vm1180, %v3175
      %3192 = vst.msk [vmem:[#allocation2 + $0xbf] sm:$0x1] %vm1180, %v3176
      %3193 = vst.msk [vmem:[#allocation2 + $0xcf] sm:$0x1] %vm1180, %v3177
      %3194 = vst.msk [vmem:[#allocation2 + $0xdf] sm:$0x1] %vm1180, %v3178
      %3195 = vst.msk [vmem:[#allocation2 + $0xef] sm:$0x1] %vm1180, %v3179
      %3196 = vst.msk [vmem:[#allocation2 + $0xff] sm:$0x1] %vm1180, %v3180
      %v3197 = vld [vmem:[%s3] sm:$0xff]
      %v3198 = vld [vmem:[%s3 + $0x8] sm:$0xff]
      %v3199 = vld [vmem:[%s3 + $0x10] sm:$0xff]
      %3200 = vmatpush.msra.mxu0 0.0
      %3201 = vmatpush.msra.mxu0 0.0
      %3202 = vmatpush.msra.mxu0 0.0
      %3203 = vmatpush.msra.mxu0 0.0
      %3204 = vmatpush.msra.mxu0 0.0
      %3205 = vmatpush.msra.mxu0 0.0
      %3206 = vmatpush.msra.mxu0 0.0
      %3207 = vmatpush.msra.mxu0 0.0
      %3208 = vmatpush.msra.mxu0 0.0
      %3209 = vmatpush.msra.mxu0 0.0
      %3210 = vmatpush.msra.mxu0 0.0
      %3211 = vmatpush.msra.mxu0 0.0
      %3212 = vmatpush.msra.mxu0 0.0
      %3213 = vmatpush.msra.mxu0 %v3199
      %3214 = vmatpush.msra.mxu0 %v3198
      %3215 = vmatpush.msra.mxu0 %v3197
      %3216 = vmatmul.f32.gmra.mxu0 %v2691
      %v3217 = vpop.f32.mrf.mxu0
      %v3218 = vadd.f32 0.0, %v3217
      %3219 = vmatmul.f32.gmra.mxu0 %v2694
      %v3220 = vpop.f32.mrf.mxu0
      %v3221 = vadd.f32 0.0, %v3220
      %3222 = vmatmul.f32.gmra.mxu0 %v2697
      %v3223 = vpop.f32.mrf.mxu0
      %v3224 = vadd.f32 0.0, %v3223
      %3225 = vmatmul.f32.gmra.mxu0 %v2700
      %v3226 = vpop.f32.mrf.mxu0
      %v3227 = vadd.f32 0.0, %v3226
      %3228 = vmatmul.f32.gmra.mxu0 %v2703
      %v3229 = vpop.f32.mrf.mxu0
      %v3230 = vadd.f32 0.0, %v3229
      %3231 = vmatmul.f32.gmra.mxu0 %v2706
      %v3232 = vpop.f32.mrf.mxu0
      %v3233 = vadd.f32 0.0, %v3232
      %3234 = vmatmul.f32.gmra.mxu0 %v2709
      %v3235 = vpop.f32.mrf.mxu0
      %v3236 = vadd.f32 0.0, %v3235
      %3237 = vmatmul.f32.gmra.mxu0 %v2712
      %v3238 = vpop.f32.mrf.mxu0
      %v3239 = vadd.f32 0.0, %v3238
      %3240 = vmatmul.f32.gmra.mxu0 %v2715
      %v3241 = vpop.f32.mrf.mxu0
      %v3242 = vadd.f32 0.0, %v3241
      %3243 = vmatmul.f32.gmra.mxu0 %v2718
      %v3244 = vpop.f32.mrf.mxu0
      %v3245 = vadd.f32 0.0, %v3244
      %3246 = vmatmul.f32.gmra.mxu0 %v2721
      %v3247 = vpop.f32.mrf.mxu0
      %v3248 = vadd.f32 0.0, %v3247
      %3249 = vmatmul.f32.gmra.mxu0 %v2724
      %v3250 = vpop.f32.mrf.mxu0
      %v3251 = vadd.f32 0.0, %v3250
      %3252 = vmatmul.f32.gmra.mxu0 %v2727
      %v3253 = vpop.f32.mrf.mxu0
      %v3254 = vadd.f32 0.0, %v3253
      %3255 = vmatmul.f32.gmra.mxu0 %v2730
      %v3256 = vpop.f32.mrf.mxu0
      %v3257 = vadd.f32 0.0, %v3256
      %3258 = vmatmul.f32.gmra.mxu0 %v2733
      %v3259 = vpop.f32.mrf.mxu0
      %v3260 = vadd.f32 0.0, %v3259
      %3261 = vmatmul.f32.gmra.mxu0 %v2736
      %v3262 = vpop.f32.mrf.mxu0
      %v3263 = vadd.f32 0.0, %v3262
      %3264 = vmatmul.f32.gmra.mxu0 %v2739
      %v3265 = vpop.f32.mrf.mxu0
      %v3266 = vadd.f32 0.0, %v3265
      %3267 = vmatmul.f32.gmra.mxu0 %v2742
      %v3268 = vpop.f32.mrf.mxu0
      %v3269 = vadd.f32 0.0, %v3268
      %3270 = vmatmul.f32.gmra.mxu0 %v2745
      %v3271 = vpop.f32.mrf.mxu0
      %v3272 = vadd.f32 0.0, %v3271
      %3273 = vmatmul.f32.gmra.mxu0 %v2748
      %v3274 = vpop.f32.mrf.mxu0
      %v3275 = vadd.f32 0.0, %v3274
      %3276 = vmatmul.f32.gmra.mxu0 %v2751
      %v3277 = vpop.f32.mrf.mxu0
      %v3278 = vadd.f32 0.0, %v3277
      %3279 = vmatmul.f32.gmra.mxu0 %v2754
      %v3280 = vpop.f32.mrf.mxu0
      %v3281 = vadd.f32 0.0, %v3280
      %3282 = vmatmul.f32.gmra.mxu0 %v2757
      %v3283 = vpop.f32.mrf.mxu0
      %v3284 = vadd.f32 0.0, %v3283
      %3285 = vmatmul.f32.gmra.mxu0 %v2760
      %v3286 = vpop.f32.mrf.mxu0
      %v3287 = vadd.f32 0.0, %v3286
      %3288 = vmatmul.f32.gmra.mxu0 %v2763
      %v3289 = vpop.f32.mrf.mxu0
      %v3290 = vadd.f32 0.0, %v3289
      %3291 = vmatmul.f32.gmra.mxu0 %v2766
      %v3292 = vpop.f32.mrf.mxu0
      %v3293 = vadd.f32 0.0, %v3292
      %3294 = vmatmul.f32.gmra.mxu0 %v2769
      %v3295 = vpop.f32.mrf.mxu0
      %v3296 = vadd.f32 0.0, %v3295
      %3297 = vmatmul.f32.gmra.mxu0 %v2772
      %v3298 = vpop.f32.mrf.mxu0
      %v3299 = vadd.f32 0.0, %v3298
      %3300 = vmatmul.f32.gmra.mxu0 %v2775
      %v3301 = vpop.f32.mrf.mxu0
      %v3302 = vadd.f32 0.0, %v3301
      %3303 = vmatmul.f32.gmra.mxu0 %v2778
      %v3304 = vpop.f32.mrf.mxu0
      %v3305 = vadd.f32 0.0, %v3304
      %3306 = vdwg.mxu0
      %v3307 = vld [vmem:[%s1387] sm:$0xff]
      %v3308 = vld [vmem:[%s1387 + $0x8] sm:$0xff]
      %v3309 = vld [vmem:[%s1387 + $0x10] sm:$0xff]
      %v3310 = vld [vmem:[%s1387 + $0x18] sm:$0xff]
      %v3311 = vld [vmem:[%s1387 + $0x20] sm:$0xff]
      %v3312 = vld [vmem:[%s1387 + $0x28] sm:$0xff]
      %v3313 = vld [vmem:[%s1387 + $0x30] sm:$0xff]
      %v3314 = vld [vmem:[%s1387 + $0x38] sm:$0xff]
      %v3315 = vld [vmem:[%s1387 + $0x40] sm:$0xff]
      %v3316 = vld [vmem:[%s1387 + $0x48] sm:$0xff]
      %v3317 = vld [vmem:[%s1387 + $0x50] sm:$0xff]
      %v3318 = vld [vmem:[%s1387 + $0x58] sm:$0xff]
      %v3319 = vld [vmem:[%s1387 + $0x60] sm:$0xff]
      %v3320 = vld [vmem:[%s1387 + $0x68] sm:$0xff]
      %v3321 = vld [vmem:[%s1387 + $0x70] sm:$0xff]
      %v3322 = vld [vmem:[%s1387 + $0x78] sm:$0xff]
      %v3323 = vld [vmem:[%s1387 + $0x80] sm:$0xff]
      %v3324 = vld [vmem:[%s1387 + $0x88] sm:$0xff]
      %v3325 = vld [vmem:[%s1387 + $0x90] sm:$0xff]
      %v3326 = vld [vmem:[%s1387 + $0x98] sm:$0xff]
      %v3327 = vld [vmem:[%s1387 + $0xa0] sm:$0xff]
      %v3328 = vld [vmem:[%s1387 + $0xa8] sm:$0xff]
      %v3329 = vld [vmem:[%s1387 + $0xb0] sm:$0xff]
      %v3330 = vld [vmem:[%s1387 + $0xb8] sm:$0xff]
      %v3331 = vld [vmem:[%s1387 + $0xc0] sm:$0xff]
      %v3332 = vld [vmem:[%s1387 + $0xc8] sm:$0xff]
      %v3333 = vld [vmem:[%s1387 + $0xd0] sm:$0xff]
      %v3334 = vld [vmem:[%s1387 + $0xd8] sm:$0xff]
      %v3335 = vld [vmem:[%s1387 + $0xe0] sm:$0xff]
      %v3336 = vld [vmem:[%s1387 + $0xe8] sm:$0xff]
      %v3337 = vadd.f32 %v3307, %v3218
      %v3338 = vadd.f32 %v3308, %v3221
      %v3339 = vadd.f32 %v3309, %v3224
      %v3340 = vadd.f32 %v3310, %v3227
      %v3341 = vadd.f32 %v3311, %v3230
      %v3342 = vadd.f32 %v3312, %v3233
      %v3343 = vadd.f32 %v3313, %v3236
      %v3344 = vadd.f32 %v3314, %v3239
      %v3345 = vadd.f32 %v3315, %v3242
      %v3346 = vadd.f32 %v3316, %v3245
      %v3347 = vadd.f32 %v3317, %v3248
      %v3348 = vadd.f32 %v3318, %v3251
      %v3349 = vadd.f32 %v3319, %v3254
      %v3350 = vadd.f32 %v3320, %v3257
      %v3351 = vadd.f32 %v3321, %v3260
      %v3352 = vadd.f32 %v3322, %v3263
      %v3353 = vadd.f32 %v3323, %v3266
      %v3354 = vadd.f32 %v3324, %v3269
      %v3355 = vadd.f32 %v3325, %v3272
      %v3356 = vadd.f32 %v3326, %v3275
      %v3357 = vadd.f32 %v3327, %v3278
      %v3358 = vadd.f32 %v3328, %v3281
      %v3359 = vadd.f32 %v3329, %v3284
      %v3360 = vadd.f32 %v3330, %v3287
      %v3361 = vadd.f32 %v3331, %v3290
      %v3362 = vadd.f32 %v3332, %v3293
      %v3363 = vadd.f32 %v3333, %v3296
      %v3364 = vadd.f32 %v3334, %v3299
      %v3365 = vadd.f32 %v3335, %v3302
      %v3366 = vadd.f32 %v3336, %v3305
      %3367 = vst.msk [vmem:[%s1387] sm:$0xff] %vm719, %v3337
      %3368 = vst.msk [vmem:[%s1387 + $0x8] sm:$0xff] %vm719, %v3338
      %3369 = vst.msk [vmem:[%s1387 + $0x10] sm:$0xff] %vm719, %v3339
      %3370 = vst.msk [vmem:[%s1387 + $0x18] sm:$0xff] %vm719, %v3340
      %3371 = vst.msk [vmem:[%s1387 + $0x20] sm:$0xff] %vm719, %v3341
      %3372 = vst.msk [vmem:[%s1387 + $0x28] sm:$0xff] %vm719, %v3342
      %3373 = vst.msk [vmem:[%s1387 + $0x30] sm:$0xff] %vm719, %v3343
      %3374 = vst.msk [vmem:[%s1387 + $0x38] sm:$0xff] %vm719, %v3344
      %3375 = vst.msk [vmem:[%s1387 + $0x40] sm:$0xff] %vm719, %v3345
      %3376 = vst.msk [vmem:[%s1387 + $0x48] sm:$0xff] %vm719, %v3346
      %3377 = vst.msk [vmem:[%s1387 + $0x50] sm:$0xff] %vm719, %v3347
      %3378 = vst.msk [vmem:[%s1387 + $0x58] sm:$0xff] %vm719, %v3348
      %3379 = vst.msk [vmem:[%s1387 + $0x60] sm:$0xff] %vm719, %v3349
      %3380 = vst.msk [vmem:[%s1387 + $0x68] sm:$0xff] %vm719, %v3350
      %3381 = vst.msk [vmem:[%s1387 + $0x70] sm:$0xff] %vm719, %v3351
      %3382 = vst.msk [vmem:[%s1387 + $0x78] sm:$0xff] %vm719, %v3352
      %3383 = vst.msk [vmem:[%s1387 + $0x80] sm:$0xff] %vm719, %v3353
      %3384 = vst.msk [vmem:[%s1387 + $0x88] sm:$0xff] %vm719, %v3354
      %3385 = vst.msk [vmem:[%s1387 + $0x90] sm:$0xff] %vm719, %v3355
      %3386 = vst.msk [vmem:[%s1387 + $0x98] sm:$0xff] %vm719, %v3356
      %3387 = vst.msk [vmem:[%s1387 + $0xa0] sm:$0xff] %vm719, %v3357
      %3388 = vst.msk [vmem:[%s1387 + $0xa8] sm:$0xff] %vm719, %v3358
      %3389 = vst.msk [vmem:[%s1387 + $0xb0] sm:$0xff] %vm719, %v3359
      %3390 = vst.msk [vmem:[%s1387 + $0xb8] sm:$0xff] %vm719, %v3360
      %3391 = vst.msk [vmem:[%s1387 + $0xc0] sm:$0xff] %vm719, %v3361
      %3392 = vst.msk [vmem:[%s1387 + $0xc8] sm:$0xff] %vm719, %v3362
      %3393 = vst.msk [vmem:[%s1387 + $0xd0] sm:$0xff] %vm719, %v3363
      %3394 = vst.msk [vmem:[%s1387 + $0xd8] sm:$0xff] %vm719, %v3364
      %3395 = vst.msk [vmem:[%s1387 + $0xe0] sm:$0xff] %vm719, %v3365
      %3396 = vst.msk [vmem:[%s1387 + $0xe8] sm:$0xff] %vm719, %v3366
      %v3397 = vsel %vm719, %v2957, 0
      %3399 = vmatpush.msra.mxu0 0.0
      %3400 = vmatpush.msra.mxu0 0.0
      %3401 = vmatpush.msra.mxu0 0.0
      %3402 = vmatpush.msra.mxu0 0.0
      %3403 = vmatpush.msra.mxu0 0.0
      %3404 = vmatpush.msra.mxu0 0.0
      %3405 = vmatpush.msra.mxu0 0.0
      %3406 = vmatpush.msra.mxu0 0.0
      %3407 = vmatpush.msra.mxu0 0.0
      %3408 = vmatpush.msra.mxu0 0.0
      %3409 = vmatpush.msra.mxu0 0.0
      %3410 = vmatpush.msra.mxu0 0.0
      %3411 = vmatpush.msra.mxu0 0.0
      %3412 = vmatpush.msra.mxu0 0.0
      %3413 = vmatpush.msra.mxu0 0.0
      %3414 = vmatpush.msra.mxu0 %v3197
      %3415 = vmatmul.f32.gmra.mxu0 %v2959
      %v3416 = vpop.f32.mrf.mxu0
      %v3417 = vadd.f32 0.0, %v3416
      %3418 = vmatmul.f32.gmra.mxu0 %v3397
      %v3419 = vpop.f32.mrf.mxu0
      %v3420 = vadd.f32 0.0, %v3419
      %3421 = vdwg.mxu0
      %v3422 = vsel %vm719, %v3011, 0
      %3424 = vmatpush.msra.mxu0 0.0
      %3425 = vmatpush.msra.mxu0 0.0
      %3426 = vmatpush.msra.mxu0 0.0
      %3427 = vmatpush.msra.mxu0 0.0
      %3428 = vmatpush.msra.mxu0 0.0
      %3429 = vmatpush.msra.mxu0 0.0
      %3430 = vmatpush.msra.mxu0 0.0
      %3431 = vmatpush.msra.mxu0 0.0
      %3432 = vmatpush.msra.mxu0 0.0
      %3433 = vmatpush.msra.mxu0 0.0
      %3434 = vmatpush.msra.mxu0 0.0
      %3435 = vmatpush.msra.mxu0 0.0
      %3436 = vmatpush.msra.mxu0 0.0
      %3437 = vmatpush.msra.mxu0 0.0
      %3438 = vmatpush.msra.mxu0 0.0
      %3439 = vmatpush.msra.mxu0 %v3199
      %3440 = vmatmul.f32.gmra.mxu0 %v3014
      %v3441 = vpop.f32.mrf.mxu0
      %v3442 = vadd.f32 0.0, %v3441
      %3443 = vmatmul.f32.gmra.mxu0 %v3422
      %v3444 = vpop.f32.mrf.mxu0
      %v3445 = vadd.f32 0.0, %v3444
      %3446 = vdwg.mxu0
      %v3447 = vld [vmem:[%s1387] sm:$0x1]
      %v3448 = vld [vmem:[%s1387 + $0x10] sm:$0x1]
      %v3449 = vld [vmem:[%s1387 + $0x20] sm:$0x1]
      %v3450 = vld [vmem:[%s1387 + $0x30] sm:$0x1]
      %v3451 = vld [vmem:[%s1387 + $0x40] sm:$0x1]
      %v3452 = vld [vmem:[%s1387 + $0x50] sm:$0x1]
      %v3453 = vld [vmem:[%s1387 + $0x60] sm:$0x1]
      %v3454 = vld [vmem:[%s1387 + $0x70] sm:$0x1]
      %v3455 = vld [vmem:[%s1387 + $0x80] sm:$0x1]
      %v3456 = vld [vmem:[%s1387 + $0x90] sm:$0x1]
      %v3457 = vld [vmem:[%s1387 + $0xa0] sm:$0x1]
      %v3458 = vld [vmem:[%s1387 + $0xb0] sm:$0x1]
      %v3459 = vld [vmem:[%s1387 + $0xc0] sm:$0x1]
      %v3460 = vld [vmem:[%s1387 + $0xd0] sm:$0x1]
      %v3461 = vld [vmem:[%s1387 + $0xe0] sm:$0x1]
      %v3464 = vrot.slane %v3417, 1
      %v3465 = vrot.slane %v3417, 2
      %v3466 = vrot.slane %v3417, 3
      %v3467 = vrot.slane %v3417, 4
      %v3468 = vrot.slane %v3417, 5
      %v3469 = vrot.slane %v3417, 6
      %v3470 = vrot.slane %v3417, 7
      %v3471 = vrot.slane %v3420, 1
      %v3472 = vrot.slane %v3420, 2
      %v3473 = vrot.slane %v3420, 3
      %v3474 = vrot.slane %v3420, 4
      %v3475 = vrot.slane %v3420, 5
      %v3476 = vrot.slane %v3420, 6
      %v3490 = vsub.f32 %v3447, %v3417
      %v3491 = vsub.f32 %v3448, %v3464
      %v3492 = vsub.f32 %v3449, %v3465
      %v3493 = vsub.f32 %v3450, %v3466
      %v3494 = vsub.f32 %v3451, %v3467
      %v3495 = vsub.f32 %v3452, %v3468
      %v3496 = vsub.f32 %v3453, %v3469
      %v3497 = vsub.f32 %v3454, %v3470
      %v3498 = vsub.f32 %v3455, %v3420
      %v3499 = vsub.f32 %v3456, %v3471
      %v3500 = vsub.f32 %v3457, %v3472
      %v3501 = vsub.f32 %v3458, %v3473
      %v3502 = vsub.f32 %v3459, %v3474
      %v3503 = vsub.f32 %v3460, %v3475
      %v3504 = vsub.f32 %v3461, %v3476
      %3505 = vst.msk [vmem:[%s1387] sm:$0x1] %vm1180, %v3490
      %3506 = vst.msk [vmem:[%s1387 + $0x10] sm:$0x1] %vm1180, %v3491
      %3507 = vst.msk [vmem:[%s1387 + $0x20] sm:$0x1] %vm1180, %v3492
      %3508 = vst.msk [vmem:[%s1387 + $0x30] sm:$0x1] %vm1180, %v3493
      %3509 = vst.msk [vmem:[%s1387 + $0x40] sm:$0x1] %vm1180, %v3494
      %3510 = vst.msk [vmem:[%s1387 + $0x50] sm:$0x1] %vm1180, %v3495
      %3511 = vst.msk [vmem:[%s1387 + $0x60] sm:$0x1] %vm1180, %v3496
      %3512 = vst.msk [vmem:[%s1387 + $0x70] sm:$0x1] %vm1180, %v3497
      %3513 = vst.msk [vmem:[%s1387 + $0x80] sm:$0x1] %vm1180, %v3498
      %3514 = vst.msk [vmem:[%s1387 + $0x90] sm:$0x1] %vm1180, %v3499
      %3515 = vst.msk [vmem:[%s1387 + $0xa0] sm:$0x1] %vm1180, %v3500
      %3516 = vst.msk [vmem:[%s1387 + $0xb0] sm:$0x1] %vm1180, %v3501
      %3517 = vst.msk [vmem:[%s1387 + $0xc0] sm:$0x1] %vm1180, %v3502
      %3518 = vst.msk [vmem:[%s1387 + $0xd0] sm:$0x1] %vm1180, %v3503
      %3519 = vst.msk [vmem:[%s1387 + $0xe0] sm:$0x1] %vm1180, %v3504
      %v3520 = vld [vmem:[%s1387 + $0xf] sm:$0x1]
      %v3521 = vld [vmem:[%s1387 + $0x1f] sm:$0x1]
      %v3522 = vld [vmem:[%s1387 + $0x2f] sm:$0x1]
      %v3523 = vld [vmem:[%s1387 + $0x3f] sm:$0x1]
      %v3524 = vld [vmem:[%s1387 + $0x4f] sm:$0x1]
      %v3525 = vld [vmem:[%s1387 + $0x5f] sm:$0x1]
      %v3526 = vld [vmem:[%s1387 + $0x6f] sm:$0x1]
      %v3527 = vld [vmem:[%s1387 + $0x7f] sm:$0x1]
      %v3528 = vld [vmem:[%s1387 + $0x8f] sm:$0x1]
      %v3529 = vld [vmem:[%s1387 + $0x9f] sm:$0x1]
      %v3530 = vld [vmem:[%s1387 + $0xaf] sm:$0x1]
      %v3531 = vld [vmem:[%s1387 + $0xbf] sm:$0x1]
      %v3532 = vld [vmem:[%s1387 + $0xcf] sm:$0x1]
      %v3533 = vld [vmem:[%s1387 + $0xdf] sm:$0x1]
      %v3534 = vld [vmem:[%s1387 + $0xef] sm:$0x1]
      %v3537 = vrot.slane %v3442, 1
      %v3538 = vrot.slane %v3442, 2
      %v3539 = vrot.slane %v3442, 3
      %v3540 = vrot.slane %v3442, 4
      %v3541 = vrot.slane %v3442, 5
      %v3542 = vrot.slane %v3442, 6
      %v3543 = vrot.slane %v3442, 7
      %v3544 = vrot.slane %v3445, 1
      %v3545 = vrot.slane %v3445, 2
      %v3546 = vrot.slane %v3445, 3
      %v3547 = vrot.slane %v3445, 4
      %v3548 = vrot.slane %v3445, 5
      %v3549 = vrot.slane %v3445, 6
      %v3563 = vsub.f32 %v3520, %v3442
      %v3564 = vsub.f32 %v3521, %v3537
      %v3565 = vsub.f32 %v3522, %v3538
      %v3566 = vsub.f32 %v3523, %v3539
      %v3567 = vsub.f32 %v3524, %v3540
      %v3568 = vsub.f32 %v3525, %v3541
      %v3569 = vsub.f32 %v3526, %v3542
      %v3570 = vsub.f32 %v3527, %v3543
      %v3571 = vsub.f32 %v3528, %v3445
      %v3572 = vsub.f32 %v3529, %v3544
      %v3573 = vsub.f32 %v3530, %v3545
      %v3574 = vsub.f32 %v3531, %v3546
      %v3575 = vsub.f32 %v3532, %v3547
      %v3576 = vsub.f32 %v3533, %v3548
      %v3577 = vsub.f32 %v3534, %v3549
      %3578 = vst.msk [vmem:[%s1387 + $0xf] sm:$0x1] %vm1180, %v3563
      %3579 = vst.msk [vmem:[%s1387 + $0x1f] sm:$0x1] %vm1180, %v3564
      %3580 = vst.msk [vmem:[%s1387 + $0x2f] sm:$0x1] %vm1180, %v3565
      %3581 = vst.msk [vmem:[%s1387 + $0x3f] sm:$0x1] %vm1180, %v3566
      %3582 = vst.msk [vmem:[%s1387 + $0x4f] sm:$0x1] %vm1180, %v3567
      %3583 = vst.msk [vmem:[%s1387 + $0x5f] sm:$0x1] %vm1180, %v3568
      %3584 = vst.msk [vmem:[%s1387 + $0x6f] sm:$0x1] %vm1180, %v3569
      %3585 = vst.msk [vmem:[%s1387 + $0x7f] sm:$0x1] %vm1180, %v3570
      %3586 = vst.msk [vmem:[%s1387 + $0x8f] sm:$0x1] %vm1180, %v3571
      %3587 = vst.msk [vmem:[%s1387 + $0x9f] sm:$0x1] %vm1180, %v3572
      %3588 = vst.msk [vmem:[%s1387 + $0xaf] sm:$0x1] %vm1180, %v3573
      %3589 = vst.msk [vmem:[%s1387 + $0xbf] sm:$0x1] %vm1180, %v3574
      %3590 = vst.msk [vmem:[%s1387 + $0xcf] sm:$0x1] %vm1180, %v3575
      %3591 = vst.msk [vmem:[%s1387 + $0xdf] sm:$0x1] %vm1180, %v3576
      %3592 = vst.msk [vmem:[%s1387 + $0xef] sm:$0x1] %vm1180, %v3577
      %s3593 = scalar_lea.vmem %s3, 48
      %v3594 = vld [vmem:[%s3593] sm:$0xff]
      %v3595 = vld [vmem:[%s3593 + $0x8] sm:$0xff]
      %v3596 = vld [vmem:[%s3593 + $0x10] sm:$0xff]
      %3597 = vmatpush.msra.mxu0 0.0
      %3598 = vmatpush.msra.mxu0 0.0
      %3599 = vmatpush.msra.mxu0 0.0
      %3600 = vmatpush.msra.mxu0 0.0
      %3601 = vmatpush.msra.mxu0 0.0
      %3602 = vmatpush.msra.mxu0 0.0
      %3603 = vmatpush.msra.mxu0 0.0
      %3604 = vmatpush.msra.mxu0 0.0
      %3605 = vmatpush.msra.mxu0 0.0
      %3606 = vmatpush.msra.mxu0 0.0
      %3607 = vmatpush.msra.mxu0 0.0
      %3608 = vmatpush.msra.mxu0 0.0
      %3609 = vmatpush.msra.mxu0 0.0
      %3610 = vmatpush.msra.mxu0 %v3596
      %3611 = vmatpush.msra.mxu0 %v3595
      %3612 = vmatpush.msra.mxu0 %v3594
      %3613 = vmatmul.f32.gmra.mxu0 %v2697
      %v3614 = vpop.f32.mrf.mxu0
      %v3615 = vadd.f32 0.0, %v3614
      %3616 = vmatmul.f32.gmra.mxu0 %v2700
      %v3617 = vpop.f32.mrf.mxu0
      %v3618 = vadd.f32 0.0, %v3617
      %3619 = vmatmul.f32.gmra.mxu0 %v2703
      %v3620 = vpop.f32.mrf.mxu0
      %v3621 = vadd.f32 0.0, %v3620
      %3622 = vmatmul.f32.gmra.mxu0 %v2706
      %v3623 = vpop.f32.mrf.mxu0
      %v3624 = vadd.f32 0.0, %v3623
      %3625 = vmatmul.f32.gmra.mxu0 %v2709
      %v3626 = vpop.f32.mrf.mxu0
      %v3627 = vadd.f32 0.0, %v3626
      %3628 = vmatmul.f32.gmra.mxu0 %v2712
      %v3629 = vpop.f32.mrf.mxu0
      %v3630 = vadd.f32 0.0, %v3629
      %3631 = vmatmul.f32.gmra.mxu0 %v2715
      %v3632 = vpop.f32.mrf.mxu0
      %v3633 = vadd.f32 0.0, %v3632
      %3634 = vmatmul.f32.gmra.mxu0 %v2718
      %v3635 = vpop.f32.mrf.mxu0
      %v3636 = vadd.f32 0.0, %v3635
      %3637 = vmatmul.f32.gmra.mxu0 %v2721
      %v3638 = vpop.f32.mrf.mxu0
      %v3639 = vadd.f32 0.0, %v3638
      %3640 = vmatmul.f32.gmra.mxu0 %v2724
      %v3641 = vpop.f32.mrf.mxu0
      %v3642 = vadd.f32 0.0, %v3641
      %3643 = vmatmul.f32.gmra.mxu0 %v2727
      %v3644 = vpop.f32.mrf.mxu0
      %v3645 = vadd.f32 0.0, %v3644
      %3646 = vmatmul.f32.gmra.mxu0 %v2730
      %v3647 = vpop.f32.mrf.mxu0
      %v3648 = vadd.f32 0.0, %v3647
      %3649 = vmatmul.f32.gmra.mxu0 %v2733
      %v3650 = vpop.f32.mrf.mxu0
      %v3651 = vadd.f32 0.0, %v3650
      %3652 = vmatmul.f32.gmra.mxu0 %v2736
      %v3653 = vpop.f32.mrf.mxu0
      %v3654 = vadd.f32 0.0, %v3653
      %3655 = vmatmul.f32.gmra.mxu0 %v2739
      %v3656 = vpop.f32.mrf.mxu0
      %v3657 = vadd.f32 0.0, %v3656
      %3658 = vmatmul.f32.gmra.mxu0 %v2742
      %v3659 = vpop.f32.mrf.mxu0
      %v3660 = vadd.f32 0.0, %v3659
      %3661 = vmatmul.f32.gmra.mxu0 %v2745
      %v3662 = vpop.f32.mrf.mxu0
      %v3663 = vadd.f32 0.0, %v3662
      %3664 = vmatmul.f32.gmra.mxu0 %v2748
      %v3665 = vpop.f32.mrf.mxu0
      %v3666 = vadd.f32 0.0, %v3665
      %3667 = vmatmul.f32.gmra.mxu0 %v2751
      %v3668 = vpop.f32.mrf.mxu0
      %v3669 = vadd.f32 0.0, %v3668
      %3670 = vmatmul.f32.gmra.mxu0 %v2754
      %v3671 = vpop.f32.mrf.mxu0
      %v3672 = vadd.f32 0.0, %v3671
      %3673 = vmatmul.f32.gmra.mxu0 %v2757
      %v3674 = vpop.f32.mrf.mxu0
      %v3675 = vadd.f32 0.0, %v3674
      %3676 = vmatmul.f32.gmra.mxu0 %v2760
      %v3677 = vpop.f32.mrf.mxu0
      %v3678 = vadd.f32 0.0, %v3677
      %3679 = vmatmul.f32.gmra.mxu0 %v2763
      %v3680 = vpop.f32.mrf.mxu0
      %v3681 = vadd.f32 0.0, %v3680
      %3682 = vmatmul.f32.gmra.mxu0 %v2766
      %v3683 = vpop.f32.mrf.mxu0
      %v3684 = vadd.f32 0.0, %v3683
      %3685 = vmatmul.f32.gmra.mxu0 %v2769
      %v3686 = vpop.f32.mrf.mxu0
      %v3687 = vadd.f32 0.0, %v3686
      %3688 = vmatmul.f32.gmra.mxu0 %v2772
      %v3689 = vpop.f32.mrf.mxu0
      %v3690 = vadd.f32 0.0, %v3689
      %3691 = vmatmul.f32.gmra.mxu0 %v2775
      %v3692 = vpop.f32.mrf.mxu0
      %v3693 = vadd.f32 0.0, %v3692
      %3694 = vmatmul.f32.gmra.mxu0 %v2778
      %v3695 = vpop.f32.mrf.mxu0
      %v3696 = vadd.f32 0.0, %v3695
      %3697 = vmatmul.f32.gmra.mxu0 %v2781
      %v3698 = vpop.f32.mrf.mxu0
      %v3699 = vadd.f32 0.0, %v3698
      %3700 = vmatmul.f32.gmra.mxu0 %v2784
      %v3701 = vpop.f32.mrf.mxu0
      %v3702 = vadd.f32 0.0, %v3701
      %3703 = vdwg.mxu0
      %v3704 = vld [vmem:[#allocation2] sm:$0xff]
      %v3705 = vld [vmem:[#allocation2 + $0x8] sm:$0xff]
      %v3706 = vld [vmem:[#allocation2 + $0x10] sm:$0xff]
      %v3707 = vld [vmem:[#allocation2 + $0x18] sm:$0xff]
      %v3708 = vld [vmem:[#allocation2 + $0x20] sm:$0xff]
      %v3709 = vld [vmem:[#allocation2 + $0x28] sm:$0xff]
      %v3710 = vld [vmem:[#allocation2 + $0x30] sm:$0xff]
      %v3711 = vld [vmem:[#allocation2 + $0x38] sm:$0xff]
      %v3712 = vld [vmem:[#allocation2 + $0x40] sm:$0xff]
      %v3713 = vld [vmem:[#allocation2 + $0x48] sm:$0xff]
      %v3714 = vld [vmem:[#allocation2 + $0x50] sm:$0xff]
      %v3715 = vld [vmem:[#allocation2 + $0x58] sm:$0xff]
      %v3716 = vld [vmem:[#allocation2 + $0x60] sm:$0xff]
      %v3717 = vld [vmem:[#allocation2 + $0x68] sm:$0xff]
      %v3718 = vld [vmem:[#allocation2 + $0x70] sm:$0xff]
      %v3719 = vld [vmem:[#allocation2 + $0x78] sm:$0xff]
      %v3720 = vld [vmem:[#allocation2 + $0x80] sm:$0xff]
      %v3721 = vld [vmem:[#allocation2 + $0x88] sm:$0xff]
      %v3722 = vld [vmem:[#allocation2 + $0x90] sm:$0xff]
      %v3723 = vld [vmem:[#allocation2 + $0x98] sm:$0xff]
      %v3724 = vld [vmem:[#allocation2 + $0xa0] sm:$0xff]
      %v3725 = vld [vmem:[#allocation2 + $0xa8] sm:$0xff]
      %v3726 = vld [vmem:[#allocation2 + $0xb0] sm:$0xff]
      %v3727 = vld [vmem:[#allocation2 + $0xb8] sm:$0xff]
      %v3728 = vld [vmem:[#allocation2 + $0xc0] sm:$0xff]
      %v3729 = vld [vmem:[#allocation2 + $0xc8] sm:$0xff]
      %v3730 = vld [vmem:[#allocation2 + $0xd0] sm:$0xff]
      %v3731 = vld [vmem:[#allocation2 + $0xd8] sm:$0xff]
      %v3732 = vld [vmem:[#allocation2 + $0xe0] sm:$0xff]
      %v3733 = vld [vmem:[#allocation2 + $0xe8] sm:$0xff]
      %v3734 = vadd.f32 %v3704, %v3615
      %v3735 = vadd.f32 %v3705, %v3618
      %v3736 = vadd.f32 %v3706, %v3621
      %v3737 = vadd.f32 %v3707, %v3624
      %v3738 = vadd.f32 %v3708, %v3627
      %v3739 = vadd.f32 %v3709, %v3630
      %v3740 = vadd.f32 %v3710, %v3633
      %v3741 = vadd.f32 %v3711, %v3636
      %v3742 = vadd.f32 %v3712, %v3639
      %v3743 = vadd.f32 %v3713, %v3642
      %v3744 = vadd.f32 %v3714, %v3645
      %v3745 = vadd.f32 %v3715, %v3648
      %v3746 = vadd.f32 %v3716, %v3651
      %v3747 = vadd.f32 %v3717, %v3654
      %v3748 = vadd.f32 %v3718, %v3657
      %v3749 = vadd.f32 %v3719, %v3660
      %v3750 = vadd.f32 %v3720, %v3663
      %v3751 = vadd.f32 %v3721, %v3666
      %v3752 = vadd.f32 %v3722, %v3669
      %v3753 = vadd.f32 %v3723, %v3672
      %v3754 = vadd.f32 %v3724, %v3675
      %v3755 = vadd.f32 %v3725, %v3678
      %v3756 = vadd.f32 %v3726, %v3681
      %v3757 = vadd.f32 %v3727, %v3684
      %v3758 = vadd.f32 %v3728, %v3687
      %v3759 = vadd.f32 %v3729, %v3690
      %v3760 = vadd.f32 %v3730, %v3693
      %v3761 = vadd.f32 %v3731, %v3696
      %v3762 = vadd.f32 %v3732, %v3699
      %v3763 = vadd.f32 %v3733, %v3702
      %3764 = vst.msk [vmem:[#allocation2] sm:$0xff] %vm719, %v3734
      %3765 = vst.msk [vmem:[#allocation2 + $0x8] sm:$0xff] %vm719, %v3735
      %3766 = vst.msk [vmem:[#allocation2 + $0x10] sm:$0xff] %vm719, %v3736
      %3767 = vst.msk [vmem:[#allocation2 + $0x18] sm:$0xff] %vm719, %v3737
      %3768 = vst.msk [vmem:[#allocation2 + $0x20] sm:$0xff] %vm719, %v3738
      %3769 = vst.msk [vmem:[#allocation2 + $0x28] sm:$0xff] %vm719, %v3739
      %3770 = vst.msk [vmem:[#allocation2 + $0x30] sm:$0xff] %vm719, %v3740
      %3771 = vst.msk [vmem:[#allocation2 + $0x38] sm:$0xff] %vm719, %v3741
      %3772 = vst.msk [vmem:[#allocation2 + $0x40] sm:$0xff] %vm719, %v3742
      %3773 = vst.msk [vmem:[#allocation2 + $0x48] sm:$0xff] %vm719, %v3743
      %3774 = vst.msk [vmem:[#allocation2 + $0x50] sm:$0xff] %vm719, %v3744
      %3775 = vst.msk [vmem:[#allocation2 + $0x58] sm:$0xff] %vm719, %v3745
      %3776 = vst.msk [vmem:[#allocation2 + $0x60] sm:$0xff] %vm719, %v3746
      %3777 = vst.msk [vmem:[#allocation2 + $0x68] sm:$0xff] %vm719, %v3747
      %3778 = vst.msk [vmem:[#allocation2 + $0x70] sm:$0xff] %vm719, %v3748
      %3779 = vst.msk [vmem:[#allocation2 + $0x78] sm:$0xff] %vm719, %v3749
      %3780 = vst.msk [vmem:[#allocation2 + $0x80] sm:$0xff] %vm719, %v3750
      %3781 = vst.msk [vmem:[#allocation2 + $0x88] sm:$0xff] %vm719, %v3751
      %3782 = vst.msk [vmem:[#allocation2 + $0x90] sm:$0xff] %vm719, %v3752
      %3783 = vst.msk [vmem:[#allocation2 + $0x98] sm:$0xff] %vm719, %v3753
      %3784 = vst.msk [vmem:[#allocation2 + $0xa0] sm:$0xff] %vm719, %v3754
      %3785 = vst.msk [vmem:[#allocation2 + $0xa8] sm:$0xff] %vm719, %v3755
      %3786 = vst.msk [vmem:[#allocation2 + $0xb0] sm:$0xff] %vm719, %v3756
      %3787 = vst.msk [vmem:[#allocation2 + $0xb8] sm:$0xff] %vm719, %v3757
      %3788 = vst.msk [vmem:[#allocation2 + $0xc0] sm:$0xff] %vm719, %v3758
      %3789 = vst.msk [vmem:[#allocation2 + $0xc8] sm:$0xff] %vm719, %v3759
      %3790 = vst.msk [vmem:[#allocation2 + $0xd0] sm:$0xff] %vm719, %v3760
      %3791 = vst.msk [vmem:[#allocation2 + $0xd8] sm:$0xff] %vm719, %v3761
      %3792 = vst.msk [vmem:[#allocation2 + $0xe0] sm:$0xff] %vm719, %v3762
      %3793 = vst.msk [vmem:[#allocation2 + $0xe8] sm:$0xff] %vm719, %v3763
      %v3794 = vrot.slane %v2207, 7
      %v3795 = vrot.slane %v2209, 6
      %v3796 = vsel %vm1000, %v3795, %v3794
      %v3797 = vrot.slane %v2211, 5
      %v3798 = vsel %vm1003, %v3797, %v3796
      %v3799 = vrot.slane %v2213, 4
      %v3800 = vsel %vm1006, %v3799, %v3798
      %v3801 = vrot.slane %v2215, 3
      %v3802 = vsel %vm1009, %v3801, %v3800
      %v3803 = vrot.slane %v2217, 2
      %v3804 = vsel %vm1012, %v3803, %v3802
      %v3805 = vrot.slane %v2219, 1
      %v3806 = vsel %vm1015, %v3805, %v3804
      %v3807 = vsel %vm1017, %v2221, %v3806
      %v3808 = vrot.slane %v2223, 7
      %v3809 = vrot.slane %v2225, 6
      %v3810 = vsel %vm1000, %v3809, %v3808
      %v3811 = vrot.slane %v2227, 5
      %v3812 = vsel %vm1003, %v3811, %v3810
      %v3813 = vrot.slane %v2229, 4
      %v3814 = vsel %vm1006, %v3813, %v3812
      %v3815 = vrot.slane %v2231, 3
      %v3816 = vsel %vm1009, %v3815, %v3814
      %v3817 = vrot.slane %v2233, 2
      %v3818 = vsel %vm1012, %v3817, %v3816
      %v3819 = vrot.slane %v2235, 1
      %v3820 = vsel %vm1015, %v3819, %v3818
      %v3821 = vsel %vm719, %v3807, 0
      %v3823 = vsel %vm719, %v3820, 0
      %3825 = vmatpush.msra.mxu0 0.0
      %3826 = vmatpush.msra.mxu0 0.0
      %3827 = vmatpush.msra.mxu0 0.0
      %3828 = vmatpush.msra.mxu0 0.0
      %3829 = vmatpush.msra.mxu0 0.0
      %3830 = vmatpush.msra.mxu0 0.0
      %3831 = vmatpush.msra.mxu0 0.0
      %3832 = vmatpush.msra.mxu0 0.0
      %3833 = vmatpush.msra.mxu0 0.0
      %3834 = vmatpush.msra.mxu0 0.0
      %3835 = vmatpush.msra.mxu0 0.0
      %3836 = vmatpush.msra.mxu0 0.0
      %3837 = vmatpush.msra.mxu0 0.0
      %3838 = vmatpush.msra.mxu0 0.0
      %3839 = vmatpush.msra.mxu0 0.0
      %3840 = vmatpush.msra.mxu0 %v3594
      %3841 = vmatmul.f32.gmra.mxu0 %v3821
      %v3842 = vpop.f32.mrf.mxu0
      %v3843 = vadd.f32 0.0, %v3842
      %3844 = vmatmul.f32.gmra.mxu0 %v3823
      %v3845 = vpop.f32.mrf.mxu0
      %v3846 = vadd.f32 0.0, %v3845
      %3847 = vdwg.mxu0
      %v3848 = vrot.slane %v2208, 7
      %v3849 = vsel %vm1000, %v3848, %v2206
      %v3850 = vrot.slane %v2210, 6
      %v3851 = vsel %vm1003, %v3850, %v3849
      %v3852 = vrot.slane %v2212, 5
      %v3853 = vsel %vm1006, %v3852, %v3851
      %v3854 = vrot.slane %v2214, 4
      %v3855 = vsel %vm1009, %v3854, %v3853
      %v3856 = vrot.slane %v2216, 3
      %v3857 = vsel %vm1012, %v3856, %v3855
      %v3858 = vrot.slane %v2218, 2
      %v3859 = vsel %vm1015, %v3858, %v3857
      %v3860 = vrot.slane %v2220, 1
      %v3861 = vsel %vm1017, %v3860, %v3859
      %v3862 = vrot.slane %v2224, 7
      %v3863 = vsel %vm1000, %v3862, %v2222
      %v3864 = vrot.slane %v2226, 6
      %v3865 = vsel %vm1003, %v3864, %v3863
      %v3866 = vrot.slane %v2228, 5
      %v3867 = vsel %vm1006, %v3866, %v3865
      %v3868 = vrot.slane %v2230, 4
      %v3869 = vsel %vm1009, %v3868, %v3867
      %v3870 = vrot.slane %v2232, 3
      %v3871 = vsel %vm1012, %v3870, %v3869
      %v3872 = vrot.slane %v2234, 2
      %v3873 = vsel %vm1015, %v3872, %v3871
      %v3874 = vsel %vm719, %v3861, 0
      %v3876 = vsel %vm719, %v3873, 0
      %3878 = vmatpush.msra.mxu0 0.0
      %3879 = vmatpush.msra.mxu0 0.0
      %3880 = vmatpush.msra.mxu0 0.0
      %3881 = vmatpush.msra.mxu0 0.0
      %3882 = vmatpush.msra.mxu0 0.0
      %3883 = vmatpush.msra.mxu0 0.0
      %3884 = vmatpush.msra.mxu0 0.0
      %3885 = vmatpush.msra.mxu0 0.0
      %3886 = vmatpush.msra.mxu0 0.0
      %3887 = vmatpush.msra.mxu0 0.0
      %3888 = vmatpush.msra.mxu0 0.0
      %3889 = vmatpush.msra.mxu0 0.0
      %3890 = vmatpush.msra.mxu0 0.0
      %3891 = vmatpush.msra.mxu0 0.0
      %3892 = vmatpush.msra.mxu0 0.0
      %3893 = vmatpush.msra.mxu0 %v3596
      %3894 = vmatmul.f32.gmra.mxu0 %v3874
      %v3895 = vpop.f32.mrf.mxu0
      %v3896 = vadd.f32 0.0, %v3895
      %3897 = vmatmul.f32.gmra.mxu0 %v3876
      %v3898 = vpop.f32.mrf.mxu0
      %v3899 = vadd.f32 0.0, %v3898
      %3900 = vdwg.mxu0
      %v3901 = vld [vmem:[#allocation2] sm:$0x1]
      %v3902 = vld [vmem:[#allocation2 + $0x10] sm:$0x1]
      %v3903 = vld [vmem:[#allocation2 + $0x20] sm:$0x1]
      %v3904 = vld [vmem:[#allocation2 + $0x30] sm:$0x1]
      %v3905 = vld [vmem:[#allocation2 + $0x40] sm:$0x1]
      %v3906 = vld [vmem:[#allocation2 + $0x50] sm:$0x1]
      %v3907 = vld [vmem:[#allocation2 + $0x60] sm:$0x1]
      %v3908 = vld [vmem:[#allocation2 + $0x70] sm:$0x1]
      %v3909 = vld [vmem:[#allocation2 + $0x80] sm:$0x1]
      %v3910 = vld [vmem:[#allocation2 + $0x90] sm:$0x1]
      %v3911 = vld [vmem:[#allocation2 + $0xa0] sm:$0x1]
      %v3912 = vld [vmem:[#allocation2 + $0xb0] sm:$0x1]
      %v3913 = vld [vmem:[#allocation2 + $0xc0] sm:$0x1]
      %v3914 = vld [vmem:[#allocation2 + $0xd0] sm:$0x1]
      %v3915 = vld [vmem:[#allocation2 + $0xe0] sm:$0x1]
      %v3918 = vrot.slane %v3843, 1
      %v3919 = vrot.slane %v3843, 2
      %v3920 = vrot.slane %v3843, 3
      %v3921 = vrot.slane %v3843, 4
      %v3922 = vrot.slane %v3843, 5
      %v3923 = vrot.slane %v3843, 6
      %v3924 = vrot.slane %v3843, 7
      %v3925 = vrot.slane %v3846, 1
      %v3926 = vrot.slane %v3846, 2
      %v3927 = vrot.slane %v3846, 3
      %v3928 = vrot.slane %v3846, 4
      %v3929 = vrot.slane %v3846, 5
      %v3930 = vrot.slane %v3846, 6
      %v3944 = vsub.f32 %v3901, %v3843
      %v3945 = vsub.f32 %v3902, %v3918
      %v3946 = vsub.f32 %v3903, %v3919
      %v3947 = vsub.f32 %v3904, %v3920
      %v3948 = vsub.f32 %v3905, %v3921
      %v3949 = vsub.f32 %v3906, %v3922
      %v3950 = vsub.f32 %v3907, %v3923
      %v3951 = vsub.f32 %v3908, %v3924
      %v3952 = vsub.f32 %v3909, %v3846
      %v3953 = vsub.f32 %v3910, %v3925
      %v3954 = vsub.f32 %v3911, %v3926
      %v3955 = vsub.f32 %v3912, %v3927
      %v3956 = vsub.f32 %v3913, %v3928
      %v3957 = vsub.f32 %v3914, %v3929
      %v3958 = vsub.f32 %v3915, %v3930
      %3959 = vst.msk [vmem:[#allocation2] sm:$0x1] %vm1180, %v3944
      %3960 = vst.msk [vmem:[#allocation2 + $0x10] sm:$0x1] %vm1180, %v3945
      %3961 = vst.msk [vmem:[#allocation2 + $0x20] sm:$0x1] %vm1180, %v3946
      %3962 = vst.msk [vmem:[#allocation2 + $0x30] sm:$0x1] %vm1180, %v3947
      %3963 = vst.msk [vmem:[#allocation2 + $0x40] sm:$0x1] %vm1180, %v3948
      %3964 = vst.msk [vmem:[#allocation2 + $0x50] sm:$0x1] %vm1180, %v3949
      %3965 = vst.msk [vmem:[#allocation2 + $0x60] sm:$0x1] %vm1180, %v3950
      %3966 = vst.msk [vmem:[#allocation2 + $0x70] sm:$0x1] %vm1180, %v3951
      %3967 = vst.msk [vmem:[#allocation2 + $0x80] sm:$0x1] %vm1180, %v3952
      %3968 = vst.msk [vmem:[#allocation2 + $0x90] sm:$0x1] %vm1180, %v3953
      %3969 = vst.msk [vmem:[#allocation2 + $0xa0] sm:$0x1] %vm1180, %v3954
      %3970 = vst.msk [vmem:[#allocation2 + $0xb0] sm:$0x1] %vm1180, %v3955
      %3971 = vst.msk [vmem:[#allocation2 + $0xc0] sm:$0x1] %vm1180, %v3956
      %3972 = vst.msk [vmem:[#allocation2 + $0xd0] sm:$0x1] %vm1180, %v3957
      %3973 = vst.msk [vmem:[#allocation2 + $0xe0] sm:$0x1] %vm1180, %v3958
      %v3974 = vld [vmem:[#allocation2 + $0xf] sm:$0x1]
      %v3975 = vld [vmem:[#allocation2 + $0x1f] sm:$0x1]
      %v3976 = vld [vmem:[#allocation2 + $0x2f] sm:$0x1]
      %v3977 = vld [vmem:[#allocation2 + $0x3f] sm:$0x1]
      %v3978 = vld [vmem:[#allocation2 + $0x4f] sm:$0x1]
      %v3979 = vld [vmem:[#allocation2 + $0x5f] sm:$0x1]
      %v3980 = vld [vmem:[#allocation2 + $0x6f] sm:$0x1]
      %v3981 = vld [vmem:[#allocation2 + $0x7f] sm:$0x1]
      %v3982 = vld [vmem:[#allocation2 + $0x8f] sm:$0x1]
      %v3983 = vld [vmem:[#allocation2 + $0x9f] sm:$0x1]
      %v3984 = vld [vmem:[#allocation2 + $0xaf] sm:$0x1]
      %v3985 = vld [vmem:[#allocation2 + $0xbf] sm:$0x1]
      %v3986 = vld [vmem:[#allocation2 + $0xcf] sm:$0x1]
      %v3987 = vld [vmem:[#allocation2 + $0xdf] sm:$0x1]
      %v3988 = vld [vmem:[#allocation2 + $0xef] sm:$0x1]
      %v3991 = vrot.slane %v3896, 1
      %v3992 = vrot.slane %v3896, 2
      %v3993 = vrot.slane %v3896, 3
      %v3994 = vrot.slane %v3896, 4
      %v3995 = vrot.slane %v3896, 5
      %v3996 = vrot.slane %v3896, 6
      %v3997 = vrot.slane %v3896, 7
      %v3998 = vrot.slane %v3899, 1
      %v3999 = vrot.slane %v3899, 2
      %v4000 = vrot.slane %v3899, 3
      %v4001 = vrot.slane %v3899, 4
      %v4002 = vrot.slane %v3899, 5
      %v4003 = vrot.slane %v3899, 6
      %v4017 = vsub.f32 %v3974, %v3896
      %v4018 = vsub.f32 %v3975, %v3991
      %v4019 = vsub.f32 %v3976, %v3992
      %v4020 = vsub.f32 %v3977, %v3993
      %v4021 = vsub.f32 %v3978, %v3994
      %v4022 = vsub.f32 %v3979, %v3995
      %v4023 = vsub.f32 %v3980, %v3996
      %v4024 = vsub.f32 %v3981, %v3997
      %v4025 = vsub.f32 %v3982, %v3899
      %v4026 = vsub.f32 %v3983, %v3998
      %v4027 = vsub.f32 %v3984, %v3999
      %v4028 = vsub.f32 %v3985, %v4000
      %v4029 = vsub.f32 %v3986, %v4001
      %v4030 = vsub.f32 %v3987, %v4002
      %v4031 = vsub.f32 %v3988, %v4003
      %4032 = vst.msk [vmem:[#allocation2 + $0xf] sm:$0x1] %vm1180, %v4017
      %4033 = vst.msk [vmem:[#allocation2 + $0x1f] sm:$0x1] %vm1180, %v4018
      %4034 = vst.msk [vmem:[#allocation2 + $0x2f] sm:$0x1] %vm1180, %v4019
      %4035 = vst.msk [vmem:[#allocation2 + $0x3f] sm:$0x1] %vm1180, %v4020
      %4036 = vst.msk [vmem:[#allocation2 + $0x4f] sm:$0x1] %vm1180, %v4021
      %4037 = vst.msk [vmem:[#allocation2 + $0x5f] sm:$0x1] %vm1180, %v4022
      %4038 = vst.msk [vmem:[#allocation2 + $0x6f] sm:$0x1] %vm1180, %v4023
      %4039 = vst.msk [vmem:[#allocation2 + $0x7f] sm:$0x1] %vm1180, %v4024
      %4040 = vst.msk [vmem:[#allocation2 + $0x8f] sm:$0x1] %vm1180, %v4025
      %4041 = vst.msk [vmem:[#allocation2 + $0x9f] sm:$0x1] %vm1180, %v4026
      %4042 = vst.msk [vmem:[#allocation2 + $0xaf] sm:$0x1] %vm1180, %v4027
      %4043 = vst.msk [vmem:[#allocation2 + $0xbf] sm:$0x1] %vm1180, %v4028
      %4044 = vst.msk [vmem:[#allocation2 + $0xcf] sm:$0x1] %vm1180, %v4029
      %4045 = vst.msk [vmem:[#allocation2 + $0xdf] sm:$0x1] %vm1180, %v4030
      %4046 = vst.msk [vmem:[#allocation2 + $0xef] sm:$0x1] %vm1180, %v4031
      %v4047 = vld [vmem:[#allocation2] sm:$0xff]
      %v4048 = vld [vmem:[#allocation2 + $0x8] sm:$0xff]
      %v4049 = vld [vmem:[#allocation2 + $0x10] sm:$0xff]
      %v4050 = vld [vmem:[#allocation2 + $0x18] sm:$0xff]
      %v4051 = vld [vmem:[#allocation2 + $0x20] sm:$0xff]
      %v4052 = vld [vmem:[#allocation2 + $0x28] sm:$0xff]
      %v4053 = vld [vmem:[#allocation2 + $0x30] sm:$0xff]
      %v4054 = vld [vmem:[#allocation2 + $0x38] sm:$0xff]
      %v4055 = vld [vmem:[#allocation2 + $0x40] sm:$0xff]
      %v4056 = vld [vmem:[#allocation2 + $0x48] sm:$0xff]
      %v4057 = vld [vmem:[#allocation2 + $0x50] sm:$0xff]
      %v4058 = vld [vmem:[#allocation2 + $0x58] sm:$0xff]
      %v4059 = vld [vmem:[#allocation2 + $0x60] sm:$0xff]
      %v4060 = vld [vmem:[#allocation2 + $0x68] sm:$0xff]
      %v4061 = vld [vmem:[#allocation2 + $0x70] sm:$0xff]
      %v4062 = vld [vmem:[#allocation2 + $0x78] sm:$0xff]
      %v4063 = vld [vmem:[#allocation2 + $0x80] sm:$0xff]
      %v4064 = vld [vmem:[#allocation2 + $0x88] sm:$0xff]
      %v4065 = vld [vmem:[#allocation2 + $0x90] sm:$0xff]
      %v4066 = vld [vmem:[#allocation2 + $0x98] sm:$0xff]
      %v4067 = vld [vmem:[#allocation2 + $0xa0] sm:$0xff]
      %v4068 = vld [vmem:[#allocation2 + $0xa8] sm:$0xff]
      %v4069 = vld [vmem:[#allocation2 + $0xb0] sm:$0xff]
      %v4070 = vld [vmem:[#allocation2 + $0xb8] sm:$0xff]
      %v4071 = vld [vmem:[#allocation2 + $0xc0] sm:$0xff]
      %v4072 = vld [vmem:[#allocation2 + $0xc8] sm:$0xff]
      %v4073 = vld [vmem:[#allocation2 + $0xd0] sm:$0xff]
      %v4074 = vld [vmem:[#allocation2 + $0xd8] sm:$0xff]
      %v4075 = vld [vmem:[#allocation2 + $0xe0] sm:$0xff]
      %v4076 = vld [vmem:[#allocation2 + $0xe8] sm:$0xff]
      %v4077 = vld [vmem:[#allocation2 + $0xf0] sm:$0xff]
      %v4078 = vld [vmem:[#allocation2 + $0xf8] sm:$0xff]
      %v4079 = vld [vmem:[%s4] sm:$0x1]
      %v4081 = vperm.slane %v4079, 0
      %v4083 = vadd.f32 %v4047, %v4081
      %v4084 = vadd.f32 %v4048, %v4081
      %v4085 = vadd.f32 %v4049, %v4081
      %v4086 = vadd.f32 %v4050, %v4081
      %v4087 = vadd.f32 %v4051, %v4081
      %v4088 = vadd.f32 %v4052, %v4081
      %v4089 = vadd.f32 %v4053, %v4081
      %v4090 = vadd.f32 %v4054, %v4081
      %v4091 = vadd.f32 %v4055, %v4081
      %v4092 = vadd.f32 %v4056, %v4081
      %v4093 = vadd.f32 %v4057, %v4081
      %v4094 = vadd.f32 %v4058, %v4081
      %v4095 = vadd.f32 %v4059, %v4081
      %v4096 = vadd.f32 %v4060, %v4081
      %v4097 = vadd.f32 %v4061, %v4081
      %v4098 = vadd.f32 %v4062, %v4081
      %v4099 = vadd.f32 %v4063, %v4081
      %v4100 = vadd.f32 %v4064, %v4081
      %v4101 = vadd.f32 %v4065, %v4081
      %v4102 = vadd.f32 %v4066, %v4081
      %v4103 = vadd.f32 %v4067, %v4081
      %v4104 = vadd.f32 %v4068, %v4081
      %v4105 = vadd.f32 %v4069, %v4081
      %v4106 = vadd.f32 %v4070, %v4081
      %v4107 = vadd.f32 %v4071, %v4081
      %v4108 = vadd.f32 %v4072, %v4081
      %v4109 = vadd.f32 %v4073, %v4081
      %v4110 = vadd.f32 %v4074, %v4081
      %v4111 = vadd.f32 %v4075, %v4081
      %v4112 = vadd.f32 %v4076, %v4081
      %v4113 = vadd.f32 %v4077, %v4081
      %v4114 = vadd.f32 %v4078, %v4081
      %v4115 = vsel %vm719, %v4083, 0.0
      %v4116 = vsel %vm719, %v4084, 0.0
      %v4117 = vadd.f32 %v4115, %v4116
      %v4118 = vsel %vm719, %v4085, 0.0
      %v4119 = vadd.f32 %v4117, %v4118
      %v4120 = vsel %vm719, %v4086, 0.0
      %v4121 = vadd.f32 %v4119, %v4120
      %v4122 = vsel %vm719, %v4087, 0.0
      %v4123 = vadd.f32 %v4121, %v4122
      %v4124 = vsel %vm719, %v4088, 0.0
      %v4125 = vadd.f32 %v4123, %v4124
      %v4126 = vsel %vm719, %v4089, 0.0
      %v4127 = vadd.f32 %v4125, %v4126
      %v4128 = vsel %vm719, %v4090, 0.0
      %v4129 = vadd.f32 %v4127, %v4128
      %v4130 = vsel %vm719, %v4091, 0.0
      %v4131 = vadd.f32 %v4129, %v4130
      %v4132 = vsel %vm719, %v4092, 0.0
      %v4133 = vadd.f32 %v4131, %v4132
      %v4134 = vsel %vm719, %v4093, 0.0
      %v4135 = vadd.f32 %v4133, %v4134
      %v4136 = vsel %vm719, %v4094, 0.0
      %v4137 = vadd.f32 %v4135, %v4136
      %v4138 = vsel %vm719, %v4095, 0.0
      %v4139 = vadd.f32 %v4137, %v4138
      %v4140 = vsel %vm719, %v4096, 0.0
      %v4141 = vadd.f32 %v4139, %v4140
      %v4142 = vsel %vm719, %v4097, 0.0
      %v4143 = vadd.f32 %v4141, %v4142
      %v4144 = vsel %vm719, %v4098, 0.0
      %v4145 = vadd.f32 %v4143, %v4144
      %v4146 = vsel %vm719, %v4099, 0.0
      %v4147 = vadd.f32 %v4145, %v4146
      %v4148 = vsel %vm719, %v4100, 0.0
      %v4149 = vadd.f32 %v4147, %v4148
      %v4150 = vsel %vm719, %v4101, 0.0
      %v4151 = vadd.f32 %v4149, %v4150
      %v4152 = vsel %vm719, %v4102, 0.0
      %v4153 = vadd.f32 %v4151, %v4152
      %v4154 = vsel %vm719, %v4103, 0.0
      %v4155 = vadd.f32 %v4153, %v4154
      %v4156 = vsel %vm719, %v4104, 0.0
      %v4157 = vadd.f32 %v4155, %v4156
      %v4158 = vsel %vm719, %v4105, 0.0
      %v4159 = vadd.f32 %v4157, %v4158
      %v4160 = vsel %vm719, %v4106, 0.0
      %v4161 = vadd.f32 %v4159, %v4160
      %v4162 = vsel %vm719, %v4107, 0.0
      %v4163 = vadd.f32 %v4161, %v4162
      %v4164 = vsel %vm719, %v4108, 0.0
      %v4165 = vadd.f32 %v4163, %v4164
      %v4166 = vsel %vm719, %v4109, 0.0
      %v4167 = vadd.f32 %v4165, %v4166
      %v4168 = vsel %vm719, %v4110, 0.0
      %v4169 = vadd.f32 %v4167, %v4168
      %v4170 = vsel %vm719, %v4111, 0.0
      %v4171 = vadd.f32 %v4169, %v4170
      %v4172 = vsel %vm719, %v4112, 0.0
      %v4173 = vadd.f32 %v4171, %v4172
      %v4174 = vsel %vm719, %v4113, 0.0
      %v4175 = vadd.f32 %v4173, %v4174
      %v4176 = vsel %vm719, %v4114, 0.0
      %v4177 = vadd.f32 %v4175, %v4176
      %v4178 = vrot.slane %v4177, 4
      %v4179 = vadd.f32 %v4177, %v4178
      %v4180 = vrot.slane %v4179, 2
      %v4181 = vadd.f32 %v4179, %v4180
      %v4182 = vrot.slane %v4181, 1
      %v4183 = vadd.f32 %v4181, %v4182
      %v4184 = vmul.f32 %v4183, 0.00390625
      %v4185 = vsub.f32 %v4083, %v4184
      %v4186 = vsub.f32 %v4084, %v4184
      %v4187 = vsub.f32 %v4085, %v4184
      %v4188 = vsub.f32 %v4086, %v4184
      %v4189 = vsub.f32 %v4087, %v4184
      %v4190 = vsub.f32 %v4088, %v4184
      %v4191 = vsub.f32 %v4089, %v4184
      %v4192 = vsub.f32 %v4090, %v4184
      %v4193 = vsub.f32 %v4091, %v4184
      %v4194 = vsub.f32 %v4092, %v4184
      %v4195 = vsub.f32 %v4093, %v4184
      %v4196 = vsub.f32 %v4094, %v4184
      %v4197 = vsub.f32 %v4095, %v4184
      %v4198 = vsub.f32 %v4096, %v4184
      %v4199 = vsub.f32 %v4097, %v4184
      %v4200 = vsub.f32 %v4098, %v4184
      %v4201 = vsub.f32 %v4099, %v4184
      %v4202 = vsub.f32 %v4100, %v4184
      %v4203 = vsub.f32 %v4101, %v4184
      %v4204 = vsub.f32 %v4102, %v4184
      %v4205 = vsub.f32 %v4103, %v4184
      %v4206 = vsub.f32 %v4104, %v4184
      %v4207 = vsub.f32 %v4105, %v4184
      %v4208 = vsub.f32 %v4106, %v4184
      %v4209 = vsub.f32 %v4107, %v4184
      %v4210 = vsub.f32 %v4108, %v4184
      %v4211 = vsub.f32 %v4109, %v4184
      %v4212 = vsub.f32 %v4110, %v4184
      %v4213 = vsub.f32 %v4111, %v4184
      %v4214 = vsub.f32 %v4112, %v4184
      %v4215 = vsub.f32 %v4113, %v4184
      %v4216 = vsub.f32 %v4114, %v4184
      %v4217 = vmul.f32 %v4185, %v4185
      %v4218 = vmul.f32 %v4186, %v4186
      %v4219 = vmul.f32 %v4187, %v4187
      %v4220 = vmul.f32 %v4188, %v4188
      %v4221 = vmul.f32 %v4189, %v4189
      %v4222 = vmul.f32 %v4190, %v4190
      %v4223 = vmul.f32 %v4191, %v4191
      %v4224 = vmul.f32 %v4192, %v4192
      %v4225 = vmul.f32 %v4193, %v4193
      %v4226 = vmul.f32 %v4194, %v4194
      %v4227 = vmul.f32 %v4195, %v4195
      %v4228 = vmul.f32 %v4196, %v4196
      %v4229 = vmul.f32 %v4197, %v4197
      %v4230 = vmul.f32 %v4198, %v4198
      %v4231 = vmul.f32 %v4199, %v4199
      %v4232 = vmul.f32 %v4200, %v4200
      %v4233 = vmul.f32 %v4201, %v4201
      %v4234 = vmul.f32 %v4202, %v4202
      %v4235 = vmul.f32 %v4203, %v4203
      %v4236 = vmul.f32 %v4204, %v4204
      %v4237 = vmul.f32 %v4205, %v4205
      %v4238 = vmul.f32 %v4206, %v4206
      %v4239 = vmul.f32 %v4207, %v4207
      %v4240 = vmul.f32 %v4208, %v4208
      %v4241 = vmul.f32 %v4209, %v4209
      %v4242 = vmul.f32 %v4210, %v4210
      %v4243 = vmul.f32 %v4211, %v4211
      %v4244 = vmul.f32 %v4212, %v4212
      %v4245 = vmul.f32 %v4213, %v4213
      %v4246 = vmul.f32 %v4214, %v4214
      %v4247 = vmul.f32 %v4215, %v4215
      %v4248 = vmul.f32 %v4216, %v4216
      %v4249 = vsel %vm719, %v4217, 0.0
      %v4250 = vsel %vm719, %v4218, 0.0
      %v4251 = vadd.f32 %v4249, %v4250
      %v4252 = vsel %vm719, %v4219, 0.0
      %v4253 = vadd.f32 %v4251, %v4252
      %v4254 = vsel %vm719, %v4220, 0.0
      %v4255 = vadd.f32 %v4253, %v4254
      %v4256 = vsel %vm719, %v4221, 0.0
      %v4257 = vadd.f32 %v4255, %v4256
      %v4258 = vsel %vm719, %v4222, 0.0
      %v4259 = vadd.f32 %v4257, %v4258
      %v4260 = vsel %vm719, %v4223, 0.0
      %v4261 = vadd.f32 %v4259, %v4260
      %v4262 = vsel %vm719, %v4224, 0.0
      %v4263 = vadd.f32 %v4261, %v4262
      %v4264 = vsel %vm719, %v4225, 0.0
      %v4265 = vadd.f32 %v4263, %v4264
      %v4266 = vsel %vm719, %v4226, 0.0
      %v4267 = vadd.f32 %v4265, %v4266
      %v4268 = vsel %vm719, %v4227, 0.0
      %v4269 = vadd.f32 %v4267, %v4268
      %v4270 = vsel %vm719, %v4228, 0.0
      %v4271 = vadd.f32 %v4269, %v4270
      %v4272 = vsel %vm719, %v4229, 0.0
      %v4273 = vadd.f32 %v4271, %v4272
      %v4274 = vsel %vm719, %v4230, 0.0
      %v4275 = vadd.f32 %v4273, %v4274
      %v4276 = vsel %vm719, %v4231, 0.0
      %v4277 = vadd.f32 %v4275, %v4276
      %v4278 = vsel %vm719, %v4232, 0.0
      %v4279 = vadd.f32 %v4277, %v4278
      %v4280 = vsel %vm719, %v4233, 0.0
      %v4281 = vadd.f32 %v4279, %v4280
      %v4282 = vsel %vm719, %v4234, 0.0
      %v4283 = vadd.f32 %v4281, %v4282
      %v4284 = vsel %vm719, %v4235, 0.0
      %v4285 = vadd.f32 %v4283, %v4284
      %v4286 = vsel %vm719, %v4236, 0.0
      %v4287 = vadd.f32 %v4285, %v4286
      %v4288 = vsel %vm719, %v4237, 0.0
      %v4289 = vadd.f32 %v4287, %v4288
      %v4290 = vsel %vm719, %v4238, 0.0
      %v4291 = vadd.f32 %v4289, %v4290
      %v4292 = vsel %vm719, %v4239, 0.0
      %v4293 = vadd.f32 %v4291, %v4292
      %v4294 = vsel %vm719, %v4240, 0.0
      %v4295 = vadd.f32 %v4293, %v4294
      %v4296 = vsel %vm719, %v4241, 0.0
      %v4297 = vadd.f32 %v4295, %v4296
      %v4298 = vsel %vm719, %v4242, 0.0
      %v4299 = vadd.f32 %v4297, %v4298
      %v4300 = vsel %vm719, %v4243, 0.0
      %v4301 = vadd.f32 %v4299, %v4300
      %v4302 = vsel %vm719, %v4244, 0.0
      %v4303 = vadd.f32 %v4301, %v4302
      %v4304 = vsel %vm719, %v4245, 0.0
      %v4305 = vadd.f32 %v4303, %v4304
      %v4306 = vsel %vm719, %v4246, 0.0
      %v4307 = vadd.f32 %v4305, %v4306
      %v4308 = vsel %vm719, %v4247, 0.0
      %v4309 = vadd.f32 %v4307, %v4308
      %v4310 = vsel %vm719, %v4248, 0.0
      %v4311 = vadd.f32 %v4309, %v4310
      %v4312 = vrot.slane %v4311, 4
      %v4313 = vadd.f32 %v4311, %v4312
      %v4314 = vrot.slane %v4313, 2
      %v4315 = vadd.f32 %v4313, %v4314
      %v4316 = vrot.slane %v4315, 1
      %v4317 = vadd.f32 %v4315, %v4316
      %vm4318 = vcmask 1040384
      %v4319 = vsel %vm4318, %v4183, %v4317
      %vm4320 = vcmask 58368
      %4321 = vst.msk [vmem:[%s262] sm:$0x3] %vm4320, %v4319
      %v4322 = vrot.slane %v4087, 4
      %vm4323 = vcmask 1047556
      %v4324 = vsel %vm4323, %v4322, %v4083
      %v4325 = vrot.slane %v4083, 4
      %v4326 = vsel %vm4323, %v4087, %v4325
      %v4328 = vunpack.c.l.s4 1983009808
      %v4329 = vunpack.c.0.s8 %v4328
      %v4330 = vperm.slane %v4324, %v4329
      %v4332 = vunpack.c.l.s4 1983009808
      %v4333 = vunpack.c.0.s8 %v4332
      %v4334 = vperm.slane %v4326, %v4333
      %v4335 = vrot.slane %v4089, 4
      %v4336 = vsel %vm4323, %v4335, %v4085
      %v4337 = vrot.slane %v4085, 4
      %v4338 = vsel %vm4323, %v4089, %v4337
      %v4340 = vunpack.c.l.s4 1983009808
      %v4341 = vunpack.c.0.s8 %v4340
      %v4342 = vperm.slane %v4336, %v4341
      %v4344 = vunpack.c.l.s4 1983009808
      %v4345 = vunpack.c.0.s8 %v4344
      %v4346 = vperm.slane %v4338, %v4345
      %v4347 = vrot.slane %v4095, 4
      %v4348 = vsel %vm4323, %v4347, %v4091
      %v4349 = vrot.slane %v4091, 4
      %v4350 = vsel %vm4323, %v4095, %v4349
      %v4352 = vunpack.c.l.s4 1983009808
      %v4353 = vunpack.c.0.s8 %v4352
      %v4354 = vperm.slane %v4348, %v4353
      %v4356 = vunpack.c.l.s4 1983009808
      %v4357 = vunpack.c.0.s8 %v4356
      %v4358 = vperm.slane %v4350, %v4357
      %v4359 = vrot.slane %v4097, 4
      %v4360 = vsel %vm4323, %v4359, %v4093
      %v4361 = vrot.slane %v4093, 4
      %v4362 = vsel %vm4323, %v4097, %v4361
      %v4364 = vunpack.c.l.s4 1983009808
      %v4365 = vunpack.c.0.s8 %v4364
      %v4366 = vperm.slane %v4360, %v4365
      %v4368 = vunpack.c.l.s4 1983009808
      %v4369 = vunpack.c.0.s8 %v4368
      %v4370 = vperm.slane %v4362, %v4369
      %v4371 = vrot.slane %v4342, 4
      %v4372 = vsel %vm4323, %v4371, %v4330
      %v4373 = vrot.slane %v4330, 4
      %v4374 = vsel %vm4323, %v4342, %v4373
      %v4376 = vunpack.c.l.s4 1934713408
      %v4377 = vunpack.c.0.s8 %v4376
      %v4378 = vperm.slane %v4372, %v4377
      %v4380 = vunpack.c.l.s4 1934713408
      %v4381 = vunpack.c.0.s8 %v4380
      %v4382 = vperm.slane %v4374, %v4381
      %v4383 = vrot.slane %v4346, 4
      %v4384 = vsel %vm4323, %v4383, %v4334
      %v4385 = vrot.slane %v4334, 4
      %v4386 = vsel %vm4323, %v4346, %v4385
      %v4388 = vunpack.c.l.s4 1934713408
      %v4389 = vunpack.c.0.s8 %v4388
      %v4390 = vperm.slane %v4384, %v4389
      %v4392 = vunpack.c.l.s4 1934713408
      %v4393 = vunpack.c.0.s8 %v4392
      %v4394 = vperm.slane %v4386, %v4393
      %v4395 = vrot.slane %v4366, 4
      %v4396 = vsel %vm4323, %v4395, %v4354
      %v4397 = vrot.slane %v4354, 4
      %v4398 = vsel %vm4323, %v4366, %v4397
      %v4400 = vunpack.c.l.s4 1934713408
      %v4401 = vunpack.c.0.s8 %v4400
      %v4402 = vperm.slane %v4396, %v4401
      %v4404 = vunpack.c.l.s4 1934713408
      %v4405 = vunpack.c.0.s8 %v4404
      %v4406 = vperm.slane %v4398, %v4405
      %v4407 = vrot.slane %v4370, 4
      %v4408 = vsel %vm4323, %v4407, %v4358
      %v4409 = vrot.slane %v4358, 4
      %v4410 = vsel %vm4323, %v4370, %v4409
      %v4412 = vunpack.c.l.s4 1934713408
      %v4413 = vunpack.c.0.s8 %v4412
      %v4414 = vperm.slane %v4408, %v4413
      %v4416 = vunpack.c.l.s4 1934713408
      %v4417 = vunpack.c.0.s8 %v4416
      %v4418 = vperm.slane %v4410, %v4417
      %v4419 = vrot.slane %v4402, 4
      %v4420 = vsel %vm4323, %v4419, %v4378
      %v4421 = vrot.slane %v4378, 4
      %v4422 = vsel %vm4323, %v4402, %v4421
      %v4423 = vrot.slane %v4406, 4
      %v4424 = vsel %vm4323, %v4423, %v4382
      %v4425 = vrot.slane %v4382, 4
      %v4426 = vsel %vm4323, %v4406, %v4425
      %v4427 = vrot.slane %v4414, 4
      %v4428 = vsel %vm4323, %v4427, %v4390
      %v4429 = vrot.slane %v4390, 4
      %v4430 = vsel %vm4323, %v4414, %v4429
      %v4431 = vrot.slane %v4418, 4
      %v4432 = vsel %vm4323, %v4431, %v4394
      %v4433 = vrot.slane %v4394, 4
      %v4434 = vsel %vm4323, %v4418, %v4433
      %v4435 = vrot.slane %v4103, 4
      %v4436 = vsel %vm4323, %v4435, %v4099
      %v4437 = vrot.slane %v4099, 4
      %v4438 = vsel %vm4323, %v4103, %v4437
      %v4440 = vunpack.c.l.s4 1983009808
      %v4441 = vunpack.c.0.s8 %v4440
      %v4442 = vperm.slane %v4436, %v4441
      %v4444 = vunpack.c.l.s4 1983009808
      %v4445 = vunpack.c.0.s8 %v4444
      %v4446 = vperm.slane %v4438, %v4445
      %v4447 = vrot.slane %v4105, 4
      %v4448 = vsel %vm4323, %v4447, %v4101
      %v4449 = vrot.slane %v4101, 4
      %v4450 = vsel %vm4323, %v4105, %v4449
      %v4452 = vunpack.c.l.s4 1983009808
      %v4453 = vunpack.c.0.s8 %v4452
      %v4454 = vperm.slane %v4448, %v4453
      %v4456 = vunpack.c.l.s4 1983009808
      %v4457 = vunpack.c.0.s8 %v4456
      %v4458 = vperm.slane %v4450, %v4457
      %v4459 = vrot.slane %v4111, 4
      %v4460 = vsel %vm4323, %v4459, %v4107
      %v4461 = vrot.slane %v4107, 4
      %v4462 = vsel %vm4323, %v4111, %v4461
      %v4464 = vunpack.c.l.s4 1983009808
      %v4465 = vunpack.c.0.s8 %v4464
      %v4466 = vperm.slane %v4460, %v4465
      %v4468 = vunpack.c.l.s4 1983009808
      %v4469 = vunpack.c.0.s8 %v4468
      %v4470 = vperm.slane %v4462, %v4469
      %v4471 = vrot.slane %v4113, 4
      %v4472 = vsel %vm4323, %v4471, %v4109
      %v4473 = vrot.slane %v4109, 4
      %v4474 = vsel %vm4323, %v4113, %v4473
      %v4476 = vunpack.c.l.s4 1983009808
      %v4477 = vunpack.c.0.s8 %v4476
      %v4478 = vperm.slane %v4472, %v4477
      %v4480 = vunpack.c.l.s4 1983009808
      %v4481 = vunpack.c.0.s8 %v4480
      %v4482 = vperm.slane %v4474, %v4481
      %v4483 = vrot.slane %v4454, 4
      %v4484 = vsel %vm4323, %v4483, %v4442
      %v4485 = vrot.slane %v4442, 4
      %v4486 = vsel %vm4323, %v4454, %v4485
      %v4488 = vunpack.c.l.s4 1934713408
      %v4489 = vunpack.c.0.s8 %v4488
      %v4490 = vperm.slane %v4484, %v4489
      %v4492 = vunpack.c.l.s4 1934713408
      %v4493 = vunpack.c.0.s8 %v4492
      %v4494 = vperm.slane %v4486, %v4493
      %v4495 = vrot.slane %v4458, 4
      %v4496 = vsel %vm4323, %v4495, %v4446
      %v4497 = vrot.slane %v4446, 4
      %v4498 = vsel %vm4323, %v4458, %v4497
      %v4500 = vunpack.c.l.s4 1934713408
      %v4501 = vunpack.c.0.s8 %v4500
      %v4502 = vperm.slane %v4496, %v4501
      %v4504 = vunpack.c.l.s4 1934713408
      %v4505 = vunpack.c.0.s8 %v4504
      %v4506 = vperm.slane %v4498, %v4505
      %v4507 = vrot.slane %v4478, 4
      %v4508 = vsel %vm4323, %v4507, %v4466
      %v4509 = vrot.slane %v4466, 4
      %v4510 = vsel %vm4323, %v4478, %v4509
      %v4512 = vunpack.c.l.s4 1934713408
      %v4513 = vunpack.c.0.s8 %v4512
      %v4514 = vperm.slane %v4508, %v4513
      %v4516 = vunpack.c.l.s4 1934713408
      %v4517 = vunpack.c.0.s8 %v4516
      %v4518 = vperm.slane %v4510, %v4517
      %v4519 = vrot.slane %v4482, 4
      %v4520 = vsel %vm4323, %v4519, %v4470
      %v4521 = vrot.slane %v4470, 4
      %v4522 = vsel %vm4323, %v4482, %v4521
      %v4524 = vunpack.c.l.s4 1934713408
      %v4525 = vunpack.c.0.s8 %v4524
      %v4526 = vperm.slane %v4520, %v4525
      %v4528 = vunpack.c.l.s4 1934713408
      %v4529 = vunpack.c.0.s8 %v4528
      %v4530 = vperm.slane %v4522, %v4529
      %v4531 = vrot.slane %v4514, 4
      %v4532 = vsel %vm4323, %v4531, %v4490
      %v4533 = vrot.slane %v4490, 4
      %v4534 = vsel %vm4323, %v4514, %v4533
      %v4535 = vrot.slane %v4518, 4
      %v4536 = vsel %vm4323, %v4535, %v4494
      %v4537 = vrot.slane %v4494, 4
      %v4538 = vsel %vm4323, %v4518, %v4537
      %v4539 = vrot.slane %v4526, 4
      %v4540 = vsel %vm4323, %v4539, %v4502
      %v4541 = vrot.slane %v4502, 4
      %v4542 = vsel %vm4323, %v4526, %v4541
      %v4543 = vrot.slane %v4530, 4
      %v4544 = vsel %vm4323, %v4543, %v4506
      %v4545 = vrot.slane %v4506, 4
      %v4546 = vsel %vm4323, %v4530, %v4545
      %v4547 = vrot.slane %v4088, 4
      %v4548 = vsel %vm4323, %v4547, %v4084
      %v4549 = vrot.slane %v4084, 4
      %v4550 = vsel %vm4323, %v4088, %v4549
      %v4552 = vunpack.c.l.s4 1983009808
      %v4553 = vunpack.c.0.s8 %v4552
      %v4554 = vperm.slane %v4548, %v4553
      %v4556 = vunpack.c.l.s4 1983009808
      %v4557 = vunpack.c.0.s8 %v4556
      %v4558 = vperm.slane %v4550, %v4557
      %v4559 = vrot.slane %v4090, 4
      %v4560 = vsel %vm4323, %v4559, %v4086
      %v4561 = vrot.slane %v4086, 4
      %v4562 = vsel %vm4323, %v4090, %v4561
      %v4564 = vunpack.c.l.s4 1983009808
      %v4565 = vunpack.c.0.s8 %v4564
      %v4566 = vperm.slane %v4560, %v4565
      %v4568 = vunpack.c.l.s4 1983009808
      %v4569 = vunpack.c.0.s8 %v4568
      %v4570 = vperm.slane %v4562, %v4569
      %v4571 = vrot.slane %v4096, 4
      %v4572 = vsel %vm4323, %v4571, %v4092
      %v4573 = vrot.slane %v4092, 4
      %v4574 = vsel %vm4323, %v4096, %v4573
      %v4576 = vunpack.c.l.s4 1983009808
      %v4577 = vunpack.c.0.s8 %v4576
      %v4578 = vperm.slane %v4572, %v4577
      %v4580 = vunpack.c.l.s4 1983009808
      %v4581 = vunpack.c.0.s8 %v4580
      %v4582 = vperm.slane %v4574, %v4581
      %v4583 = vrot.slane %v4098, 4
      %v4584 = vsel %vm4323, %v4583, %v4094
      %v4585 = vrot.slane %v4094, 4
      %v4586 = vsel %vm4323, %v4098, %v4585
      %v4588 = vunpack.c.l.s4 1983009808
      %v4589 = vunpack.c.0.s8 %v4588
      %v4590 = vperm.slane %v4584, %v4589
      %v4592 = vunpack.c.l.s4 1983009808
      %v4593 = vunpack.c.0.s8 %v4592
      %v4594 = vperm.slane %v4586, %v4593
      %v4595 = vrot.slane %v4566, 4
      %v4596 = vsel %vm4323, %v4595, %v4554
      %v4597 = vrot.slane %v4554, 4
      %v4598 = vsel %vm4323, %v4566, %v4597
      %v4600 = vunpack.c.l.s4 1934713408
      %v4601 = vunpack.c.0.s8 %v4600
      %v4602 = vperm.slane %v4596, %v4601
      %v4604 = vunpack.c.l.s4 1934713408
      %v4605 = vunpack.c.0.s8 %v4604
      %v4606 = vperm.slane %v4598, %v4605
      %v4607 = vrot.slane %v4570, 4
      %v4608 = vsel %vm4323, %v4607, %v4558
      %v4609 = vrot.slane %v4558, 4
      %v4610 = vsel %vm4323, %v4570, %v4609
      %v4612 = vunpack.c.l.s4 1934713408
      %v4613 = vunpack.c.0.s8 %v4612
      %v4614 = vperm.slane %v4608, %v4613
      %v4616 = vunpack.c.l.s4 1934713408
      %v4617 = vunpack.c.0.s8 %v4616
      %v4618 = vperm.slane %v4610, %v4617
      %v4619 = vrot.slane %v4590, 4
      %v4620 = vsel %vm4323, %v4619, %v4578
      %v4621 = vrot.slane %v4578, 4
      %v4622 = vsel %vm4323, %v4590, %v4621
      %v4624 = vunpack.c.l.s4 1934713408
      %v4625 = vunpack.c.0.s8 %v4624
      %v4626 = vperm.slane %v4620, %v4625
      %v4628 = vunpack.c.l.s4 1934713408
      %v4629 = vunpack.c.0.s8 %v4628
      %v4630 = vperm.slane %v4622, %v4629
      %v4631 = vrot.slane %v4594, 4
      %v4632 = vsel %vm4323, %v4631, %v4582
      %v4633 = vrot.slane %v4582, 4
      %v4634 = vsel %vm4323, %v4594, %v4633
      %v4636 = vunpack.c.l.s4 1934713408
      %v4637 = vunpack.c.0.s8 %v4636
      %v4638 = vperm.slane %v4632, %v4637
      %v4640 = vunpack.c.l.s4 1934713408
      %v4641 = vunpack.c.0.s8 %v4640
      %v4642 = vperm.slane %v4634, %v4641
      %v4643 = vrot.slane %v4626, 4
      %v4644 = vsel %vm4323, %v4643, %v4602
      %v4645 = vrot.slane %v4602, 4
      %v4646 = vsel %vm4323, %v4626, %v4645
      %v4647 = vrot.slane %v4630, 4
      %v4648 = vsel %vm4323, %v4647, %v4606
      %v4649 = vrot.slane %v4606, 4
      %v4650 = vsel %vm4323, %v4630, %v4649
      %v4651 = vrot.slane %v4638, 4
      %v4652 = vsel %vm4323, %v4651, %v4614
      %v4653 = vrot.slane %v4614, 4
      %v4654 = vsel %vm4323, %v4638, %v4653
      %v4655 = vrot.slane %v4642, 4
      %v4656 = vsel %vm4323, %v4655, %v4618
      %v4657 = vrot.slane %v4618, 4
      %v4658 = vsel %vm4323, %v4642, %v4657
      %v4659 = vrot.slane %v4104, 4
      %v4660 = vsel %vm4323, %v4659, %v4100
      %v4661 = vrot.slane %v4100, 4
      %v4662 = vsel %vm4323, %v4104, %v4661
      %v4664 = vunpack.c.l.s4 1983009808
      %v4665 = vunpack.c.0.s8 %v4664
      %v4666 = vperm.slane %v4660, %v4665
      %v4668 = vunpack.c.l.s4 1983009808
      %v4669 = vunpack.c.0.s8 %v4668
      %v4670 = vperm.slane %v4662, %v4669
      %v4671 = vrot.slane %v4106, 4
      %v4672 = vsel %vm4323, %v4671, %v4102
      %v4673 = vrot.slane %v4102, 4
      %v4674 = vsel %vm4323, %v4106, %v4673
      %v4676 = vunpack.c.l.s4 1983009808
      %v4677 = vunpack.c.0.s8 %v4676
      %v4678 = vperm.slane %v4672, %v4677
      %v4680 = vunpack.c.l.s4 1983009808
      %v4681 = vunpack.c.0.s8 %v4680
      %v4682 = vperm.slane %v4674, %v4681
      %v4683 = vrot.slane %v4112, 4
      %v4684 = vsel %vm4323, %v4683, %v4108
      %v4685 = vrot.slane %v4108, 4
      %v4686 = vsel %vm4323, %v4112, %v4685
      %v4688 = vunpack.c.l.s4 1983009808
      %v4689 = vunpack.c.0.s8 %v4688
      %v4690 = vperm.slane %v4684, %v4689
      %v4692 = vunpack.c.l.s4 1983009808
      %v4693 = vunpack.c.0.s8 %v4692
      %v4694 = vperm.slane %v4686, %v4693
      %v4695 = vrot.slane %v4114, 4
      %v4696 = vsel %vm4323, %v4695, %v4110
      %v4697 = vrot.slane %v4110, 4
      %v4698 = vsel %vm4323, %v4114, %v4697
      %v4700 = vunpack.c.l.s4 1983009808
      %v4701 = vunpack.c.0.s8 %v4700
      %v4702 = vperm.slane %v4696, %v4701
      %v4704 = vunpack.c.l.s4 1983009808
      %v4705 = vunpack.c.0.s8 %v4704
      %v4706 = vperm.slane %v4698, %v4705
      %v4707 = vrot.slane %v4678, 4
      %v4708 = vsel %vm4323, %v4707, %v4666
      %v4709 = vrot.slane %v4666, 4
      %v4710 = vsel %vm4323, %v4678, %v4709
      %v4712 = vunpack.c.l.s4 1934713408
      %v4713 = vunpack.c.0.s8 %v4712
      %v4714 = vperm.slane %v4708, %v4713
      %v4716 = vunpack.c.l.s4 1934713408
      %v4717 = vunpack.c.0.s8 %v4716
      %v4718 = vperm.slane %v4710, %v4717
      %v4719 = vrot.slane %v4682, 4
      %v4720 = vsel %vm4323, %v4719, %v4670
      %v4721 = vrot.slane %v4670, 4
      %v4722 = vsel %vm4323, %v4682, %v4721
      %v4724 = vunpack.c.l.s4 1934713408
      %v4725 = vunpack.c.0.s8 %v4724
      %v4726 = vperm.slane %v4720, %v4725
      %v4728 = vunpack.c.l.s4 1934713408
      %v4729 = vunpack.c.0.s8 %v4728
      %v4730 = vperm.slane %v4722, %v4729
      %v4731 = vrot.slane %v4702, 4
      %v4732 = vsel %vm4323, %v4731, %v4690
      %v4733 = vrot.slane %v4690, 4
      %v4734 = vsel %vm4323, %v4702, %v4733
      %v4736 = vunpack.c.l.s4 1934713408
      %v4737 = vunpack.c.0.s8 %v4736
      %v4738 = vperm.slane %v4732, %v4737
      %v4740 = vunpack.c.l.s4 1934713408
      %v4741 = vunpack.c.0.s8 %v4740
      %v4742 = vperm.slane %v4734, %v4741
      %v4743 = vrot.slane %v4706, 4
      %v4744 = vsel %vm4323, %v4743, %v4694
      %v4745 = vrot.slane %v4694, 4
      %v4746 = vsel %vm4323, %v4706, %v4745
      %v4748 = vunpack.c.l.s4 1934713408
      %v4749 = vunpack.c.0.s8 %v4748
      %v4750 = vperm.slane %v4744, %v4749
      %v4752 = vunpack.c.l.s4 1934713408
      %v4753 = vunpack.c.0.s8 %v4752
      %v4754 = vperm.slane %v4746, %v4753
      %v4755 = vrot.slane %v4738, 4
      %v4756 = vsel %vm4323, %v4755, %v4714
      %v4757 = vrot.slane %v4714, 4
      %v4758 = vsel %vm4323, %v4738, %v4757
      %v4759 = vrot.slane %v4742, 4
      %v4760 = vsel %vm4323, %v4759, %v4718
      %v4761 = vrot.slane %v4718, 4
      %v4762 = vsel %vm4323, %v4742, %v4761
      %v4763 = vrot.slane %v4750, 4
      %v4764 = vsel %vm4323, %v4763, %v4726
      %v4765 = vrot.slane %v4726, 4
      %v4766 = vsel %vm4323, %v4750, %v4765
      %v4767 = vrot.slane %v4754, 4
      %v4768 = vsel %vm4323, %v4767, %v4730
      %v4769 = vrot.slane %v4730, 4
      %v4770 = vsel %vm4323, %v4754, %v4769
      %4773 = vrot.lane.b32.xlu0 %v4422, 8
      %v4774 = vpop.permute.xlu0 %4773
      %4775 = vrot.lane.b32.xlu0 %v4534, 8
      %v4776 = vpop.permute.xlu0 %4775
      %4781 = vrot.lane.b32.xlu0 %v4424, 16
      %v4782 = vpop.permute.xlu0 %4781
      %4783 = vrot.lane.b32.xlu0 %v4536, 16
      %v4784 = vpop.permute.xlu0 %4783
      %4789 = vrot.lane.b32.xlu0 %v4426, 24
      %v4790 = vpop.permute.xlu0 %4789
      %4791 = vrot.lane.b32.xlu0 %v4538, 24
      %v4792 = vpop.permute.xlu0 %4791
      %4797 = vrot.lane.b32.xlu0 %v4428, 32
      %v4798 = vpop.permute.xlu0 %4797
      %4799 = vrot.lane.b32.xlu0 %v4540, 32
      %v4800 = vpop.permute.xlu0 %4799
      %4805 = vrot.lane.b32.xlu0 %v4430, 40
      %v4806 = vpop.permute.xlu0 %4805
      %4807 = vrot.lane.b32.xlu0 %v4542, 40
      %v4808 = vpop.permute.xlu0 %4807
      %4813 = vrot.lane.b32.xlu0 %v4432, 48
      %v4814 = vpop.permute.xlu0 %4813
      %4815 = vrot.lane.b32.xlu0 %v4544, 48
      %v4816 = vpop.permute.xlu0 %4815
      %4821 = vrot.lane.b32.xlu0 %v4434, 56
      %v4822 = vpop.permute.xlu0 %4821
      %4823 = vrot.lane.b32.xlu0 %v4546, 56
      %v4824 = vpop.permute.xlu0 %4823
      %4829 = vrot.lane.b32.xlu0 %v4644, 64
      %v4830 = vpop.permute.xlu0 %4829
      %4831 = vrot.lane.b32.xlu0 %v4756, 64
      %v4832 = vpop.permute.xlu0 %4831
      %4837 = vrot.lane.b32.xlu0 %v4646, 72
      %v4838 = vpop.permute.xlu0 %4837
      %4839 = vrot.lane.b32.xlu0 %v4758, 72
      %v4840 = vpop.permute.xlu0 %4839
      %4845 = vrot.lane.b32.xlu0 %v4648, 80
      %v4846 = vpop.permute.xlu0 %4845
      %4847 = vrot.lane.b32.xlu0 %v4760, 80
      %v4848 = vpop.permute.xlu0 %4847
      %4853 = vrot.lane.b32.xlu0 %v4650, 88
      %v4854 = vpop.permute.xlu0 %4853
      %4855 = vrot.lane.b32.xlu0 %v4762, 88
      %v4856 = vpop.permute.xlu0 %4855
      %4861 = vrot.lane.b32.xlu0 %v4652, 96
      %v4862 = vpop.permute.xlu0 %4861
      %4863 = vrot.lane.b32.xlu0 %v4764, 96
      %v4864 = vpop.permute.xlu0 %4863
      %4869 = vrot.lane.b32.xlu0 %v4654, 104
      %v4870 = vpop.permute.xlu0 %4869
      %4871 = vrot.lane.b32.xlu0 %v4766, 104
      %v4872 = vpop.permute.xlu0 %4871
      %4877 = vrot.lane.b32.xlu0 %v4656, 112
      %v4878 = vpop.permute.xlu0 %4877
      %4879 = vrot.lane.b32.xlu0 %v4768, 112
      %v4880 = vpop.permute.xlu0 %4879
      %4885 = vrot.lane.b32.xlu0 %v4658, 120
      %v4886 = vpop.permute.xlu0 %4885
      %4887 = vrot.lane.b32.xlu0 %v4770, 120
      %v4888 = vpop.permute.xlu0 %4887
      %v4891 = vsel %vm719, %v4420, %v4774
      %v4892 = vsel %vm719, %v4532, %v4776
      %v4893 = vsel %vm2656, %v4891, %v4782
      %v4894 = vsel %vm2656, %v4892, %v4784
      %v4895 = vsel %vm2689, %v4893, %v4790
      %v4896 = vsel %vm2689, %v4894, %v4792
      %vm4897 = vcmask 261120
      %v4898 = vsel %vm4897, %v4895, %v4798
      %v4899 = vsel %vm4897, %v4896, %v4800
      %vm4900 = vcmask 326656
      %v4901 = vsel %vm4900, %v4898, %v4806
      %v4902 = vsel %vm4900, %v4899, %v4808
      %vm4903 = vcmask 392192
      %v4904 = vsel %vm4903, %v4901, %v4814
      %v4905 = vsel %vm4903, %v4902, %v4816
      %vm4906 = vcmask 457728
      %v4907 = vsel %vm4906, %v4904, %v4822
      %v4908 = vsel %vm4906, %v4905, %v4824
      %vm4909 = vcmask 523264
      %v4910 = vsel %vm4909, %v4907, %v4830
      %v4911 = vsel %vm4909, %v4908, %v4832
      %vm4912 = vcmask 588800
      %v4913 = vsel %vm4912, %v4910, %v4838
      %v4914 = vsel %vm4912, %v4911, %v4840
      %vm4915 = vcmask 654336
      %v4916 = vsel %vm4915, %v4913, %v4846
      %v4917 = vsel %vm4915, %v4914, %v4848
      %vm4918 = vcmask 719872
      %v4919 = vsel %vm4918, %v4916, %v4854
      %v4920 = vsel %vm4918, %v4917, %v4856
      %vm4921 = vcmask 785408
      %v4922 = vsel %vm4921, %v4919, %v4862
      %v4923 = vsel %vm4921, %v4920, %v4864
      %vm4924 = vcmask 850944
      %v4925 = vsel %vm4924, %v4922, %v4870
      %v4926 = vsel %vm4924, %v4923, %v4872
      %vm4927 = vcmask 916480
      %v4928 = vsel %vm4927, %v4925, %v4878
      %v4929 = vsel %vm4927, %v4926, %v4880
      %vm4930 = vcmask 982016
      %v4931 = vsel %vm4930, %v4928, %v4886
      %v4932 = vsel %vm4930, %v4929, %v4888
      %4933 = vst [vmem:[%s258] sm:$0xff] %v4931
      %4934 = vst [vmem:[%s258 + $0x8] sm:$0xff] %v4932
      %p4935 = scmp.lt.s32.totalorder %s18, 1
      %s4936 = scalar_select %p4935, %s18, 1
      %s4937 = smul.addr %s4936, 2
      %s4938 = smul.addr %s4937, 8
      %s4939 = scalar_lea.vmem %s5, %s4938
      %p4940 = scmp.lt.s32.totalorder %s18, 1
      %s4941 = scalar_select %p4940, %s18, 1
      %s4942 = smul.addr %s4941, 2
      %s4943 = scalar_lea.vmem %s6, %s4942
      // Predicated region
      $region41: #{conv_block_forward.1} parent=39 // pred_check
        %p4944 = pneg %p146
      $region42: #{conv_block_forward.1} parent=39 // pred_check_branch
        %4946 = sbr.rel (%p4944) target = $region44
      $region43: #{conv_block_forward.1} parent=39 // pred_region
        _
      $region44: #{conv_block_forward.1} parent=39 // pred_fallthru
        _
      // Predicated region
      $region45: #{conv_block_forward.1} parent=39 // pred_check
        %p4947 = pneg %p172
      $region46: #{conv_block_forward.1} parent=39 // pred_check_branch
        %4949 = sbr.rel (%p4947) target = $region48
      $region47: #{conv_block_forward.1} parent=39 // pred_region
        _
      $region48: #{conv_block_forward.1} parent=39 // pred_fallthru
        _
    $region40: #{conv_block_forward.1} parent=5 // pred_fallthru
      _
    %p4950 = scmp.le.s32.totalorder 2, %s13
    // Predicated region
    $region49: #{conv_block_forward.1} parent=5 // pred_check
      %p4951 = pneg %p4950
    $region50: #{conv_block_forward.1} parent=5 // pred_check_branch
      %4953 = sbr.rel (%p4951) target = $region52
    $region51: #{conv_block_forward.1} parent=5 // pred_region
      %s4954 = ssub.s32 %s13, 2
      // Predicated region
      $region53: #{conv_block_forward.1} parent=51 // pred_check
        %p4955 = pneg %p152
      $region54: #{conv_block_forward.1} parent=51 // pred_check_branch
        %4957 = sbr.rel (%p4955) target = $region56
      $region55: #{conv_block_forward.1} parent=51 // pred_region
        %p4958 = scmp.lt.s32.totalorder %s19, 1
        %s4959 = scalar_select %p4958, %s19, 1
        %s4960 = smul.addr %s4959, 2
        %s4961 = smul.addr %s4960, 8
        %s4962 = scalar_lea.vmem %s5, %s4961
      $region56: #{conv_block_forward.1} parent=51 // pred_fallthru
        _
      // Predicated region
      $region57: #{conv_block_forward.1} parent=51 // pred_check
        %p4963 = pneg %p178
      $region58: #{conv_block_forward.1} parent=51 // pred_check_branch
        %4965 = sbr.rel (%p4963) target = $region60
      $region59: #{conv_block_forward.1} parent=51 // pred_region
        %p4966 = scmp.lt.s32.totalorder %s19, 1
        %s4967 = scalar_select %p4966, %s19, 1
        %s4968 = smul.addr %s4967, 2
        %s4969 = scalar_lea.vmem %s6, %s4968
      $region60: #{conv_block_forward.1} parent=51 // pred_fallthru
        _
    $region52: #{conv_block_forward.1} parent=5 // pred_fallthru
      _
  $region6: #{conv_block_forward.1} parent=0 // loop_footer
    %s17 = sadd.s32 1, %s13
  $region7: #{conv_block_forward.1} parent=0 // loop_footer_branch
    %12 = sbr.rel target = $region3
  $region8: #{conv_block_forward.1} parent=0 // loop_exit
    _

</llo_original>
